<compile_context>
chip_gen: v7x
topology: tpu7x:2x2x1
jax: 0.10.0
libtpu: 0.0.40
codegen_flags: <defaults>
</compile_context>

<pallas_src>
import functools

import jax
import jax.numpy as jnp
from jax.experimental import pallas as pl
from jax.experimental.pallas import tpu as pltpu


# ---------------------------------------------------------------------------
# Fused residual-block kernel
# ---------------------------------------------------------------------------
def _residual_block_kernel(xf_ref, w1_ref, b1_ref, w2_ref, b2_ref, mask_ref,
                           o_ref, t1_ref, *, cp, l, l2, s, wp):
    """All tensors use a (channels, flattened-padded-spatial) layout.

    xf_ref   : (cp, l + 4*s) zero-padded input; the padded H+2 x W+2 grid of
               every image lives at columns [2*s, 2*s + l).
    w*_ref   : (cp, 9*cp) BN-folded 3x3 weights, tap-major then in-channel.
    b*_ref   : (cp, 1)   BN-folded per-channel bias.
    mask_ref : (1, l2)   1.0 exactly at interior (non-pad-ring) positions.
    o_ref    : (cp, l)   block output over the padded grid (ring is garbage,
               sliced away by the wrapper).
    t1_ref   : (cp, l2)  VMEM scratch holding relu(bn1(conv1(x))) with zero
               margins, so conv2 can reuse the same shifted-window trick.
    """
    taps = [(di, dj) for di in range(3) for dj in range(3)]

    # ---- conv1 + folded BN1 + ReLU, computed over the widened grid ---------
    acc1 = jnp.zeros((cp, l2), jnp.float32)
    for t, (di, dj) in enumerate(taps):
        off = s + (di - 1) * wp + (dj - 1)          # flat-index shift of the tap
        acc1 = acc1 + jnp.dot(w1_ref[:, t * cp:(t + 1) * cp],
                              xf_ref[:, off:off + l2],
                              preferred_element_type=jnp.float32)
    # ReLU, then zero the pad ring / margins so conv2 sees correct zero padding.
    t1_ref[...] = jnp.maximum(acc1 + b1_ref[...], 0.0) * mask_ref[...]

    # ---- conv2 + folded BN2, computed over the padded grid ------------------
    acc2 = jnp.zeros((cp, l), jnp.float32)
    for t, (di, dj) in enumerate(taps):
        off = s + (di - 1) * wp + (dj - 1)
        acc2 = acc2 + jnp.dot(w2_ref[:, t * cp:(t + 1) * cp],
                              t1_ref[:, off:off + l],
                              preferred_element_type=jnp.float32)

    # ---- residual add + final ReLU ------------------------------------------
    residual = xf_ref[:, 2 * s:2 * s + l]           # x on the padded grid (ring = 0)
    o_ref[...] = jnp.maximum(acc2 + b2_ref[...] + residual, 0.0)


# ---------------------------------------------------------------------------
# Wrapper: layout prep (cheap, 1x data) + single pallas_call
# ---------------------------------------------------------------------------
def residual_block_forward(x, params, eps=1e-5):
    """x: (N, C, H, W) float32 NCHW.  Returns (N, C, H, W)."""
    n, c, h, w = x.shape
    hp, wp = h + 2, w + 2
    cp = max(8, ((c + 7) // 8) * 8)      # pad channels to a full sublane
    l = n * hp * wp                      # flattened padded spatial grid
    s = wp + 1                           # max |flat-index shift| of a 3x3 tap
    l2 = l + 2 * s                       # widened grid for the intermediate
    lx = l + 4 * s                       # input with margins for both convs

    # Fold eval-mode BatchNorm into the (bias-free) conv weights + a bias.
    def fold(wconv, gamma, beta, mean, var):
        scale = gamma * jax.lax.rsqrt(var + eps)
        wf = wconv * scale[:, None, None, None]
        wf = jnp.pad(wf, ((0, cp - c), (0, cp - c), (0, 0), (0, 0)))
        # column order: (di, dj, c_in)  ->  tap*cp + c_in
        wmat = jnp.transpose(wf, (0, 2, 3, 1)).reshape(cp, 9 * cp)
        bias = jnp.pad(beta - mean * scale, (0, cp - c)).reshape(cp, 1)
        return wmat.astype(jnp.float32), bias.astype(jnp.float32)

    w1, b1 = fold(params["conv1_w"], params["bn1_gamma"], params["bn1_beta"],
                  params["bn1_mean"], params["bn1_var"])
    w2, b2 = fold(params["conv2_w"], params["bn2_gamma"], params["bn2_beta"],
                  params["bn2_mean"], params["bn2_var"])

    # Channel-major, flattened padded-spatial layout:
    #   sublanes = channels (padded to 8), lanes = N*Hp*Wp (lane-dense).
    xpad = jnp.pad(x, ((0, 0), (0, cp - c), (1, 1), (1, 1)))     # (N,cp,Hp,Wp)
    xcf = jnp.transpose(xpad, (1, 0, 2, 3)).reshape(cp, l)       # (cp, l)
    xf = jnp.pad(xcf, ((0, 0), (2 * s, 2 * s)))                  # (cp, lx)

    # 1.0 at interior (non-pad-ring) positions of the padded grid.
    interior = jnp.zeros((n, hp, wp), jnp.float32)
    interior = interior.at[:, 1:hp - 1, 1:wp - 1].set(1.0)
    mask = jnp.pad(interior.reshape(1, l), ((0, 0), (s, s)))     # (1, l2)

    kernel = functools.partial(_residual_block_kernel,
                               cp=cp, l=l, l2=l2, s=s, wp=wp)

    out = pl.pallas_call(
        kernel,
        out_shape=jax.ShapeDtypeStruct((cp, l), jnp.float32),
        in_specs=[
            pl.BlockSpec((cp, lx), lambda: (0, 0)),
            pl.BlockSpec((cp, 9 * cp), lambda: (0, 0)),
            pl.BlockSpec((cp, 1), lambda: (0, 0)),
            pl.BlockSpec((cp, 9 * cp), lambda: (0, 0)),
            pl.BlockSpec((cp, 1), lambda: (0, 0)),
            pl.BlockSpec((1, l2), lambda: (0, 0)),
        ],
        out_specs=pl.BlockSpec((cp, l), lambda: (0, 0)),
        scratch_shapes=[pltpu.VMEM((cp, l2), jnp.float32)],
    )(xf, w1, b1, w2, b2, mask)

    # Drop padded channels / pad ring, back to NCHW.
    y = out[:c].reshape(c, n, hp, wp)[:, :, 1:1 + h, 1:1 + w]
    return jnp.transpose(y, (1, 0, 2, 3))


# ---------------------------------------------------------------------------
# Pure-JAX reference (eval-mode BN) for a correctness check
# ---------------------------------------------------------------------------
def _reference_forward(x, params, eps=1e-5):
    def conv(a, wconv):
        return jax.lax.conv_general_dilated(
            a, wconv, window_strides=(1, 1), padding=((1, 1), (1, 1)),
            dimension_numbers=("NCHW", "OIHW", "NCHW"),
            precision=jax.lax.Precision.HIGHEST)

    def bn(a, gamma, beta, mean, var):
        scale = gamma * jax.lax.rsqrt(var + eps)
        shift = beta - mean * scale
        return a * scale[None, :, None, None] + shift[None, :, None, None]

    out = jax.nn.relu(bn(conv(x, params["conv1_w"]),
                         params["bn1_gamma"], params["bn1_beta"],
                         params["bn1_mean"], params["bn1_var"]))
    out = bn(conv(out, params["conv2_w"]),
             params["bn2_gamma"], params["bn2_beta"],
             params["bn2_mean"], params["bn2_var"])
    return jax.nn.relu(out + x)


def init_params(key, channels):
    ks = jax.random.split(key, 10)
    c = channels
    return {
        "conv1_w": jax.random.normal(ks[0], (c, c, 3, 3), jnp.float32) * 0.2,
        "conv2_w": jax.random.normal(ks[1], (c, c, 3, 3), jnp.float32) * 0.2,
        "bn1_gamma": 1.0 + 0.1 * jax.random.normal(ks[2], (c,), jnp.float32),
        "bn1_beta": 0.1 * jax.random.normal(ks[3], (c,), jnp.float32),
        "bn1_mean": 0.1 * jax.random.normal(ks[4], (c,), jnp.float32),
        "bn1_var": jnp.abs(jax.random.normal(ks[5], (c,), jnp.float32)) * 0.5 + 0.5,
        "bn2_gamma": 1.0 + 0.1 * jax.random.normal(ks[6], (c,), jnp.float32),
        "bn2_beta": 0.1 * jax.random.normal(ks[7], (c,), jnp.float32),
        "bn2_mean": 0.1 * jax.random.normal(ks[8], (c,), jnp.float32),
        "bn2_var": jnp.abs(jax.random.normal(ks[9], (c,), jnp.float32)) * 0.5 + 0.5,
    }


if __name__ == "__main__":
    key = jax.random.PRNGKey(0)
    kx, kp = jax.random.split(key)

    N, C, H, W = 2, 4, 16, 16
    x = jax.random.normal(kx, (N, C, H, W), jnp.float32)
    params = init_params(kp, C)

    out = jax.block_until_ready(jax.jit(residual_block_forward)(x, params))
    ref = jax.block_until_ready(jax.jit(_reference_forward)(x, params))

    assert out.shape == (N, C, H, W), out.shape
    assert bool(jnp.all(jnp.isfinite(out)))
    assert bool(jnp.allclose(out, ref, rtol=2e-2, atol=2e-2)), \
        float(jnp.max(jnp.abs(out - ref)))
    print("KERNEL_OK")
</pallas_src>

<mosaic_0001>
module attributes {stable_mosaic.version = 11 : i64} {
  func.func @_residual_block_kernel(%arg0: memref<8x724xf32, #tpu.memory_space<vmem>>, %arg1: memref<8x72xf32, #tpu.memory_space<vmem>>, %arg2: memref<8x1xf32, #tpu.memory_space<vmem>>, %arg3: memref<8x72xf32, #tpu.memory_space<vmem>>, %arg4: memref<8x1xf32, #tpu.memory_space<vmem>>, %arg5: memref<1x686xf32, #tpu.memory_space<vmem>>, %arg6: memref<8x648xf32, #tpu.memory_space<vmem>>, %arg7: memref<8x686xf32, #tpu.memory_space<vmem>>) attributes {dimension_semantics = [], scalar_prefetch = 0 : i64, scratch_operands = 1 : i64, tpu.core_type = #tpu.core_type<tc>} {
    %cst = arith.constant 0.000000e+00 : f32
    %0 = vector.broadcast %cst : f32 to vector<8x686xf32>
    %c0 = arith.constant 0 : index
    %c0_0 = arith.constant 0 : index
    %1 = vector.load %arg1[%c0, %c0_0] : memref<8x72xf32, #tpu.memory_space<vmem>>, vector<8x8xf32>
    %c0_1 = arith.constant 0 : index
    %c0_2 = arith.constant 0 : index
    %2 = vector.load %arg0[%c0_1, %c0_2] : memref<8x724xf32, #tpu.memory_space<vmem>>, vector<8x686xf32>
    %cst_3 = arith.constant dense<0.000000e+00> : vector<8x686xf32>
    %3 = tpu.matmul %1, %2, %cst_3 {dimension_numbers = #tpu.dot_dimension_numbers<[1], [0], [0], [1], [0, 0, 1, 1], [], []>} : vector<8x8xf32>, vector<8x686xf32>, vector<8x686xf32> -> vector<8x686xf32>
    %4 = arith.addf %0, %3 : vector<8x686xf32>
    %c0_4 = arith.constant 0 : index
    %c8 = arith.constant 8 : index
    %5 = vector.load %arg1[%c0_4, %c8] : memref<8x72xf32, #tpu.memory_space<vmem>>, vector<8x8xf32>
    %c0_5 = arith.constant 0 : index
    %c1 = arith.constant 1 : index
    %6 = vector.load %arg0[%c0_5, %c1] : memref<8x724xf32, #tpu.memory_space<vmem>>, vector<8x686xf32>
    %cst_6 = arith.constant dense<0.000000e+00> : vector<8x686xf32>
    %7 = tpu.matmul %5, %6, %cst_6 {dimension_numbers = #tpu.dot_dimension_numbers<[1], [0], [0], [1], [0, 0, 1, 1], [], []>} : vector<8x8xf32>, vector<8x686xf32>, vector<8x686xf32> -> vector<8x686xf32>
    %8 = arith.addf %4, %7 : vector<8x686xf32>
    %c0_7 = arith.constant 0 : index
    %c16 = arith.constant 16 : index
    %9 = vector.load %arg1[%c0_7, %c16] : memref<8x72xf32, #tpu.memory_space<vmem>>, vector<8x8xf32>
    %c0_8 = arith.constant 0 : index
    %c2 = arith.constant 2 : index
    %10 = vector.load %arg0[%c0_8, %c2] : memref<8x724xf32, #tpu.memory_space<vmem>>, vector<8x686xf32>
    %cst_9 = arith.constant dense<0.000000e+00> : vector<8x686xf32>
    %11 = tpu.matmul %9, %10, %cst_9 {dimension_numbers = #tpu.dot_dimension_numbers<[1], [0], [0], [1], [0, 0, 1, 1], [], []>} : vector<8x8xf32>, vector<8x686xf32>, vector<8x686xf32> -> vector<8x686xf32>
    %12 = arith.addf %8, %11 : vector<8x686xf32>
    %c0_10 = arith.constant 0 : index
    %c24 = arith.constant 24 : index
    %13 = vector.load %arg1[%c0_10, %c24] : memref<8x72xf32, #tpu.memory_space<vmem>>, vector<8x8xf32>
    %c0_11 = arith.constant 0 : index
    %c18 = arith.constant 18 : index
    %14 = vector.load %arg0[%c0_11, %c18] : memref<8x724xf32, #tpu.memory_space<vmem>>, vector<8x686xf32>
    %cst_12 = arith.constant dense<0.000000e+00> : vector<8x686xf32>
    %15 = tpu.matmul %13, %14, %cst_12 {dimension_numbers = #tpu.dot_dimension_numbers<[1], [0], [0], [1], [0, 0, 1, 1], [], []>} : vector<8x8xf32>, vector<8x686xf32>, vector<8x686xf32> -> vector<8x686xf32>
    %16 = arith.addf %12, %15 : vector<8x686xf32>
    %c0_13 = arith.constant 0 : index
    %c32 = arith.constant 32 : index
    %17 = vector.load %arg1[%c0_13, %c32] : memref<8x72xf32, #tpu.memory_space<vmem>>, vector<8x8xf32>
    %c0_14 = arith.constant 0 : index
    %c19 = arith.constant 19 : index
    %18 = vector.load %arg0[%c0_14, %c19] : memref<8x724xf32, #tpu.memory_space<vmem>>, vector<8x686xf32>
    %cst_15 = arith.constant dense<0.000000e+00> : vector<8x686xf32>
    %19 = tpu.matmul %17, %18, %cst_15 {dimension_numbers = #tpu.dot_dimension_numbers<[1], [0], [0], [1], [0, 0, 1, 1], [], []>} : vector<8x8xf32>, vector<8x686xf32>, vector<8x686xf32> -> vector<8x686xf32>
    %20 = arith.addf %16, %19 : vector<8x686xf32>
    %c0_16 = arith.constant 0 : index
    %c40 = arith.constant 40 : index
    %21 = vector.load %arg1[%c0_16, %c40] : memref<8x72xf32, #tpu.memory_space<vmem>>, vector<8x8xf32>
    %c0_17 = arith.constant 0 : index
    %c20 = arith.constant 20 : index
    %22 = vector.load %arg0[%c0_17, %c20] : memref<8x724xf32, #tpu.memory_space<vmem>>, vector<8x686xf32>
    %cst_18 = arith.constant dense<0.000000e+00> : vector<8x686xf32>
    %23 = tpu.matmul %21, %22, %cst_18 {dimension_numbers = #tpu.dot_dimension_numbers<[1], [0], [0], [1], [0, 0, 1, 1], [], []>} : vector<8x8xf32>, vector<8x686xf32>, vector<8x686xf32> -> vector<8x686xf32>
    %24 = arith.addf %20, %23 : vector<8x686xf32>
    %c0_19 = arith.constant 0 : index
    %c48 = arith.constant 48 : index
    %25 = vector.load %arg1[%c0_19, %c48] : memref<8x72xf32, #tpu.memory_space<vmem>>, vector<8x8xf32>
    %c0_20 = arith.constant 0 : index
    %c36 = arith.constant 36 : index
    %26 = vector.load %arg0[%c0_20, %c36] : memref<8x724xf32, #tpu.memory_space<vmem>>, vector<8x686xf32>
    %cst_21 = arith.constant dense<0.000000e+00> : vector<8x686xf32>
    %27 = tpu.matmul %25, %26, %cst_21 {dimension_numbers = #tpu.dot_dimension_numbers<[1], [0], [0], [1], [0, 0, 1, 1], [], []>} : vector<8x8xf32>, vector<8x686xf32>, vector<8x686xf32> -> vector<8x686xf32>
    %28 = arith.addf %24, %27 : vector<8x686xf32>
    %c0_22 = arith.constant 0 : index
    %c56 = arith.constant 56 : index
    %29 = vector.load %arg1[%c0_22, %c56] : memref<8x72xf32, #tpu.memory_space<vmem>>, vector<8x8xf32>
    %c0_23 = arith.constant 0 : index
    %c37 = arith.constant 37 : index
    %30 = vector.load %arg0[%c0_23, %c37] : memref<8x724xf32, #tpu.memory_space<vmem>>, vector<8x686xf32>
    %cst_24 = arith.constant dense<0.000000e+00> : vector<8x686xf32>
    %31 = tpu.matmul %29, %30, %cst_24 {dimension_numbers = #tpu.dot_dimension_numbers<[1], [0], [0], [1], [0, 0, 1, 1], [], []>} : vector<8x8xf32>, vector<8x686xf32>, vector<8x686xf32> -> vector<8x686xf32>
    %32 = arith.addf %28, %31 : vector<8x686xf32>
    %c0_25 = arith.constant 0 : index
    %c64 = arith.constant 64 : index
    %33 = vector.load %arg1[%c0_25, %c64] : memref<8x72xf32, #tpu.memory_space<vmem>>, vector<8x8xf32>
    %c0_26 = arith.constant 0 : index
    %c38 = arith.constant 38 : index
    %34 = vector.load %arg0[%c0_26, %c38] : memref<8x724xf32, #tpu.memory_space<vmem>>, vector<8x686xf32>
    %cst_27 = arith.constant dense<0.000000e+00> : vector<8x686xf32>
    %35 = tpu.matmul %33, %34, %cst_27 {dimension_numbers = #tpu.dot_dimension_numbers<[1], [0], [0], [1], [0, 0, 1, 1], [], []>} : vector<8x8xf32>, vector<8x686xf32>, vector<8x686xf32> -> vector<8x686xf32>
    %36 = arith.addf %32, %35 : vector<8x686xf32>
    %c0_28 = arith.constant 0 : index
    %c0_29 = arith.constant 0 : index
    %37 = vector.load %arg2[%c0_28, %c0_29] : memref<8x1xf32, #tpu.memory_space<vmem>>, vector<8x1xf32>
    %38 = vector.broadcast %37 : vector<8x1xf32> to vector<8x686xf32>
    %39 = arith.addf %36, %38 : vector<8x686xf32>
    %cst_30 = arith.constant 0.000000e+00 : f32
    %40 = vector.broadcast %cst_30 : f32 to vector<8x686xf32>
    %41 = arith.maximumf %39, %40 : vector<8x686xf32>
    %c0_31 = arith.constant 0 : index
    %c0_32 = arith.constant 0 : index
    %42 = vector.load %arg5[%c0_31, %c0_32] : memref<1x686xf32, #tpu.memory_space<vmem>>, vector<1x686xf32>
    %43 = vector.broadcast %42 : vector<1x686xf32> to vector<8x686xf32>
    %44 = arith.mulf %41, %43 : vector<8x686xf32>
    %c0_33 = arith.constant 0 : index
    %c0_34 = arith.constant 0 : index
    %45 = vector.load %arg7[%c0_33, %c0_34] : memref<8x686xf32, #tpu.memory_space<vmem>>, vector<8x686xf32>
    tpu.vector_store %arg7[%c0_33, %c0_34], %44 {strides = array<i32>} : memref<8x686xf32, #tpu.memory_space<vmem>>, vector<8x686xf32>,
    %cst_35 = arith.constant 0.000000e+00 : f32
    %46 = vector.broadcast %cst_35 : f32 to vector<8x648xf32>
    %c0_36 = arith.constant 0 : index
    %c0_37 = arith.constant 0 : index
    %47 = vector.load %arg3[%c0_36, %c0_37] : memref<8x72xf32, #tpu.memory_space<vmem>>, vector<8x8xf32>
    %c0_38 = arith.constant 0 : index
    %c0_39 = arith.constant 0 : index
    %48 = vector.load %arg7[%c0_38, %c0_39] : memref<8x686xf32, #tpu.memory_space<vmem>>, vector<8x648xf32>
    %cst_40 = arith.constant dense<0.000000e+00> : vector<8x648xf32>
    %49 = tpu.matmul %47, %48, %cst_40 {dimension_numbers = #tpu.dot_dimension_numbers<[1], [0], [0], [1], [0, 0, 1, 1], [], []>} : vector<8x8xf32>, vector<8x648xf32>, vector<8x648xf32> -> vector<8x648xf32>
    %50 = arith.addf %46, %49 : vector<8x648xf32>
    %c0_41 = arith.constant 0 : index
    %c8_42 = arith.constant 8 : index
    %51 = vector.load %arg3[%c0_41, %c8_42] : memref<8x72xf32, #tpu.memory_space<vmem>>, vector<8x8xf32>
    %c0_43 = arith.constant 0 : index
    %c1_44 = arith.constant 1 : index
    %52 = vector.load %arg7[%c0_43, %c1_44] : memref<8x686xf32, #tpu.memory_space<vmem>>, vector<8x648xf32>
    %cst_45 = arith.constant dense<0.000000e+00> : vector<8x648xf32>
    %53 = tpu.matmul %51, %52, %cst_45 {dimension_numbers = #tpu.dot_dimension_numbers<[1], [0], [0], [1], [0, 0, 1, 1], [], []>} : vector<8x8xf32>, vector<8x648xf32>, vector<8x648xf32> -> vector<8x648xf32>
    %54 = arith.addf %50, %53 : vector<8x648xf32>
    %c0_46 = arith.constant 0 : index
    %c16_47 = arith.constant 16 : index
    %55 = vector.load %arg3[%c0_46, %c16_47] : memref<8x72xf32, #tpu.memory_space<vmem>>, vector<8x8xf32>
    %c0_48 = arith.constant 0 : index
    %c2_49 = arith.constant 2 : index
    %56 = vector.load %arg7[%c0_48, %c2_49] : memref<8x686xf32, #tpu.memory_space<vmem>>, vector<8x648xf32>
    %cst_50 = arith.constant dense<0.000000e+00> : vector<8x648xf32>
    %57 = tpu.matmul %55, %56, %cst_50 {dimension_numbers = #tpu.dot_dimension_numbers<[1], [0], [0], [1], [0, 0, 1, 1], [], []>} : vector<8x8xf32>, vector<8x648xf32>, vector<8x648xf32> -> vector<8x648xf32>
    %58 = arith.addf %54, %57 : vector<8x648xf32>
    %c0_51 = arith.constant 0 : index
    %c24_52 = arith.constant 24 : index
    %59 = vector.load %arg3[%c0_51, %c24_52] : memref<8x72xf32, #tpu.memory_space<vmem>>, vector<8x8xf32>
    %c0_53 = arith.constant 0 : index
    %c18_54 = arith.constant 18 : index
    %60 = vector.load %arg7[%c0_53, %c18_54] : memref<8x686xf32, #tpu.memory_space<vmem>>, vector<8x648xf32>
    %cst_55 = arith.constant dense<0.000000e+00> : vector<8x648xf32>
    %61 = tpu.matmul %59, %60, %cst_55 {dimension_numbers = #tpu.dot_dimension_numbers<[1], [0], [0], [1], [0, 0, 1, 1], [], []>} : vector<8x8xf32>, vector<8x648xf32>, vector<8x648xf32> -> vector<8x648xf32>
    %62 = arith.addf %58, %61 : vector<8x648xf32>
    %c0_56 = arith.constant 0 : index
    %c32_57 = arith.constant 32 : index
    %63 = vector.load %arg3[%c0_56, %c32_57] : memref<8x72xf32, #tpu.memory_space<vmem>>, vector<8x8xf32>
    %c0_58 = arith.constant 0 : index
    %c19_59 = arith.constant 19 : index
    %64 = vector.load %arg7[%c0_58, %c19_59] : memref<8x686xf32, #tpu.memory_space<vmem>>, vector<8x648xf32>
    %cst_60 = arith.constant dense<0.000000e+00> : vector<8x648xf32>
    %65 = tpu.matmul %63, %64, %cst_60 {dimension_numbers = #tpu.dot_dimension_numbers<[1], [0], [0], [1], [0, 0, 1, 1], [], []>} : vector<8x8xf32>, vector<8x648xf32>, vector<8x648xf32> -> vector<8x648xf32>
    %66 = arith.addf %62, %65 : vector<8x648xf32>
    %c0_61 = arith.constant 0 : index
    %c40_62 = arith.constant 40 : index
    %67 = vector.load %arg3[%c0_61, %c40_62] : memref<8x72xf32, #tpu.memory_space<vmem>>, vector<8x8xf32>
    %c0_63 = arith.constant 0 : index
    %c20_64 = arith.constant 20 : index
    %68 = vector.load %arg7[%c0_63, %c20_64] : memref<8x686xf32, #tpu.memory_space<vmem>>, vector<8x648xf32>
    %cst_65 = arith.constant dense<0.000000e+00> : vector<8x648xf32>
    %69 = tpu.matmul %67, %68, %cst_65 {dimension_numbers = #tpu.dot_dimension_numbers<[1], [0], [0], [1], [0, 0, 1, 1], [], []>} : vector<8x8xf32>, vector<8x648xf32>, vector<8x648xf32> -> vector<8x648xf32>
    %70 = arith.addf %66, %69 : vector<8x648xf32>
    %c0_66 = arith.constant 0 : index
    %c48_67 = arith.constant 48 : index
    %71 = vector.load %arg3[%c0_66, %c48_67] : memref<8x72xf32, #tpu.memory_space<vmem>>, vector<8x8xf32>
    %c0_68 = arith.constant 0 : index
    %c36_69 = arith.constant 36 : index
    %72 = vector.load %arg7[%c0_68, %c36_69] : memref<8x686xf32, #tpu.memory_space<vmem>>, vector<8x648xf32>
    %cst_70 = arith.constant dense<0.000000e+00> : vector<8x648xf32>
    %73 = tpu.matmul %71, %72, %cst_70 {dimension_numbers = #tpu.dot_dimension_numbers<[1], [0], [0], [1], [0, 0, 1, 1], [], []>} : vector<8x8xf32>, vector<8x648xf32>, vector<8x648xf32> -> vector<8x648xf32>
    %74 = arith.addf %70, %73 : vector<8x648xf32>
    %c0_71 = arith.constant 0 : index
    %c56_72 = arith.constant 56 : index
    %75 = vector.load %arg3[%c0_71, %c56_72] : memref<8x72xf32, #tpu.memory_space<vmem>>, vector<8x8xf32>
    %c0_73 = arith.constant 0 : index
    %c37_74 = arith.constant 37 : index
    %76 = vector.load %arg7[%c0_73, %c37_74] : memref<8x686xf32, #tpu.memory_space<vmem>>, vector<8x648xf32>
    %cst_75 = arith.constant dense<0.000000e+00> : vector<8x648xf32>
    %77 = tpu.matmul %75, %76, %cst_75 {dimension_numbers = #tpu.dot_dimension_numbers<[1], [0], [0], [1], [0, 0, 1, 1], [], []>} : vector<8x8xf32>, vector<8x648xf32>, vector<8x648xf32> -> vector<8x648xf32>
    %78 = arith.addf %74, %77 : vector<8x648xf32>
    %c0_76 = arith.constant 0 : index
    %c64_77 = arith.constant 64 : index
    %79 = vector.load %arg3[%c0_76, %c64_77] : memref<8x72xf32, #tpu.memory_space<vmem>>, vector<8x8xf32>
    %c0_78 = arith.constant 0 : index
    %c38_79 = arith.constant 38 : index
    %80 = vector.load %arg7[%c0_78, %c38_79] : memref<8x686xf32, #tpu.memory_space<vmem>>, vector<8x648xf32>
    %cst_80 = arith.constant dense<0.000000e+00> : vector<8x648xf32>
    %81 = tpu.matmul %79, %80, %cst_80 {dimension_numbers = #tpu.dot_dimension_numbers<[1], [0], [0], [1], [0, 0, 1, 1], [], []>} : vector<8x8xf32>, vector<8x648xf32>, vector<8x648xf32> -> vector<8x648xf32>
    %82 = arith.addf %78, %81 : vector<8x648xf32>
    %c0_81 = arith.constant 0 : index
    %c38_82 = arith.constant 38 : index
    %83 = vector.load %arg0[%c0_81, %c38_82] : memref<8x724xf32, #tpu.memory_space<vmem>>, vector<8x648xf32>
    %c0_83 = arith.constant 0 : index
    %c0_84 = arith.constant 0 : index
    %84 = vector.load %arg4[%c0_83, %c0_84] : memref<8x1xf32, #tpu.memory_space<vmem>>, vector<8x1xf32>
    %85 = vector.broadcast %84 : vector<8x1xf32> to vector<8x648xf32>
    %86 = arith.addf %82, %85 : vector<8x648xf32>
    %87 = arith.addf %86, %83 : vector<8x648xf32>
    %cst_85 = arith.constant 0.000000e+00 : f32
    %88 = vector.broadcast %cst_85 : f32 to vector<8x648xf32>
    %89 = arith.maximumf %87, %88 : vector<8x648xf32>
    %c0_86 = arith.constant 0 : index
    %c0_87 = arith.constant 0 : index
    %90 = vector.load %arg6[%c0_86, %c0_87] : memref<8x648xf32, #tpu.memory_space<vmem>>, vector<8x648xf32>
    tpu.vector_store %arg6[%c0_86, %c0_87], %89 {strides = array<i32>} : memref<8x648xf32, #tpu.memory_space<vmem>>, vector<8x648xf32>,
    return
  }
}

</mosaic_0001>

<llo_original>
// kernel: residual_block_forward.1
$region0: #{residual_block_forward.1}
  #allocation0 [shape = 'u32[]', space=smem, size = 0x4, offset = 0x4, fixed_abs, tag = 'smem constant byte address 0x4 - core index']
  #allocation1 [shape = 'u32[144,128]{1,0:T(1,128)}', space=vmem, size = 0x12000, scoped, tag = 'internal scratch']
  #allocation2 [shape = 'f32[8,686]{1,0:T(8,128)}', space=vmem, size = 0x6000, scoped, tag = 'scratch operand']
  %s0 = inlined_call_operand.vmem [shape: f32[8,724], index: 0, kind: input, shape index: {}]
  %s1 = inlined_call_operand.vmem [shape: f32[8,72], index: 1, kind: input, shape index: {}]
  %s2 = inlined_call_operand.vmem [shape: f32[8,1], index: 2, kind: input, shape index: {}]
  %s3 = inlined_call_operand.vmem [shape: f32[8,72], index: 3, kind: input, shape index: {}]
  %s4 = inlined_call_operand.vmem [shape: f32[8,1], index: 4, kind: input, shape index: {}]
  %s5 = inlined_call_operand.vmem [shape: f32[1,686], index: 5, kind: input, shape index: {}]
  %s6 = inlined_call_operand.vmem [shape: f32[8,648], index: 6, kind: output, shape index: {}]
  %s7 = sld [smem:[#allocation0]]
  $region34: #{residual_block_forward.1} parent=0
    _
  %s9 = ssub.s32 1, %s7
  %s10 = scalar_select 0, %s9, %s7
  // Predicated region
  $region2: #{residual_block_forward.1} parent=0 // pred_check
    _
  $region3: #{residual_block_forward.1} parent=0 // pred_check_branch
    %12 = sbr.rel (0) target = $region5
  $region4: #{residual_block_forward.1} parent=0 // pred_region
    _
  $region5: #{residual_block_forward.1} parent=0 // pred_fallthru
    _
  // Predicated region
  $region6: #{residual_block_forward.1} parent=0 // pred_check
    _
  $region7: #{residual_block_forward.1} parent=0 // pred_check_branch
    %14 = sbr.rel (0) target = $region9
  $region8: #{residual_block_forward.1} parent=0 // pred_region
    _
  $region9: #{residual_block_forward.1} parent=0 // pred_fallthru
    _
  // Predicated region
  $region10: #{residual_block_forward.1} parent=0 // pred_check
    _
  $region11: #{residual_block_forward.1} parent=0 // pred_check_branch
    %16 = sbr.rel (0) target = $region13
  $region12: #{residual_block_forward.1} parent=0 // pred_region
    _
  $region13: #{residual_block_forward.1} parent=0 // pred_fallthru
    _
  // Predicated region
  $region14: #{residual_block_forward.1} parent=0 // pred_check
    _
  $region15: #{residual_block_forward.1} parent=0 // pred_check_branch
    %18 = sbr.rel (0) target = $region17
  $region16: #{residual_block_forward.1} parent=0 // pred_region
    _
  $region17: #{residual_block_forward.1} parent=0 // pred_fallthru
    _
  // Predicated region
  $region18: #{residual_block_forward.1} parent=0 // pred_check
    _
  $region19: #{residual_block_forward.1} parent=0 // pred_check_branch
    %20 = sbr.rel (0) target = $region21
  $region20: #{residual_block_forward.1} parent=0 // pred_region
    _
  $region21: #{residual_block_forward.1} parent=0 // pred_fallthru
    _
  // Predicated region
  $region22: #{residual_block_forward.1} parent=0 // pred_check
    _
  $region23: #{residual_block_forward.1} parent=0 // pred_check_branch
    %22 = sbr.rel (0) target = $region25
  $region24: #{residual_block_forward.1} parent=0 // pred_region
    _
  $region25: #{residual_block_forward.1} parent=0 // pred_fallthru
    _
  %v23 = vld [vmem:[%s1] sm:$0xff]
  %v24 = vld [vmem:[%s0] sm:$0xff]
  %v25 = vld [vmem:[%s0 + $0x8] sm:$0xff]
  %v26 = vld [vmem:[%s0 + $0x10] sm:$0xff]
  %v27 = vld [vmem:[%s0 + $0x18] sm:$0xff]
  %v28 = vld [vmem:[%s0 + $0x20] sm:$0xff]
  %v29 = vld [vmem:[%s0 + $0x28] sm:$0xff]
  %31 = vrot.lane.b32.xlu0 %v23, 120
  %v32 = vpop.permute.xlu0 %31
  %39 = vrot.lane.b32.xlu0 %v24, 127
  %v40 = vpop.permute.xlu0 %39
  %41 = vrot.lane.b32.xlu0 %v25, 127
  %v42 = vpop.permute.xlu0 %41
  %43 = vrot.lane.b32.xlu0 %v26, 127
  %v44 = vpop.permute.xlu0 %43
  %45 = vrot.lane.b32.xlu0 %v27, 127
  %v46 = vpop.permute.xlu0 %45
  %47 = vrot.lane.b32.xlu0 %v28, 127
  %v48 = vpop.permute.xlu0 %47
  %49 = vrot.lane.b32.xlu0 %v29, 127
  %v50 = vpop.permute.xlu0 %49
  %vm51 = vcmask 1039360
  %v52 = vsel %vm51, %v40, %v42
  %v53 = vsel %vm51, %v42, %v44
  %v54 = vsel %vm51, %v44, %v46
  %v55 = vsel %vm51, %v46, %v48
  %v56 = vsel %vm51, %v48, %v50
  %vm63 = vcmask 64512
  %v64 = vsel %vm63, %v32, 0
  %66 = vmatprep.subr.mxu0 %v53
  %67 = vmatpush1.msra.mxu0 %v52
  %68 = vmatprep.subr.mxu0 0.0
  %69 = vmatpush1.msra.mxu0 0.0
  %70 = vmatprep.subr.mxu0 0.0
  %71 = vmatpush1.msra.mxu0 0.0
  %72 = vmatprep.subr.mxu0 0.0
  %73 = vmatpush1.msra.mxu0 0.0
  %74 = vmatprep.subr.mxu0 0.0
  %75 = vmatpush1.msra.mxu0 0.0
  %76 = vmatprep.subr.mxu0 0.0
  %77 = vmatpush1.msra.mxu0 0.0
  %78 = vmatprep.subr.mxu0 0.0
  %79 = vmatpush1.msra.mxu0 0.0
  %80 = vmatprep.subr.mxu0 0.0
  %81 = vmatpush1.msra.mxu0 0.0
  %82 = vmatprep.subr.mxu0 0.0
  %83 = vmatpush1.msra.mxu0 0.0
  %84 = vmatprep.subr.mxu0 0.0
  %85 = vmatpush1.msra.mxu0 0.0
  %86 = vmatprep.subr.mxu0 0.0
  %87 = vmatpush1.msra.mxu0 0.0
  %88 = vmatprep.subr.mxu0 0.0
  %89 = vmatpush1.msra.mxu0 0.0
  %90 = vmatprep.subr.mxu0 0.0
  %91 = vmatpush1.msra.mxu0 0.0
  %92 = vmatprep.subr.mxu0 0.0
  %93 = vmatpush1.msra.mxu0 0.0
  %94 = vmatprep.subr.mxu0 0.0
  %95 = vmatpush1.msra.mxu0 0.0
  %96 = vmatprep.subr.mxu0 0.0
  %97 = vmatpush1.msra.mxu0 0.0
  %98 = vmatprep.subr.mxu0 0.0
  %99 = vmatpush1.msra.mxu0 0.0
  %100 = vmatprep.subr.mxu0 0.0
  %101 = vmatpush1.msra.mxu0 0.0
  %102 = vmatprep.subr.mxu0 0.0
  %103 = vmatpush1.msra.mxu0 0.0
  %104 = vmatprep.subr.mxu0 0.0
  %105 = vmatpush1.msra.mxu0 0.0
  %106 = vmatprep.subr.mxu0 0.0
  %107 = vmatpush1.msra.mxu0 0.0
  %108 = vmatprep.subr.mxu0 0.0
  %109 = vmatpush1.msra.mxu0 0.0
  %110 = vmatprep.subr.mxu0 0.0
  %111 = vmatpush1.msra.mxu0 0.0
  %112 = vmatprep.subr.mxu0 0.0
  %113 = vmatpush1.msra.mxu0 0.0
  %114 = vmatprep.subr.mxu0 0.0
  %115 = vmatpush1.msra.mxu0 0.0
  %116 = vmatprep.subr.mxu0 0.0
  %117 = vmatpush1.msra.mxu0 0.0
  %118 = vmatprep.subr.mxu0 0.0
  %119 = vmatpush1.msra.mxu0 0.0
  %120 = vmatprep.subr.mxu0 0.0
  %121 = vmatpush1.msra.mxu0 0.0
  %122 = vmatprep.subr.mxu0 0.0
  %123 = vmatpush1.msra.mxu0 0.0
  %124 = vmatprep.subr.mxu0 0.0
  %125 = vmatpush1.msra.mxu0 0.0
  %126 = vmatprep.subr.mxu0 0.0
  %127 = vmatpush1.msra.mxu0 0.0
  %128 = vmatprep.subr.mxu0 0.0
  %129 = vmatpush1.msra.mxu0 0.0
  %130 = vmatprep.mubr.f32.mxu0 0.0
  %131 = vmatmul.mubr.f32.gmra.mrb[0].mxu0 %v64
  %v132 = vpop.f32.mrb[0].mxu0
  %v133 = vadd.f32 0.0, %v132
  %v134 = vpop.f32.mrb[0].mxu0
  %v135 = vadd.f32 0.0, %v134
  %136 = vdwg.mxu0
  %137 = vmatprep.subr.mxu0 %v55
  %138 = vmatpush1.msra.mxu0 %v54
  %139 = vmatprep.subr.mxu0 0.0
  %140 = vmatpush1.msra.mxu0 0.0
  %141 = vmatprep.subr.mxu0 0.0
  %142 = vmatpush1.msra.mxu0 0.0
  %143 = vmatprep.subr.mxu0 0.0
  %144 = vmatpush1.msra.mxu0 0.0
  %145 = vmatprep.subr.mxu0 0.0
  %146 = vmatpush1.msra.mxu0 0.0
  %147 = vmatprep.subr.mxu0 0.0
  %148 = vmatpush1.msra.mxu0 0.0
  %149 = vmatprep.subr.mxu0 0.0
  %150 = vmatpush1.msra.mxu0 0.0
  %151 = vmatprep.subr.mxu0 0.0
  %152 = vmatpush1.msra.mxu0 0.0
  %153 = vmatprep.subr.mxu0 0.0
  %154 = vmatpush1.msra.mxu0 0.0
  %155 = vmatprep.subr.mxu0 0.0
  %156 = vmatpush1.msra.mxu0 0.0
  %157 = vmatprep.subr.mxu0 0.0
  %158 = vmatpush1.msra.mxu0 0.0
  %159 = vmatprep.subr.mxu0 0.0
  %160 = vmatpush1.msra.mxu0 0.0
  %161 = vmatprep.subr.mxu0 0.0
  %162 = vmatpush1.msra.mxu0 0.0
  %163 = vmatprep.subr.mxu0 0.0
  %164 = vmatpush1.msra.mxu0 0.0
  %165 = vmatprep.subr.mxu0 0.0
  %166 = vmatpush1.msra.mxu0 0.0
  %167 = vmatprep.subr.mxu0 0.0
  %168 = vmatpush1.msra.mxu0 0.0
  %169 = vmatprep.subr.mxu0 0.0
  %170 = vmatpush1.msra.mxu0 0.0
  %171 = vmatprep.subr.mxu0 0.0
  %172 = vmatpush1.msra.mxu0 0.0
  %173 = vmatprep.subr.mxu0 0.0
  %174 = vmatpush1.msra.mxu0 0.0
  %175 = vmatprep.subr.mxu0 0.0
  %176 = vmatpush1.msra.mxu0 0.0
  %177 = vmatprep.subr.mxu0 0.0
  %178 = vmatpush1.msra.mxu0 0.0
  %179 = vmatprep.subr.mxu0 0.0
  %180 = vmatpush1.msra.mxu0 0.0
  %181 = vmatprep.subr.mxu0 0.0
  %182 = vmatpush1.msra.mxu0 0.0
  %183 = vmatprep.subr.mxu0 0.0
  %184 = vmatpush1.msra.mxu0 0.0
  %185 = vmatprep.subr.mxu0 0.0
  %186 = vmatpush1.msra.mxu0 0.0
  %187 = vmatprep.subr.mxu0 0.0
  %188 = vmatpush1.msra.mxu0 0.0
  %189 = vmatprep.subr.mxu0 0.0
  %190 = vmatpush1.msra.mxu0 0.0
  %191 = vmatprep.subr.mxu0 0.0
  %192 = vmatpush1.msra.mxu0 0.0
  %193 = vmatprep.subr.mxu0 0.0
  %194 = vmatpush1.msra.mxu0 0.0
  %195 = vmatprep.subr.mxu0 0.0
  %196 = vmatpush1.msra.mxu0 0.0
  %197 = vmatprep.subr.mxu0 0.0
  %198 = vmatpush1.msra.mxu0 0.0
  %199 = vmatprep.subr.mxu0 0.0
  %200 = vmatpush1.msra.mxu0 0.0
  %201 = vmatprep.mubr.f32.mxu0 0.0
  %202 = vmatmul.mubr.f32.gmra.mrb[0].mxu0 %v64
  %v203 = vpop.f32.mrb[0].mxu0
  %v204 = vadd.f32 0.0, %v203
  %v205 = vpop.f32.mrb[0].mxu0
  %v206 = vadd.f32 0.0, %v205
  %207 = vdwg.mxu0
  %208 = vmatprep.subr.mxu0 %v50
  %209 = vmatpush1.msra.mxu0 %v56
  %210 = vmatprep.subr.mxu0 0.0
  %211 = vmatpush1.msra.mxu0 0.0
  %212 = vmatprep.subr.mxu0 0.0
  %213 = vmatpush1.msra.mxu0 0.0
  %214 = vmatprep.subr.mxu0 0.0
  %215 = vmatpush1.msra.mxu0 0.0
  %216 = vmatprep.subr.mxu0 0.0
  %217 = vmatpush1.msra.mxu0 0.0
  %218 = vmatprep.subr.mxu0 0.0
  %219 = vmatpush1.msra.mxu0 0.0
  %220 = vmatprep.subr.mxu0 0.0
  %221 = vmatpush1.msra.mxu0 0.0
  %222 = vmatprep.subr.mxu0 0.0
  %223 = vmatpush1.msra.mxu0 0.0
  %224 = vmatprep.subr.mxu0 0.0
  %225 = vmatpush1.msra.mxu0 0.0
  %226 = vmatprep.subr.mxu0 0.0
  %227 = vmatpush1.msra.mxu0 0.0
  %228 = vmatprep.subr.mxu0 0.0
  %229 = vmatpush1.msra.mxu0 0.0
  %230 = vmatprep.subr.mxu0 0.0
  %231 = vmatpush1.msra.mxu0 0.0
  %232 = vmatprep.subr.mxu0 0.0
  %233 = vmatpush1.msra.mxu0 0.0
  %234 = vmatprep.subr.mxu0 0.0
  %235 = vmatpush1.msra.mxu0 0.0
  %236 = vmatprep.subr.mxu0 0.0
  %237 = vmatpush1.msra.mxu0 0.0
  %238 = vmatprep.subr.mxu0 0.0
  %239 = vmatpush1.msra.mxu0 0.0
  %240 = vmatprep.subr.mxu0 0.0
  %241 = vmatpush1.msra.mxu0 0.0
  %242 = vmatprep.subr.mxu0 0.0
  %243 = vmatpush1.msra.mxu0 0.0
  %244 = vmatprep.subr.mxu0 0.0
  %245 = vmatpush1.msra.mxu0 0.0
  %246 = vmatprep.subr.mxu0 0.0
  %247 = vmatpush1.msra.mxu0 0.0
  %248 = vmatprep.subr.mxu0 0.0
  %249 = vmatpush1.msra.mxu0 0.0
  %250 = vmatprep.subr.mxu0 0.0
  %251 = vmatpush1.msra.mxu0 0.0
  %252 = vmatprep.subr.mxu0 0.0
  %253 = vmatpush1.msra.mxu0 0.0
  %254 = vmatprep.subr.mxu0 0.0
  %255 = vmatpush1.msra.mxu0 0.0
  %256 = vmatprep.subr.mxu0 0.0
  %257 = vmatpush1.msra.mxu0 0.0
  %258 = vmatprep.subr.mxu0 0.0
  %259 = vmatpush1.msra.mxu0 0.0
  %260 = vmatprep.subr.mxu0 0.0
  %261 = vmatpush1.msra.mxu0 0.0
  %262 = vmatprep.subr.mxu0 0.0
  %263 = vmatpush1.msra.mxu0 0.0
  %264 = vmatprep.subr.mxu0 0.0
  %265 = vmatpush1.msra.mxu0 0.0
  %266 = vmatprep.subr.mxu0 0.0
  %267 = vmatpush1.msra.mxu0 0.0
  %268 = vmatprep.subr.mxu0 0.0
  %269 = vmatpush1.msra.mxu0 0.0
  %270 = vmatprep.subr.mxu0 0.0
  %271 = vmatpush1.msra.mxu0 0.0
  %272 = vmatprep.mubr.f32.mxu0 0.0
  %273 = vmatmul.mubr.f32.gmra.mrb[0].mxu0 %v64
  %v274 = vpop.f32.mrb[0].mxu0
  %v275 = vadd.f32 0.0, %v274
  %v276 = vpop.f32.mrb[0].mxu0
  %v277 = vadd.f32 0.0, %v276
  %278 = vdwg.mxu0
  %v279 = vsel %vm63, %v23, 0
  %281 = vmatprep.subr.mxu0 %v25
  %282 = vmatpush1.msra.mxu0 %v24
  %283 = vmatprep.subr.mxu0 0.0
  %284 = vmatpush1.msra.mxu0 0.0
  %285 = vmatprep.subr.mxu0 0.0
  %286 = vmatpush1.msra.mxu0 0.0
  %287 = vmatprep.subr.mxu0 0.0
  %288 = vmatpush1.msra.mxu0 0.0
  %289 = vmatprep.subr.mxu0 0.0
  %290 = vmatpush1.msra.mxu0 0.0
  %291 = vmatprep.subr.mxu0 0.0
  %292 = vmatpush1.msra.mxu0 0.0
  %293 = vmatprep.subr.mxu0 0.0
  %294 = vmatpush1.msra.mxu0 0.0
  %295 = vmatprep.subr.mxu0 0.0
  %296 = vmatpush1.msra.mxu0 0.0
  %297 = vmatprep.subr.mxu0 0.0
  %298 = vmatpush1.msra.mxu0 0.0
  %299 = vmatprep.subr.mxu0 0.0
  %300 = vmatpush1.msra.mxu0 0.0
  %301 = vmatprep.subr.mxu0 0.0
  %302 = vmatpush1.msra.mxu0 0.0
  %303 = vmatprep.subr.mxu0 0.0
  %304 = vmatpush1.msra.mxu0 0.0
  %305 = vmatprep.subr.mxu0 0.0
  %306 = vmatpush1.msra.mxu0 0.0
  %307 = vmatprep.subr.mxu0 0.0
  %308 = vmatpush1.msra.mxu0 0.0
  %309 = vmatprep.subr.mxu0 0.0
  %310 = vmatpush1.msra.mxu0 0.0
  %311 = vmatprep.subr.mxu0 0.0
  %312 = vmatpush1.msra.mxu0 0.0
  %313 = vmatprep.subr.mxu0 0.0
  %314 = vmatpush1.msra.mxu0 0.0
  %315 = vmatprep.subr.mxu0 0.0
  %316 = vmatpush1.msra.mxu0 0.0
  %317 = vmatprep.subr.mxu0 0.0
  %318 = vmatpush1.msra.mxu0 0.0
  %319 = vmatprep.subr.mxu0 0.0
  %320 = vmatpush1.msra.mxu0 0.0
  %321 = vmatprep.subr.mxu0 0.0
  %322 = vmatpush1.msra.mxu0 0.0
  %323 = vmatprep.subr.mxu0 0.0
  %324 = vmatpush1.msra.mxu0 0.0
  %325 = vmatprep.subr.mxu0 0.0
  %326 = vmatpush1.msra.mxu0 0.0
  %327 = vmatprep.subr.mxu0 0.0
  %328 = vmatpush1.msra.mxu0 0.0
  %329 = vmatprep.subr.mxu0 0.0
  %330 = vmatpush1.msra.mxu0 0.0
  %331 = vmatprep.subr.mxu0 0.0
  %332 = vmatpush1.msra.mxu0 0.0
  %333 = vmatprep.subr.mxu0 0.0
  %334 = vmatpush1.msra.mxu0 0.0
  %335 = vmatprep.subr.mxu0 0.0
  %336 = vmatpush1.msra.mxu0 0.0
  %337 = vmatprep.subr.mxu0 0.0
  %338 = vmatpush1.msra.mxu0 0.0
  %339 = vmatprep.subr.mxu0 0.0
  %340 = vmatpush1.msra.mxu0 0.0
  %341 = vmatprep.subr.mxu0 0.0
  %342 = vmatpush1.msra.mxu0 0.0
  %343 = vmatprep.subr.mxu0 0.0
  %344 = vmatpush1.msra.mxu0 0.0
  %345 = vmatprep.mubr.f32.mxu0 0.0
  %346 = vmatmul.mubr.f32.gmra.mrb[0].mxu0 %v279
  %v347 = vpop.f32.mrb[0].mxu0
  %v348 = vadd.f32 %v133, %v347
  %v349 = vpop.f32.mrb[0].mxu0
  %v350 = vadd.f32 %v135, %v349
  %351 = vdwg.mxu0
  %352 = vmatprep.subr.mxu0 %v27
  %353 = vmatpush1.msra.mxu0 %v26
  %354 = vmatprep.subr.mxu0 0.0
  %355 = vmatpush1.msra.mxu0 0.0
  %356 = vmatprep.subr.mxu0 0.0
  %357 = vmatpush1.msra.mxu0 0.0
  %358 = vmatprep.subr.mxu0 0.0
  %359 = vmatpush1.msra.mxu0 0.0
  %360 = vmatprep.subr.mxu0 0.0
  %361 = vmatpush1.msra.mxu0 0.0
  %362 = vmatprep.subr.mxu0 0.0
  %363 = vmatpush1.msra.mxu0 0.0
  %364 = vmatprep.subr.mxu0 0.0
  %365 = vmatpush1.msra.mxu0 0.0
  %366 = vmatprep.subr.mxu0 0.0
  %367 = vmatpush1.msra.mxu0 0.0
  %368 = vmatprep.subr.mxu0 0.0
  %369 = vmatpush1.msra.mxu0 0.0
  %370 = vmatprep.subr.mxu0 0.0
  %371 = vmatpush1.msra.mxu0 0.0
  %372 = vmatprep.subr.mxu0 0.0
  %373 = vmatpush1.msra.mxu0 0.0
  %374 = vmatprep.subr.mxu0 0.0
  %375 = vmatpush1.msra.mxu0 0.0
  %376 = vmatprep.subr.mxu0 0.0
  %377 = vmatpush1.msra.mxu0 0.0
  %378 = vmatprep.subr.mxu0 0.0
  %379 = vmatpush1.msra.mxu0 0.0
  %380 = vmatprep.subr.mxu0 0.0
  %381 = vmatpush1.msra.mxu0 0.0
  %382 = vmatprep.subr.mxu0 0.0
  %383 = vmatpush1.msra.mxu0 0.0
  %384 = vmatprep.subr.mxu0 0.0
  %385 = vmatpush1.msra.mxu0 0.0
  %386 = vmatprep.subr.mxu0 0.0
  %387 = vmatpush1.msra.mxu0 0.0
  %388 = vmatprep.subr.mxu0 0.0
  %389 = vmatpush1.msra.mxu0 0.0
  %390 = vmatprep.subr.mxu0 0.0
  %391 = vmatpush1.msra.mxu0 0.0
  %392 = vmatprep.subr.mxu0 0.0
  %393 = vmatpush1.msra.mxu0 0.0
  %394 = vmatprep.subr.mxu0 0.0
  %395 = vmatpush1.msra.mxu0 0.0
  %396 = vmatprep.subr.mxu0 0.0
  %397 = vmatpush1.msra.mxu0 0.0
  %398 = vmatprep.subr.mxu0 0.0
  %399 = vmatpush1.msra.mxu0 0.0
  %400 = vmatprep.subr.mxu0 0.0
  %401 = vmatpush1.msra.mxu0 0.0
  %402 = vmatprep.subr.mxu0 0.0
  %403 = vmatpush1.msra.mxu0 0.0
  %404 = vmatprep.subr.mxu0 0.0
  %405 = vmatpush1.msra.mxu0 0.0
  %406 = vmatprep.subr.mxu0 0.0
  %407 = vmatpush1.msra.mxu0 0.0
  %408 = vmatprep.subr.mxu0 0.0
  %409 = vmatpush1.msra.mxu0 0.0
  %410 = vmatprep.subr.mxu0 0.0
  %411 = vmatpush1.msra.mxu0 0.0
  %412 = vmatprep.subr.mxu0 0.0
  %413 = vmatpush1.msra.mxu0 0.0
  %414 = vmatprep.subr.mxu0 0.0
  %415 = vmatpush1.msra.mxu0 0.0
  %416 = vmatprep.mubr.f32.mxu0 0.0
  %417 = vmatmul.mubr.f32.gmra.mrb[0].mxu0 %v279
  %v418 = vpop.f32.mrb[0].mxu0
  %v419 = vadd.f32 %v204, %v418
  %v420 = vpop.f32.mrb[0].mxu0
  %v421 = vadd.f32 %v206, %v420
  %422 = vdwg.mxu0
  %423 = vmatprep.subr.mxu0 %v29
  %424 = vmatpush1.msra.mxu0 %v28
  %425 = vmatprep.subr.mxu0 0.0
  %426 = vmatpush1.msra.mxu0 0.0
  %427 = vmatprep.subr.mxu0 0.0
  %428 = vmatpush1.msra.mxu0 0.0
  %429 = vmatprep.subr.mxu0 0.0
  %430 = vmatpush1.msra.mxu0 0.0
  %431 = vmatprep.subr.mxu0 0.0
  %432 = vmatpush1.msra.mxu0 0.0
  %433 = vmatprep.subr.mxu0 0.0
  %434 = vmatpush1.msra.mxu0 0.0
  %435 = vmatprep.subr.mxu0 0.0
  %436 = vmatpush1.msra.mxu0 0.0
  %437 = vmatprep.subr.mxu0 0.0
  %438 = vmatpush1.msra.mxu0 0.0
  %439 = vmatprep.subr.mxu0 0.0
  %440 = vmatpush1.msra.mxu0 0.0
  %441 = vmatprep.subr.mxu0 0.0
  %442 = vmatpush1.msra.mxu0 0.0
  %443 = vmatprep.subr.mxu0 0.0
  %444 = vmatpush1.msra.mxu0 0.0
  %445 = vmatprep.subr.mxu0 0.0
  %446 = vmatpush1.msra.mxu0 0.0
  %447 = vmatprep.subr.mxu0 0.0
  %448 = vmatpush1.msra.mxu0 0.0
  %449 = vmatprep.subr.mxu0 0.0
  %450 = vmatpush1.msra.mxu0 0.0
  %451 = vmatprep.subr.mxu0 0.0
  %452 = vmatpush1.msra.mxu0 0.0
  %453 = vmatprep.subr.mxu0 0.0
  %454 = vmatpush1.msra.mxu0 0.0
  %455 = vmatprep.subr.mxu0 0.0
  %456 = vmatpush1.msra.mxu0 0.0
  %457 = vmatprep.subr.mxu0 0.0
  %458 = vmatpush1.msra.mxu0 0.0
  %459 = vmatprep.subr.mxu0 0.0
  %460 = vmatpush1.msra.mxu0 0.0
  %461 = vmatprep.subr.mxu0 0.0
  %462 = vmatpush1.msra.mxu0 0.0
  %463 = vmatprep.subr.mxu0 0.0
  %464 = vmatpush1.msra.mxu0 0.0
  %465 = vmatprep.subr.mxu0 0.0
  %466 = vmatpush1.msra.mxu0 0.0
  %467 = vmatprep.subr.mxu0 0.0
  %468 = vmatpush1.msra.mxu0 0.0
  %469 = vmatprep.subr.mxu0 0.0
  %470 = vmatpush1.msra.mxu0 0.0
  %471 = vmatprep.subr.mxu0 0.0
  %472 = vmatpush1.msra.mxu0 0.0
  %473 = vmatprep.subr.mxu0 0.0
  %474 = vmatpush1.msra.mxu0 0.0
  %475 = vmatprep.subr.mxu0 0.0
  %476 = vmatpush1.msra.mxu0 0.0
  %477 = vmatprep.subr.mxu0 0.0
  %478 = vmatpush1.msra.mxu0 0.0
  %479 = vmatprep.subr.mxu0 0.0
  %480 = vmatpush1.msra.mxu0 0.0
  %481 = vmatprep.subr.mxu0 0.0
  %482 = vmatpush1.msra.mxu0 0.0
  %483 = vmatprep.subr.mxu0 0.0
  %484 = vmatpush1.msra.mxu0 0.0
  %485 = vmatprep.subr.mxu0 0.0
  %486 = vmatpush1.msra.mxu0 0.0
  %487 = vmatprep.mubr.f32.mxu0 0.0
  %488 = vmatmul.mubr.f32.gmra.mrb[0].mxu0 %v279
  %v489 = vpop.f32.mrb[0].mxu0
  %v490 = vadd.f32 %v275, %v489
  %v491 = vpop.f32.mrb[0].mxu0
  %v492 = vadd.f32 %v277, %v491
  %493 = vdwg.mxu0
  %494 = vrot.lane.b32.xlu0 %v23, 112
  %v495 = vpop.permute.xlu0 %494
  %496 = vrot.lane.b32.xlu0 %v24, 126
  %v497 = vpop.permute.xlu0 %496
  %498 = vrot.lane.b32.xlu0 %v25, 126
  %v499 = vpop.permute.xlu0 %498
  %500 = vrot.lane.b32.xlu0 %v26, 126
  %v501 = vpop.permute.xlu0 %500
  %502 = vrot.lane.b32.xlu0 %v27, 126
  %v503 = vpop.permute.xlu0 %502
  %504 = vrot.lane.b32.xlu0 %v28, 126
  %v505 = vpop.permute.xlu0 %504
  %506 = vrot.lane.b32.xlu0 %v29, 126
  %v507 = vpop.permute.xlu0 %506
  %vm508 = vcmask 1031168
  %v509 = vsel %vm508, %v497, %v499
  %v510 = vsel %vm508, %v499, %v501
  %v511 = vsel %vm508, %v501, %v503
  %v512 = vsel %vm508, %v503, %v505
  %v513 = vsel %vm508, %v505, %v507
  %v520 = vsel %vm63, %v495, 0
  %522 = vmatprep.subr.mxu0 %v510
  %523 = vmatpush1.msra.mxu0 %v509
  %524 = vmatprep.subr.mxu0 0.0
  %525 = vmatpush1.msra.mxu0 0.0
  %526 = vmatprep.subr.mxu0 0.0
  %527 = vmatpush1.msra.mxu0 0.0
  %528 = vmatprep.subr.mxu0 0.0
  %529 = vmatpush1.msra.mxu0 0.0
  %530 = vmatprep.subr.mxu0 0.0
  %531 = vmatpush1.msra.mxu0 0.0
  %532 = vmatprep.subr.mxu0 0.0
  %533 = vmatpush1.msra.mxu0 0.0
  %534 = vmatprep.subr.mxu0 0.0
  %535 = vmatpush1.msra.mxu0 0.0
  %536 = vmatprep.subr.mxu0 0.0
  %537 = vmatpush1.msra.mxu0 0.0
  %538 = vmatprep.subr.mxu0 0.0
  %539 = vmatpush1.msra.mxu0 0.0
  %540 = vmatprep.subr.mxu0 0.0
  %541 = vmatpush1.msra.mxu0 0.0
  %542 = vmatprep.subr.mxu0 0.0
  %543 = vmatpush1.msra.mxu0 0.0
  %544 = vmatprep.subr.mxu0 0.0
  %545 = vmatpush1.msra.mxu0 0.0
  %546 = vmatprep.subr.mxu0 0.0
  %547 = vmatpush1.msra.mxu0 0.0
  %548 = vmatprep.subr.mxu0 0.0
  %549 = vmatpush1.msra.mxu0 0.0
  %550 = vmatprep.subr.mxu0 0.0
  %551 = vmatpush1.msra.mxu0 0.0
  %552 = vmatprep.subr.mxu0 0.0
  %553 = vmatpush1.msra.mxu0 0.0
  %554 = vmatprep.subr.mxu0 0.0
  %555 = vmatpush1.msra.mxu0 0.0
  %556 = vmatprep.subr.mxu0 0.0
  %557 = vmatpush1.msra.mxu0 0.0
  %558 = vmatprep.subr.mxu0 0.0
  %559 = vmatpush1.msra.mxu0 0.0
  %560 = vmatprep.subr.mxu0 0.0
  %561 = vmatpush1.msra.mxu0 0.0
  %562 = vmatprep.subr.mxu0 0.0
  %563 = vmatpush1.msra.mxu0 0.0
  %564 = vmatprep.subr.mxu0 0.0
  %565 = vmatpush1.msra.mxu0 0.0
  %566 = vmatprep.subr.mxu0 0.0
  %567 = vmatpush1.msra.mxu0 0.0
  %568 = vmatprep.subr.mxu0 0.0
  %569 = vmatpush1.msra.mxu0 0.0
  %570 = vmatprep.subr.mxu0 0.0
  %571 = vmatpush1.msra.mxu0 0.0
  %572 = vmatprep.subr.mxu0 0.0
  %573 = vmatpush1.msra.mxu0 0.0
  %574 = vmatprep.subr.mxu0 0.0
  %575 = vmatpush1.msra.mxu0 0.0
  %576 = vmatprep.subr.mxu0 0.0
  %577 = vmatpush1.msra.mxu0 0.0
  %578 = vmatprep.subr.mxu0 0.0
  %579 = vmatpush1.msra.mxu0 0.0
  %580 = vmatprep.subr.mxu0 0.0
  %581 = vmatpush1.msra.mxu0 0.0
  %582 = vmatprep.subr.mxu0 0.0
  %583 = vmatpush1.msra.mxu0 0.0
  %584 = vmatprep.subr.mxu0 0.0
  %585 = vmatpush1.msra.mxu0 0.0
  %586 = vmatprep.mubr.f32.mxu0 0.0
  %587 = vmatmul.mubr.f32.gmra.mrb[0].mxu0 %v520
  %v588 = vpop.f32.mrb[0].mxu0
  %v589 = vadd.f32 0.0, %v588
  %v590 = vpop.f32.mrb[0].mxu0
  %v591 = vadd.f32 0.0, %v590
  %592 = vdwg.mxu0
  %593 = vmatprep.subr.mxu0 %v512
  %594 = vmatpush1.msra.mxu0 %v511
  %595 = vmatprep.subr.mxu0 0.0
  %596 = vmatpush1.msra.mxu0 0.0
  %597 = vmatprep.subr.mxu0 0.0
  %598 = vmatpush1.msra.mxu0 0.0
  %599 = vmatprep.subr.mxu0 0.0
  %600 = vmatpush1.msra.mxu0 0.0
  %601 = vmatprep.subr.mxu0 0.0
  %602 = vmatpush1.msra.mxu0 0.0
  %603 = vmatprep.subr.mxu0 0.0
  %604 = vmatpush1.msra.mxu0 0.0
  %605 = vmatprep.subr.mxu0 0.0
  %606 = vmatpush1.msra.mxu0 0.0
  %607 = vmatprep.subr.mxu0 0.0
  %608 = vmatpush1.msra.mxu0 0.0
  %609 = vmatprep.subr.mxu0 0.0
  %610 = vmatpush1.msra.mxu0 0.0
  %611 = vmatprep.subr.mxu0 0.0
  %612 = vmatpush1.msra.mxu0 0.0
  %613 = vmatprep.subr.mxu0 0.0
  %614 = vmatpush1.msra.mxu0 0.0
  %615 = vmatprep.subr.mxu0 0.0
  %616 = vmatpush1.msra.mxu0 0.0
  %617 = vmatprep.subr.mxu0 0.0
  %618 = vmatpush1.msra.mxu0 0.0
  %619 = vmatprep.subr.mxu0 0.0
  %620 = vmatpush1.msra.mxu0 0.0
  %621 = vmatprep.subr.mxu0 0.0
  %622 = vmatpush1.msra.mxu0 0.0
  %623 = vmatprep.subr.mxu0 0.0
  %624 = vmatpush1.msra.mxu0 0.0
  %625 = vmatprep.subr.mxu0 0.0
  %626 = vmatpush1.msra.mxu0 0.0
  %627 = vmatprep.subr.mxu0 0.0
  %628 = vmatpush1.msra.mxu0 0.0
  %629 = vmatprep.subr.mxu0 0.0
  %630 = vmatpush1.msra.mxu0 0.0
  %631 = vmatprep.subr.mxu0 0.0
  %632 = vmatpush1.msra.mxu0 0.0
  %633 = vmatprep.subr.mxu0 0.0
  %634 = vmatpush1.msra.mxu0 0.0
  %635 = vmatprep.subr.mxu0 0.0
  %636 = vmatpush1.msra.mxu0 0.0
  %637 = vmatprep.subr.mxu0 0.0
  %638 = vmatpush1.msra.mxu0 0.0
  %639 = vmatprep.subr.mxu0 0.0
  %640 = vmatpush1.msra.mxu0 0.0
  %641 = vmatprep.subr.mxu0 0.0
  %642 = vmatpush1.msra.mxu0 0.0
  %643 = vmatprep.subr.mxu0 0.0
  %644 = vmatpush1.msra.mxu0 0.0
  %645 = vmatprep.subr.mxu0 0.0
  %646 = vmatpush1.msra.mxu0 0.0
  %647 = vmatprep.subr.mxu0 0.0
  %648 = vmatpush1.msra.mxu0 0.0
  %649 = vmatprep.subr.mxu0 0.0
  %650 = vmatpush1.msra.mxu0 0.0
  %651 = vmatprep.subr.mxu0 0.0
  %652 = vmatpush1.msra.mxu0 0.0
  %653 = vmatprep.subr.mxu0 0.0
  %654 = vmatpush1.msra.mxu0 0.0
  %655 = vmatprep.subr.mxu0 0.0
  %656 = vmatpush1.msra.mxu0 0.0
  %657 = vmatprep.mubr.f32.mxu0 0.0
  %658 = vmatmul.mubr.f32.gmra.mrb[0].mxu0 %v520
  %v659 = vpop.f32.mrb[0].mxu0
  %v660 = vadd.f32 0.0, %v659
  %v661 = vpop.f32.mrb[0].mxu0
  %v662 = vadd.f32 0.0, %v661
  %663 = vdwg.mxu0
  %664 = vmatprep.subr.mxu0 %v507
  %665 = vmatpush1.msra.mxu0 %v513
  %666 = vmatprep.subr.mxu0 0.0
  %667 = vmatpush1.msra.mxu0 0.0
  %668 = vmatprep.subr.mxu0 0.0
  %669 = vmatpush1.msra.mxu0 0.0
  %670 = vmatprep.subr.mxu0 0.0
  %671 = vmatpush1.msra.mxu0 0.0
  %672 = vmatprep.subr.mxu0 0.0
  %673 = vmatpush1.msra.mxu0 0.0
  %674 = vmatprep.subr.mxu0 0.0
  %675 = vmatpush1.msra.mxu0 0.0
  %676 = vmatprep.subr.mxu0 0.0
  %677 = vmatpush1.msra.mxu0 0.0
  %678 = vmatprep.subr.mxu0 0.0
  %679 = vmatpush1.msra.mxu0 0.0
  %680 = vmatprep.subr.mxu0 0.0
  %681 = vmatpush1.msra.mxu0 0.0
  %682 = vmatprep.subr.mxu0 0.0
  %683 = vmatpush1.msra.mxu0 0.0
  %684 = vmatprep.subr.mxu0 0.0
  %685 = vmatpush1.msra.mxu0 0.0
  %686 = vmatprep.subr.mxu0 0.0
  %687 = vmatpush1.msra.mxu0 0.0
  %688 = vmatprep.subr.mxu0 0.0
  %689 = vmatpush1.msra.mxu0 0.0
  %690 = vmatprep.subr.mxu0 0.0
  %691 = vmatpush1.msra.mxu0 0.0
  %692 = vmatprep.subr.mxu0 0.0
  %693 = vmatpush1.msra.mxu0 0.0
  %694 = vmatprep.subr.mxu0 0.0
  %695 = vmatpush1.msra.mxu0 0.0
  %696 = vmatprep.subr.mxu0 0.0
  %697 = vmatpush1.msra.mxu0 0.0
  %698 = vmatprep.subr.mxu0 0.0
  %699 = vmatpush1.msra.mxu0 0.0
  %700 = vmatprep.subr.mxu0 0.0
  %701 = vmatpush1.msra.mxu0 0.0
  %702 = vmatprep.subr.mxu0 0.0
  %703 = vmatpush1.msra.mxu0 0.0
  %704 = vmatprep.subr.mxu0 0.0
  %705 = vmatpush1.msra.mxu0 0.0
  %706 = vmatprep.subr.mxu0 0.0
  %707 = vmatpush1.msra.mxu0 0.0
  %708 = vmatprep.subr.mxu0 0.0
  %709 = vmatpush1.msra.mxu0 0.0
  %710 = vmatprep.subr.mxu0 0.0
  %711 = vmatpush1.msra.mxu0 0.0
  %712 = vmatprep.subr.mxu0 0.0
  %713 = vmatpush1.msra.mxu0 0.0
  %714 = vmatprep.subr.mxu0 0.0
  %715 = vmatpush1.msra.mxu0 0.0
  %716 = vmatprep.subr.mxu0 0.0
  %717 = vmatpush1.msra.mxu0 0.0
  %718 = vmatprep.subr.mxu0 0.0
  %719 = vmatpush1.msra.mxu0 0.0
  %720 = vmatprep.subr.mxu0 0.0
  %721 = vmatpush1.msra.mxu0 0.0
  %722 = vmatprep.subr.mxu0 0.0
  %723 = vmatpush1.msra.mxu0 0.0
  %724 = vmatprep.subr.mxu0 0.0
  %725 = vmatpush1.msra.mxu0 0.0
  %726 = vmatprep.subr.mxu0 0.0
  %727 = vmatpush1.msra.mxu0 0.0
  %728 = vmatprep.mubr.f32.mxu0 0.0
  %729 = vmatmul.mubr.f32.gmra.mrb[0].mxu0 %v520
  %v730 = vpop.f32.mrb[0].mxu0
  %v731 = vadd.f32 0.0, %v730
  %v732 = vpop.f32.mrb[0].mxu0
  %v733 = vadd.f32 0.0, %v732
  %734 = vdwg.mxu0
  %v735 = vadd.f32 %v348, %v589
  %v736 = vadd.f32 %v350, %v591
  %v737 = vadd.f32 %v419, %v660
  %v738 = vadd.f32 %v421, %v662
  %v739 = vadd.f32 %v490, %v731
  %v740 = vadd.f32 %v492, %v733
  %741 = vrot.lane.b32.xlu0 %v23, 104
  %v742 = vpop.permute.xlu0 %741
  %743 = vrot.lane.b32.xlu0 %v24, 110
  %v744 = vpop.permute.xlu0 %743
  %745 = vrot.lane.b32.xlu0 %v25, 110
  %v746 = vpop.permute.xlu0 %745
  %747 = vrot.lane.b32.xlu0 %v26, 110
  %v748 = vpop.permute.xlu0 %747
  %749 = vrot.lane.b32.xlu0 %v27, 110
  %v750 = vpop.permute.xlu0 %749
  %751 = vrot.lane.b32.xlu0 %v28, 110
  %v752 = vpop.permute.xlu0 %751
  %753 = vrot.lane.b32.xlu0 %v29, 110
  %v754 = vpop.permute.xlu0 %753
  %vm755 = vcmask 900096
  %v756 = vsel %vm755, %v744, %v746
  %v757 = vsel %vm755, %v746, %v748
  %v758 = vsel %vm755, %v748, %v750
  %v759 = vsel %vm755, %v750, %v752
  %v760 = vsel %vm755, %v752, %v754
  %v767 = vsel %vm63, %v742, 0
  %769 = vmatprep.subr.mxu0 %v757
  %770 = vmatpush1.msra.mxu0 %v756
  %771 = vmatprep.subr.mxu0 0.0
  %772 = vmatpush1.msra.mxu0 0.0
  %773 = vmatprep.subr.mxu0 0.0
  %774 = vmatpush1.msra.mxu0 0.0
  %775 = vmatprep.subr.mxu0 0.0
  %776 = vmatpush1.msra.mxu0 0.0
  %777 = vmatprep.subr.mxu0 0.0
  %778 = vmatpush1.msra.mxu0 0.0
  %779 = vmatprep.subr.mxu0 0.0
  %780 = vmatpush1.msra.mxu0 0.0
  %781 = vmatprep.subr.mxu0 0.0
  %782 = vmatpush1.msra.mxu0 0.0
  %783 = vmatprep.subr.mxu0 0.0
  %784 = vmatpush1.msra.mxu0 0.0
  %785 = vmatprep.subr.mxu0 0.0
  %786 = vmatpush1.msra.mxu0 0.0
  %787 = vmatprep.subr.mxu0 0.0
  %788 = vmatpush1.msra.mxu0 0.0
  %789 = vmatprep.subr.mxu0 0.0
  %790 = vmatpush1.msra.mxu0 0.0
  %791 = vmatprep.subr.mxu0 0.0
  %792 = vmatpush1.msra.mxu0 0.0
  %793 = vmatprep.subr.mxu0 0.0
  %794 = vmatpush1.msra.mxu0 0.0
  %795 = vmatprep.subr.mxu0 0.0
  %796 = vmatpush1.msra.mxu0 0.0
  %797 = vmatprep.subr.mxu0 0.0
  %798 = vmatpush1.msra.mxu0 0.0
  %799 = vmatprep.subr.mxu0 0.0
  %800 = vmatpush1.msra.mxu0 0.0
  %801 = vmatprep.subr.mxu0 0.0
  %802 = vmatpush1.msra.mxu0 0.0
  %803 = vmatprep.subr.mxu0 0.0
  %804 = vmatpush1.msra.mxu0 0.0
  %805 = vmatprep.subr.mxu0 0.0
  %806 = vmatpush1.msra.mxu0 0.0
  %807 = vmatprep.subr.mxu0 0.0
  %808 = vmatpush1.msra.mxu0 0.0
  %809 = vmatprep.subr.mxu0 0.0
  %810 = vmatpush1.msra.mxu0 0.0
  %811 = vmatprep.subr.mxu0 0.0
  %812 = vmatpush1.msra.mxu0 0.0
  %813 = vmatprep.subr.mxu0 0.0
  %814 = vmatpush1.msra.mxu0 0.0
  %815 = vmatprep.subr.mxu0 0.0
  %816 = vmatpush1.msra.mxu0 0.0
  %817 = vmatprep.subr.mxu0 0.0
  %818 = vmatpush1.msra.mxu0 0.0
  %819 = vmatprep.subr.mxu0 0.0
  %820 = vmatpush1.msra.mxu0 0.0
  %821 = vmatprep.subr.mxu0 0.0
  %822 = vmatpush1.msra.mxu0 0.0
  %823 = vmatprep.subr.mxu0 0.0
  %824 = vmatpush1.msra.mxu0 0.0
  %825 = vmatprep.subr.mxu0 0.0
  %826 = vmatpush1.msra.mxu0 0.0
  %827 = vmatprep.subr.mxu0 0.0
  %828 = vmatpush1.msra.mxu0 0.0
  %829 = vmatprep.subr.mxu0 0.0
  %830 = vmatpush1.msra.mxu0 0.0
  %831 = vmatprep.subr.mxu0 0.0
  %832 = vmatpush1.msra.mxu0 0.0
  %833 = vmatprep.mubr.f32.mxu0 0.0
  %834 = vmatmul.mubr.f32.gmra.mrb[0].mxu0 %v767
  %v835 = vpop.f32.mrb[0].mxu0
  %v836 = vadd.f32 0.0, %v835
  %v837 = vpop.f32.mrb[0].mxu0
  %v838 = vadd.f32 0.0, %v837
  %839 = vdwg.mxu0
  %840 = vmatprep.subr.mxu0 %v759
  %841 = vmatpush1.msra.mxu0 %v758
  %842 = vmatprep.subr.mxu0 0.0
  %843 = vmatpush1.msra.mxu0 0.0
  %844 = vmatprep.subr.mxu0 0.0
  %845 = vmatpush1.msra.mxu0 0.0
  %846 = vmatprep.subr.mxu0 0.0
  %847 = vmatpush1.msra.mxu0 0.0
  %848 = vmatprep.subr.mxu0 0.0
  %849 = vmatpush1.msra.mxu0 0.0
  %850 = vmatprep.subr.mxu0 0.0
  %851 = vmatpush1.msra.mxu0 0.0
  %852 = vmatprep.subr.mxu0 0.0
  %853 = vmatpush1.msra.mxu0 0.0
  %854 = vmatprep.subr.mxu0 0.0
  %855 = vmatpush1.msra.mxu0 0.0
  %856 = vmatprep.subr.mxu0 0.0
  %857 = vmatpush1.msra.mxu0 0.0
  %858 = vmatprep.subr.mxu0 0.0
  %859 = vmatpush1.msra.mxu0 0.0
  %860 = vmatprep.subr.mxu0 0.0
  %861 = vmatpush1.msra.mxu0 0.0
  %862 = vmatprep.subr.mxu0 0.0
  %863 = vmatpush1.msra.mxu0 0.0
  %864 = vmatprep.subr.mxu0 0.0
  %865 = vmatpush1.msra.mxu0 0.0
  %866 = vmatprep.subr.mxu0 0.0
  %867 = vmatpush1.msra.mxu0 0.0
  %868 = vmatprep.subr.mxu0 0.0
  %869 = vmatpush1.msra.mxu0 0.0
  %870 = vmatprep.subr.mxu0 0.0
  %871 = vmatpush1.msra.mxu0 0.0
  %872 = vmatprep.subr.mxu0 0.0
  %873 = vmatpush1.msra.mxu0 0.0
  %874 = vmatprep.subr.mxu0 0.0
  %875 = vmatpush1.msra.mxu0 0.0
  %876 = vmatprep.subr.mxu0 0.0
  %877 = vmatpush1.msra.mxu0 0.0
  %878 = vmatprep.subr.mxu0 0.0
  %879 = vmatpush1.msra.mxu0 0.0
  %880 = vmatprep.subr.mxu0 0.0
  %881 = vmatpush1.msra.mxu0 0.0
  %882 = vmatprep.subr.mxu0 0.0
  %883 = vmatpush1.msra.mxu0 0.0
  %884 = vmatprep.subr.mxu0 0.0
  %885 = vmatpush1.msra.mxu0 0.0
  %886 = vmatprep.subr.mxu0 0.0
  %887 = vmatpush1.msra.mxu0 0.0
  %888 = vmatprep.subr.mxu0 0.0
  %889 = vmatpush1.msra.mxu0 0.0
  %890 = vmatprep.subr.mxu0 0.0
  %891 = vmatpush1.msra.mxu0 0.0
  %892 = vmatprep.subr.mxu0 0.0
  %893 = vmatpush1.msra.mxu0 0.0
  %894 = vmatprep.subr.mxu0 0.0
  %895 = vmatpush1.msra.mxu0 0.0
  %896 = vmatprep.subr.mxu0 0.0
  %897 = vmatpush1.msra.mxu0 0.0
  %898 = vmatprep.subr.mxu0 0.0
  %899 = vmatpush1.msra.mxu0 0.0
  %900 = vmatprep.subr.mxu0 0.0
  %901 = vmatpush1.msra.mxu0 0.0
  %902 = vmatprep.subr.mxu0 0.0
  %903 = vmatpush1.msra.mxu0 0.0
  %904 = vmatprep.mubr.f32.mxu0 0.0
  %905 = vmatmul.mubr.f32.gmra.mrb[0].mxu0 %v767
  %v906 = vpop.f32.mrb[0].mxu0
  %v907 = vadd.f32 0.0, %v906
  %v908 = vpop.f32.mrb[0].mxu0
  %v909 = vadd.f32 0.0, %v908
  %910 = vdwg.mxu0
  %911 = vmatprep.subr.mxu0 %v754
  %912 = vmatpush1.msra.mxu0 %v760
  %913 = vmatprep.subr.mxu0 0.0
  %914 = vmatpush1.msra.mxu0 0.0
  %915 = vmatprep.subr.mxu0 0.0
  %916 = vmatpush1.msra.mxu0 0.0
  %917 = vmatprep.subr.mxu0 0.0
  %918 = vmatpush1.msra.mxu0 0.0
  %919 = vmatprep.subr.mxu0 0.0
  %920 = vmatpush1.msra.mxu0 0.0
  %921 = vmatprep.subr.mxu0 0.0
  %922 = vmatpush1.msra.mxu0 0.0
  %923 = vmatprep.subr.mxu0 0.0
  %924 = vmatpush1.msra.mxu0 0.0
  %925 = vmatprep.subr.mxu0 0.0
  %926 = vmatpush1.msra.mxu0 0.0
  %927 = vmatprep.subr.mxu0 0.0
  %928 = vmatpush1.msra.mxu0 0.0
  %929 = vmatprep.subr.mxu0 0.0
  %930 = vmatpush1.msra.mxu0 0.0
  %931 = vmatprep.subr.mxu0 0.0
  %932 = vmatpush1.msra.mxu0 0.0
  %933 = vmatprep.subr.mxu0 0.0
  %934 = vmatpush1.msra.mxu0 0.0
  %935 = vmatprep.subr.mxu0 0.0
  %936 = vmatpush1.msra.mxu0 0.0
  %937 = vmatprep.subr.mxu0 0.0
  %938 = vmatpush1.msra.mxu0 0.0
  %939 = vmatprep.subr.mxu0 0.0
  %940 = vmatpush1.msra.mxu0 0.0
  %941 = vmatprep.subr.mxu0 0.0
  %942 = vmatpush1.msra.mxu0 0.0
  %943 = vmatprep.subr.mxu0 0.0
  %944 = vmatpush1.msra.mxu0 0.0
  %945 = vmatprep.subr.mxu0 0.0
  %946 = vmatpush1.msra.mxu0 0.0
  %947 = vmatprep.subr.mxu0 0.0
  %948 = vmatpush1.msra.mxu0 0.0
  %949 = vmatprep.subr.mxu0 0.0
  %950 = vmatpush1.msra.mxu0 0.0
  %951 = vmatprep.subr.mxu0 0.0
  %952 = vmatpush1.msra.mxu0 0.0
  %953 = vmatprep.subr.mxu0 0.0
  %954 = vmatpush1.msra.mxu0 0.0
  %955 = vmatprep.subr.mxu0 0.0
  %956 = vmatpush1.msra.mxu0 0.0
  %957 = vmatprep.subr.mxu0 0.0
  %958 = vmatpush1.msra.mxu0 0.0
  %959 = vmatprep.subr.mxu0 0.0
  %960 = vmatpush1.msra.mxu0 0.0
  %961 = vmatprep.subr.mxu0 0.0
  %962 = vmatpush1.msra.mxu0 0.0
  %963 = vmatprep.subr.mxu0 0.0
  %964 = vmatpush1.msra.mxu0 0.0
  %965 = vmatprep.subr.mxu0 0.0
  %966 = vmatpush1.msra.mxu0 0.0
  %967 = vmatprep.subr.mxu0 0.0
  %968 = vmatpush1.msra.mxu0 0.0
  %969 = vmatprep.subr.mxu0 0.0
  %970 = vmatpush1.msra.mxu0 0.0
  %971 = vmatprep.subr.mxu0 0.0
  %972 = vmatpush1.msra.mxu0 0.0
  %973 = vmatprep.subr.mxu0 0.0
  %974 = vmatpush1.msra.mxu0 0.0
  %975 = vmatprep.mubr.f32.mxu0 0.0
  %976 = vmatmul.mubr.f32.gmra.mrb[0].mxu0 %v767
  %v977 = vpop.f32.mrb[0].mxu0
  %v978 = vadd.f32 0.0, %v977
  %v979 = vpop.f32.mrb[0].mxu0
  %v980 = vadd.f32 0.0, %v979
  %981 = vdwg.mxu0
  %v982 = vadd.f32 %v735, %v836
  %v983 = vadd.f32 %v736, %v838
  %v984 = vadd.f32 %v737, %v907
  %v985 = vadd.f32 %v738, %v909
  %v986 = vadd.f32 %v739, %v978
  %v987 = vadd.f32 %v740, %v980
  %988 = vrot.lane.b32.xlu0 %v23, 96
  %v989 = vpop.permute.xlu0 %988
  %990 = vrot.lane.b32.xlu0 %v24, 109
  %v991 = vpop.permute.xlu0 %990
  %992 = vrot.lane.b32.xlu0 %v25, 109
  %v993 = vpop.permute.xlu0 %992
  %994 = vrot.lane.b32.xlu0 %v26, 109
  %v995 = vpop.permute.xlu0 %994
  %996 = vrot.lane.b32.xlu0 %v27, 109
  %v997 = vpop.permute.xlu0 %996
  %998 = vrot.lane.b32.xlu0 %v28, 109
  %v999 = vpop.permute.xlu0 %998
  %1000 = vrot.lane.b32.xlu0 %v29, 109
  %v1001 = vpop.permute.xlu0 %1000
  %vm1002 = vcmask 891904
  %v1003 = vsel %vm1002, %v991, %v993
  %v1004 = vsel %vm1002, %v993, %v995
  %v1005 = vsel %vm1002, %v995, %v997
  %v1006 = vsel %vm1002, %v997, %v999
  %v1007 = vsel %vm1002, %v999, %v1001
  %v1014 = vsel %vm63, %v989, 0
  %1016 = vmatprep.subr.mxu0 %v1004
  %1017 = vmatpush1.msra.mxu0 %v1003
  %1018 = vmatprep.subr.mxu0 0.0
  %1019 = vmatpush1.msra.mxu0 0.0
  %1020 = vmatprep.subr.mxu0 0.0
  %1021 = vmatpush1.msra.mxu0 0.0
  %1022 = vmatprep.subr.mxu0 0.0
  %1023 = vmatpush1.msra.mxu0 0.0
  %1024 = vmatprep.subr.mxu0 0.0
  %1025 = vmatpush1.msra.mxu0 0.0
  %1026 = vmatprep.subr.mxu0 0.0
  %1027 = vmatpush1.msra.mxu0 0.0
  %1028 = vmatprep.subr.mxu0 0.0
  %1029 = vmatpush1.msra.mxu0 0.0
  %1030 = vmatprep.subr.mxu0 0.0
  %1031 = vmatpush1.msra.mxu0 0.0
  %1032 = vmatprep.subr.mxu0 0.0
  %1033 = vmatpush1.msra.mxu0 0.0
  %1034 = vmatprep.subr.mxu0 0.0
  %1035 = vmatpush1.msra.mxu0 0.0
  %1036 = vmatprep.subr.mxu0 0.0
  %1037 = vmatpush1.msra.mxu0 0.0
  %1038 = vmatprep.subr.mxu0 0.0
  %1039 = vmatpush1.msra.mxu0 0.0
  %1040 = vmatprep.subr.mxu0 0.0
  %1041 = vmatpush1.msra.mxu0 0.0
  %1042 = vmatprep.subr.mxu0 0.0
  %1043 = vmatpush1.msra.mxu0 0.0
  %1044 = vmatprep.subr.mxu0 0.0
  %1045 = vmatpush1.msra.mxu0 0.0
  %1046 = vmatprep.subr.mxu0 0.0
  %1047 = vmatpush1.msra.mxu0 0.0
  %1048 = vmatprep.subr.mxu0 0.0
  %1049 = vmatpush1.msra.mxu0 0.0
  %1050 = vmatprep.subr.mxu0 0.0
  %1051 = vmatpush1.msra.mxu0 0.0
  %1052 = vmatprep.subr.mxu0 0.0
  %1053 = vmatpush1.msra.mxu0 0.0
  %1054 = vmatprep.subr.mxu0 0.0
  %1055 = vmatpush1.msra.mxu0 0.0
  %1056 = vmatprep.subr.mxu0 0.0
  %1057 = vmatpush1.msra.mxu0 0.0
  %1058 = vmatprep.subr.mxu0 0.0
  %1059 = vmatpush1.msra.mxu0 0.0
  %1060 = vmatprep.subr.mxu0 0.0
  %1061 = vmatpush1.msra.mxu0 0.0
  %1062 = vmatprep.subr.mxu0 0.0
  %1063 = vmatpush1.msra.mxu0 0.0
  %1064 = vmatprep.subr.mxu0 0.0
  %1065 = vmatpush1.msra.mxu0 0.0
  %1066 = vmatprep.subr.mxu0 0.0
  %1067 = vmatpush1.msra.mxu0 0.0
  %1068 = vmatprep.subr.mxu0 0.0
  %1069 = vmatpush1.msra.mxu0 0.0
  %1070 = vmatprep.subr.mxu0 0.0
  %1071 = vmatpush1.msra.mxu0 0.0
  %1072 = vmatprep.subr.mxu0 0.0
  %1073 = vmatpush1.msra.mxu0 0.0
  %1074 = vmatprep.subr.mxu0 0.0
  %1075 = vmatpush1.msra.mxu0 0.0
  %1076 = vmatprep.subr.mxu0 0.0
  %1077 = vmatpush1.msra.mxu0 0.0
  %1078 = vmatprep.subr.mxu0 0.0
  %1079 = vmatpush1.msra.mxu0 0.0
  %1080 = vmatprep.mubr.f32.mxu0 0.0
  %1081 = vmatmul.mubr.f32.gmra.mrb[0].mxu0 %v1014
  %v1082 = vpop.f32.mrb[0].mxu0
  %v1083 = vadd.f32 0.0, %v1082
  %v1084 = vpop.f32.mrb[0].mxu0
  %v1085 = vadd.f32 0.0, %v1084
  %1086 = vdwg.mxu0
  %1087 = vmatprep.subr.mxu0 %v1006
  %1088 = vmatpush1.msra.mxu0 %v1005
  %1089 = vmatprep.subr.mxu0 0.0
  %1090 = vmatpush1.msra.mxu0 0.0
  %1091 = vmatprep.subr.mxu0 0.0
  %1092 = vmatpush1.msra.mxu0 0.0
  %1093 = vmatprep.subr.mxu0 0.0
  %1094 = vmatpush1.msra.mxu0 0.0
  %1095 = vmatprep.subr.mxu0 0.0
  %1096 = vmatpush1.msra.mxu0 0.0
  %1097 = vmatprep.subr.mxu0 0.0
  %1098 = vmatpush1.msra.mxu0 0.0
  %1099 = vmatprep.subr.mxu0 0.0
  %1100 = vmatpush1.msra.mxu0 0.0
  %1101 = vmatprep.subr.mxu0 0.0
  %1102 = vmatpush1.msra.mxu0 0.0
  %1103 = vmatprep.subr.mxu0 0.0
  %1104 = vmatpush1.msra.mxu0 0.0
  %1105 = vmatprep.subr.mxu0 0.0
  %1106 = vmatpush1.msra.mxu0 0.0
  %1107 = vmatprep.subr.mxu0 0.0
  %1108 = vmatpush1.msra.mxu0 0.0
  %1109 = vmatprep.subr.mxu0 0.0
  %1110 = vmatpush1.msra.mxu0 0.0
  %1111 = vmatprep.subr.mxu0 0.0
  %1112 = vmatpush1.msra.mxu0 0.0
  %1113 = vmatprep.subr.mxu0 0.0
  %1114 = vmatpush1.msra.mxu0 0.0
  %1115 = vmatprep.subr.mxu0 0.0
  %1116 = vmatpush1.msra.mxu0 0.0
  %1117 = vmatprep.subr.mxu0 0.0
  %1118 = vmatpush1.msra.mxu0 0.0
  %1119 = vmatprep.subr.mxu0 0.0
  %1120 = vmatpush1.msra.mxu0 0.0
  %1121 = vmatprep.subr.mxu0 0.0
  %1122 = vmatpush1.msra.mxu0 0.0
  %1123 = vmatprep.subr.mxu0 0.0
  %1124 = vmatpush1.msra.mxu0 0.0
  %1125 = vmatprep.subr.mxu0 0.0
  %1126 = vmatpush1.msra.mxu0 0.0
  %1127 = vmatprep.subr.mxu0 0.0
  %1128 = vmatpush1.msra.mxu0 0.0
  %1129 = vmatprep.subr.mxu0 0.0
  %1130 = vmatpush1.msra.mxu0 0.0
  %1131 = vmatprep.subr.mxu0 0.0
  %1132 = vmatpush1.msra.mxu0 0.0
  %1133 = vmatprep.subr.mxu0 0.0
  %1134 = vmatpush1.msra.mxu0 0.0
  %1135 = vmatprep.subr.mxu0 0.0
  %1136 = vmatpush1.msra.mxu0 0.0
  %1137 = vmatprep.subr.mxu0 0.0
  %1138 = vmatpush1.msra.mxu0 0.0
  %1139 = vmatprep.subr.mxu0 0.0
  %1140 = vmatpush1.msra.mxu0 0.0
  %1141 = vmatprep.subr.mxu0 0.0
  %1142 = vmatpush1.msra.mxu0 0.0
  %1143 = vmatprep.subr.mxu0 0.0
  %1144 = vmatpush1.msra.mxu0 0.0
  %1145 = vmatprep.subr.mxu0 0.0
  %1146 = vmatpush1.msra.mxu0 0.0
  %1147 = vmatprep.subr.mxu0 0.0
  %1148 = vmatpush1.msra.mxu0 0.0
  %1149 = vmatprep.subr.mxu0 0.0
  %1150 = vmatpush1.msra.mxu0 0.0
  %1151 = vmatprep.mubr.f32.mxu0 0.0
  %1152 = vmatmul.mubr.f32.gmra.mrb[0].mxu0 %v1014
  %v1153 = vpop.f32.mrb[0].mxu0
  %v1154 = vadd.f32 0.0, %v1153
  %v1155 = vpop.f32.mrb[0].mxu0
  %v1156 = vadd.f32 0.0, %v1155
  %1157 = vdwg.mxu0
  %1158 = vmatprep.subr.mxu0 %v1001
  %1159 = vmatpush1.msra.mxu0 %v1007
  %1160 = vmatprep.subr.mxu0 0.0
  %1161 = vmatpush1.msra.mxu0 0.0
  %1162 = vmatprep.subr.mxu0 0.0
  %1163 = vmatpush1.msra.mxu0 0.0
  %1164 = vmatprep.subr.mxu0 0.0
  %1165 = vmatpush1.msra.mxu0 0.0
  %1166 = vmatprep.subr.mxu0 0.0
  %1167 = vmatpush1.msra.mxu0 0.0
  %1168 = vmatprep.subr.mxu0 0.0
  %1169 = vmatpush1.msra.mxu0 0.0
  %1170 = vmatprep.subr.mxu0 0.0
  %1171 = vmatpush1.msra.mxu0 0.0
  %1172 = vmatprep.subr.mxu0 0.0
  %1173 = vmatpush1.msra.mxu0 0.0
  %1174 = vmatprep.subr.mxu0 0.0
  %1175 = vmatpush1.msra.mxu0 0.0
  %1176 = vmatprep.subr.mxu0 0.0
  %1177 = vmatpush1.msra.mxu0 0.0
  %1178 = vmatprep.subr.mxu0 0.0
  %1179 = vmatpush1.msra.mxu0 0.0
  %1180 = vmatprep.subr.mxu0 0.0
  %1181 = vmatpush1.msra.mxu0 0.0
  %1182 = vmatprep.subr.mxu0 0.0
  %1183 = vmatpush1.msra.mxu0 0.0
  %1184 = vmatprep.subr.mxu0 0.0
  %1185 = vmatpush1.msra.mxu0 0.0
  %1186 = vmatprep.subr.mxu0 0.0
  %1187 = vmatpush1.msra.mxu0 0.0
  %1188 = vmatprep.subr.mxu0 0.0
  %1189 = vmatpush1.msra.mxu0 0.0
  %1190 = vmatprep.subr.mxu0 0.0
  %1191 = vmatpush1.msra.mxu0 0.0
  %1192 = vmatprep.subr.mxu0 0.0
  %1193 = vmatpush1.msra.mxu0 0.0
  %1194 = vmatprep.subr.mxu0 0.0
  %1195 = vmatpush1.msra.mxu0 0.0
  %1196 = vmatprep.subr.mxu0 0.0
  %1197 = vmatpush1.msra.mxu0 0.0
  %1198 = vmatprep.subr.mxu0 0.0
  %1199 = vmatpush1.msra.mxu0 0.0
  %1200 = vmatprep.subr.mxu0 0.0
  %1201 = vmatpush1.msra.mxu0 0.0
  %1202 = vmatprep.subr.mxu0 0.0
  %1203 = vmatpush1.msra.mxu0 0.0
  %1204 = vmatprep.subr.mxu0 0.0
  %1205 = vmatpush1.msra.mxu0 0.0
  %1206 = vmatprep.subr.mxu0 0.0
  %1207 = vmatpush1.msra.mxu0 0.0
  %1208 = vmatprep.subr.mxu0 0.0
  %1209 = vmatpush1.msra.mxu0 0.0
  %1210 = vmatprep.subr.mxu0 0.0
  %1211 = vmatpush1.msra.mxu0 0.0
  %1212 = vmatprep.subr.mxu0 0.0
  %1213 = vmatpush1.msra.mxu0 0.0
  %1214 = vmatprep.subr.mxu0 0.0
  %1215 = vmatpush1.msra.mxu0 0.0
  %1216 = vmatprep.subr.mxu0 0.0
  %1217 = vmatpush1.msra.mxu0 0.0
  %1218 = vmatprep.subr.mxu0 0.0
  %1219 = vmatpush1.msra.mxu0 0.0
  %1220 = vmatprep.subr.mxu0 0.0
  %1221 = vmatpush1.msra.mxu0 0.0
  %1222 = vmatprep.mubr.f32.mxu0 0.0
  %1223 = vmatmul.mubr.f32.gmra.mrb[0].mxu0 %v1014
  %v1224 = vpop.f32.mrb[0].mxu0
  %v1225 = vadd.f32 0.0, %v1224
  %v1226 = vpop.f32.mrb[0].mxu0
  %v1227 = vadd.f32 0.0, %v1226
  %1228 = vdwg.mxu0
  %v1229 = vadd.f32 %v982, %v1083
  %v1230 = vadd.f32 %v983, %v1085
  %v1231 = vadd.f32 %v984, %v1154
  %v1232 = vadd.f32 %v985, %v1156
  %v1233 = vadd.f32 %v986, %v1225
  %v1234 = vadd.f32 %v987, %v1227
  %1235 = vrot.lane.b32.xlu0 %v23, 88
  %v1236 = vpop.permute.xlu0 %1235
  %1237 = vrot.lane.b32.xlu0 %v24, 108
  %v1238 = vpop.permute.xlu0 %1237
  %1239 = vrot.lane.b32.xlu0 %v25, 108
  %v1240 = vpop.permute.xlu0 %1239
  %1241 = vrot.lane.b32.xlu0 %v26, 108
  %v1242 = vpop.permute.xlu0 %1241
  %1243 = vrot.lane.b32.xlu0 %v27, 108
  %v1244 = vpop.permute.xlu0 %1243
  %1245 = vrot.lane.b32.xlu0 %v28, 108
  %v1246 = vpop.permute.xlu0 %1245
  %1247 = vrot.lane.b32.xlu0 %v29, 108
  %v1248 = vpop.permute.xlu0 %1247
  %vm1249 = vcmask 883712
  %v1250 = vsel %vm1249, %v1238, %v1240
  %v1251 = vsel %vm1249, %v1240, %v1242
  %v1252 = vsel %vm1249, %v1242, %v1244
  %v1253 = vsel %vm1249, %v1244, %v1246
  %v1254 = vsel %vm1249, %v1246, %v1248
  %v1261 = vsel %vm63, %v1236, 0
  %1263 = vmatprep.subr.mxu0 %v1251
  %1264 = vmatpush1.msra.mxu0 %v1250
  %1265 = vmatprep.subr.mxu0 0.0
  %1266 = vmatpush1.msra.mxu0 0.0
  %1267 = vmatprep.subr.mxu0 0.0
  %1268 = vmatpush1.msra.mxu0 0.0
  %1269 = vmatprep.subr.mxu0 0.0
  %1270 = vmatpush1.msra.mxu0 0.0
  %1271 = vmatprep.subr.mxu0 0.0
  %1272 = vmatpush1.msra.mxu0 0.0
  %1273 = vmatprep.subr.mxu0 0.0
  %1274 = vmatpush1.msra.mxu0 0.0
  %1275 = vmatprep.subr.mxu0 0.0
  %1276 = vmatpush1.msra.mxu0 0.0
  %1277 = vmatprep.subr.mxu0 0.0
  %1278 = vmatpush1.msra.mxu0 0.0
  %1279 = vmatprep.subr.mxu0 0.0
  %1280 = vmatpush1.msra.mxu0 0.0
  %1281 = vmatprep.subr.mxu0 0.0
  %1282 = vmatpush1.msra.mxu0 0.0
  %1283 = vmatprep.subr.mxu0 0.0
  %1284 = vmatpush1.msra.mxu0 0.0
  %1285 = vmatprep.subr.mxu0 0.0
  %1286 = vmatpush1.msra.mxu0 0.0
  %1287 = vmatprep.subr.mxu0 0.0
  %1288 = vmatpush1.msra.mxu0 0.0
  %1289 = vmatprep.subr.mxu0 0.0
  %1290 = vmatpush1.msra.mxu0 0.0
  %1291 = vmatprep.subr.mxu0 0.0
  %1292 = vmatpush1.msra.mxu0 0.0
  %1293 = vmatprep.subr.mxu0 0.0
  %1294 = vmatpush1.msra.mxu0 0.0
  %1295 = vmatprep.subr.mxu0 0.0
  %1296 = vmatpush1.msra.mxu0 0.0
  %1297 = vmatprep.subr.mxu0 0.0
  %1298 = vmatpush1.msra.mxu0 0.0
  %1299 = vmatprep.subr.mxu0 0.0
  %1300 = vmatpush1.msra.mxu0 0.0
  %1301 = vmatprep.subr.mxu0 0.0
  %1302 = vmatpush1.msra.mxu0 0.0
  %1303 = vmatprep.subr.mxu0 0.0
  %1304 = vmatpush1.msra.mxu0 0.0
  %1305 = vmatprep.subr.mxu0 0.0
  %1306 = vmatpush1.msra.mxu0 0.0
  %1307 = vmatprep.subr.mxu0 0.0
  %1308 = vmatpush1.msra.mxu0 0.0
  %1309 = vmatprep.subr.mxu0 0.0
  %1310 = vmatpush1.msra.mxu0 0.0
  %1311 = vmatprep.subr.mxu0 0.0
  %1312 = vmatpush1.msra.mxu0 0.0
  %1313 = vmatprep.subr.mxu0 0.0
  %1314 = vmatpush1.msra.mxu0 0.0
  %1315 = vmatprep.subr.mxu0 0.0
  %1316 = vmatpush1.msra.mxu0 0.0
  %1317 = vmatprep.subr.mxu0 0.0
  %1318 = vmatpush1.msra.mxu0 0.0
  %1319 = vmatprep.subr.mxu0 0.0
  %1320 = vmatpush1.msra.mxu0 0.0
  %1321 = vmatprep.subr.mxu0 0.0
  %1322 = vmatpush1.msra.mxu0 0.0
  %1323 = vmatprep.subr.mxu0 0.0
  %1324 = vmatpush1.msra.mxu0 0.0
  %1325 = vmatprep.subr.mxu0 0.0
  %1326 = vmatpush1.msra.mxu0 0.0
  %1327 = vmatprep.mubr.f32.mxu0 0.0
  %1328 = vmatmul.mubr.f32.gmra.mrb[0].mxu0 %v1261
  %v1329 = vpop.f32.mrb[0].mxu0
  %v1330 = vadd.f32 0.0, %v1329
  %v1331 = vpop.f32.mrb[0].mxu0
  %v1332 = vadd.f32 0.0, %v1331
  %1333 = vdwg.mxu0
  %1334 = vmatprep.subr.mxu0 %v1253
  %1335 = vmatpush1.msra.mxu0 %v1252
  %1336 = vmatprep.subr.mxu0 0.0
  %1337 = vmatpush1.msra.mxu0 0.0
  %1338 = vmatprep.subr.mxu0 0.0
  %1339 = vmatpush1.msra.mxu0 0.0
  %1340 = vmatprep.subr.mxu0 0.0
  %1341 = vmatpush1.msra.mxu0 0.0
  %1342 = vmatprep.subr.mxu0 0.0
  %1343 = vmatpush1.msra.mxu0 0.0
  %1344 = vmatprep.subr.mxu0 0.0
  %1345 = vmatpush1.msra.mxu0 0.0
  %1346 = vmatprep.subr.mxu0 0.0
  %1347 = vmatpush1.msra.mxu0 0.0
  %1348 = vmatprep.subr.mxu0 0.0
  %1349 = vmatpush1.msra.mxu0 0.0
  %1350 = vmatprep.subr.mxu0 0.0
  %1351 = vmatpush1.msra.mxu0 0.0
  %1352 = vmatprep.subr.mxu0 0.0
  %1353 = vmatpush1.msra.mxu0 0.0
  %1354 = vmatprep.subr.mxu0 0.0
  %1355 = vmatpush1.msra.mxu0 0.0
  %1356 = vmatprep.subr.mxu0 0.0
  %1357 = vmatpush1.msra.mxu0 0.0
  %1358 = vmatprep.subr.mxu0 0.0
  %1359 = vmatpush1.msra.mxu0 0.0
  %1360 = vmatprep.subr.mxu0 0.0
  %1361 = vmatpush1.msra.mxu0 0.0
  %1362 = vmatprep.subr.mxu0 0.0
  %1363 = vmatpush1.msra.mxu0 0.0
  %1364 = vmatprep.subr.mxu0 0.0
  %1365 = vmatpush1.msra.mxu0 0.0
  %1366 = vmatprep.subr.mxu0 0.0
  %1367 = vmatpush1.msra.mxu0 0.0
  %1368 = vmatprep.subr.mxu0 0.0
  %1369 = vmatpush1.msra.mxu0 0.0
  %1370 = vmatprep.subr.mxu0 0.0
  %1371 = vmatpush1.msra.mxu0 0.0
  %1372 = vmatprep.subr.mxu0 0.0
  %1373 = vmatpush1.msra.mxu0 0.0
  %1374 = vmatprep.subr.mxu0 0.0
  %1375 = vmatpush1.msra.mxu0 0.0
  %1376 = vmatprep.subr.mxu0 0.0
  %1377 = vmatpush1.msra.mxu0 0.0
  %1378 = vmatprep.subr.mxu0 0.0
  %1379 = vmatpush1.msra.mxu0 0.0
  %1380 = vmatprep.subr.mxu0 0.0
  %1381 = vmatpush1.msra.mxu0 0.0
  %1382 = vmatprep.subr.mxu0 0.0
  %1383 = vmatpush1.msra.mxu0 0.0
  %1384 = vmatprep.subr.mxu0 0.0
  %1385 = vmatpush1.msra.mxu0 0.0
  %1386 = vmatprep.subr.mxu0 0.0
  %1387 = vmatpush1.msra.mxu0 0.0
  %1388 = vmatprep.subr.mxu0 0.0
  %1389 = vmatpush1.msra.mxu0 0.0
  %1390 = vmatprep.subr.mxu0 0.0
  %1391 = vmatpush1.msra.mxu0 0.0
  %1392 = vmatprep.subr.mxu0 0.0
  %1393 = vmatpush1.msra.mxu0 0.0
  %1394 = vmatprep.subr.mxu0 0.0
  %1395 = vmatpush1.msra.mxu0 0.0
  %1396 = vmatprep.subr.mxu0 0.0
  %1397 = vmatpush1.msra.mxu0 0.0
  %1398 = vmatprep.mubr.f32.mxu0 0.0
  %1399 = vmatmul.mubr.f32.gmra.mrb[0].mxu0 %v1261
  %v1400 = vpop.f32.mrb[0].mxu0
  %v1401 = vadd.f32 0.0, %v1400
  %v1402 = vpop.f32.mrb[0].mxu0
  %v1403 = vadd.f32 0.0, %v1402
  %1404 = vdwg.mxu0
  %1405 = vmatprep.subr.mxu0 %v1248
  %1406 = vmatpush1.msra.mxu0 %v1254
  %1407 = vmatprep.subr.mxu0 0.0
  %1408 = vmatpush1.msra.mxu0 0.0
  %1409 = vmatprep.subr.mxu0 0.0
  %1410 = vmatpush1.msra.mxu0 0.0
  %1411 = vmatprep.subr.mxu0 0.0
  %1412 = vmatpush1.msra.mxu0 0.0
  %1413 = vmatprep.subr.mxu0 0.0
  %1414 = vmatpush1.msra.mxu0 0.0
  %1415 = vmatprep.subr.mxu0 0.0
  %1416 = vmatpush1.msra.mxu0 0.0
  %1417 = vmatprep.subr.mxu0 0.0
  %1418 = vmatpush1.msra.mxu0 0.0
  %1419 = vmatprep.subr.mxu0 0.0
  %1420 = vmatpush1.msra.mxu0 0.0
  %1421 = vmatprep.subr.mxu0 0.0
  %1422 = vmatpush1.msra.mxu0 0.0
  %1423 = vmatprep.subr.mxu0 0.0
  %1424 = vmatpush1.msra.mxu0 0.0
  %1425 = vmatprep.subr.mxu0 0.0
  %1426 = vmatpush1.msra.mxu0 0.0
  %1427 = vmatprep.subr.mxu0 0.0
  %1428 = vmatpush1.msra.mxu0 0.0
  %1429 = vmatprep.subr.mxu0 0.0
  %1430 = vmatpush1.msra.mxu0 0.0
  %1431 = vmatprep.subr.mxu0 0.0
  %1432 = vmatpush1.msra.mxu0 0.0
  %1433 = vmatprep.subr.mxu0 0.0
  %1434 = vmatpush1.msra.mxu0 0.0
  %1435 = vmatprep.subr.mxu0 0.0
  %1436 = vmatpush1.msra.mxu0 0.0
  %1437 = vmatprep.subr.mxu0 0.0
  %1438 = vmatpush1.msra.mxu0 0.0
  %1439 = vmatprep.subr.mxu0 0.0
  %1440 = vmatpush1.msra.mxu0 0.0
  %1441 = vmatprep.subr.mxu0 0.0
  %1442 = vmatpush1.msra.mxu0 0.0
  %1443 = vmatprep.subr.mxu0 0.0
  %1444 = vmatpush1.msra.mxu0 0.0
  %1445 = vmatprep.subr.mxu0 0.0
  %1446 = vmatpush1.msra.mxu0 0.0
  %1447 = vmatprep.subr.mxu0 0.0
  %1448 = vmatpush1.msra.mxu0 0.0
  %1449 = vmatprep.subr.mxu0 0.0
  %1450 = vmatpush1.msra.mxu0 0.0
  %1451 = vmatprep.subr.mxu0 0.0
  %1452 = vmatpush1.msra.mxu0 0.0
  %1453 = vmatprep.subr.mxu0 0.0
  %1454 = vmatpush1.msra.mxu0 0.0
  %1455 = vmatprep.subr.mxu0 0.0
  %1456 = vmatpush1.msra.mxu0 0.0
  %1457 = vmatprep.subr.mxu0 0.0
  %1458 = vmatpush1.msra.mxu0 0.0
  %1459 = vmatprep.subr.mxu0 0.0
  %1460 = vmatpush1.msra.mxu0 0.0
  %1461 = vmatprep.subr.mxu0 0.0
  %1462 = vmatpush1.msra.mxu0 0.0
  %1463 = vmatprep.subr.mxu0 0.0
  %1464 = vmatpush1.msra.mxu0 0.0
  %1465 = vmatprep.subr.mxu0 0.0
  %1466 = vmatpush1.msra.mxu0 0.0
  %1467 = vmatprep.subr.mxu0 0.0
  %1468 = vmatpush1.msra.mxu0 0.0
  %1469 = vmatprep.mubr.f32.mxu0 0.0
  %1470 = vmatmul.mubr.f32.gmra.mrb[0].mxu0 %v1261
  %v1471 = vpop.f32.mrb[0].mxu0
  %v1472 = vadd.f32 0.0, %v1471
  %v1473 = vpop.f32.mrb[0].mxu0
  %v1474 = vadd.f32 0.0, %v1473
  %1475 = vdwg.mxu0
  %v1476 = vadd.f32 %v1229, %v1330
  %v1477 = vadd.f32 %v1230, %v1332
  %v1478 = vadd.f32 %v1231, %v1401
  %v1479 = vadd.f32 %v1232, %v1403
  %v1480 = vadd.f32 %v1233, %v1472
  %v1481 = vadd.f32 %v1234, %v1474
  %1482 = vrot.lane.b32.xlu0 %v23, 80
  %v1483 = vpop.permute.xlu0 %1482
  %1484 = vrot.lane.b32.xlu0 %v24, 92
  %v1485 = vpop.permute.xlu0 %1484
  %1486 = vrot.lane.b32.xlu0 %v25, 92
  %v1487 = vpop.permute.xlu0 %1486
  %1488 = vrot.lane.b32.xlu0 %v26, 92
  %v1489 = vpop.permute.xlu0 %1488
  %1490 = vrot.lane.b32.xlu0 %v27, 92
  %v1491 = vpop.permute.xlu0 %1490
  %1492 = vrot.lane.b32.xlu0 %v28, 92
  %v1493 = vpop.permute.xlu0 %1492
  %1494 = vrot.lane.b32.xlu0 %v29, 92
  %v1495 = vpop.permute.xlu0 %1494
  %vm1496 = vcmask 752640
  %v1497 = vsel %vm1496, %v1485, %v1487
  %v1498 = vsel %vm1496, %v1487, %v1489
  %v1499 = vsel %vm1496, %v1489, %v1491
  %v1500 = vsel %vm1496, %v1491, %v1493
  %v1501 = vsel %vm1496, %v1493, %v1495
  %v1508 = vsel %vm63, %v1483, 0
  %1510 = vmatprep.subr.mxu0 %v1498
  %1511 = vmatpush1.msra.mxu0 %v1497
  %1512 = vmatprep.subr.mxu0 0.0
  %1513 = vmatpush1.msra.mxu0 0.0
  %1514 = vmatprep.subr.mxu0 0.0
  %1515 = vmatpush1.msra.mxu0 0.0
  %1516 = vmatprep.subr.mxu0 0.0
  %1517 = vmatpush1.msra.mxu0 0.0
  %1518 = vmatprep.subr.mxu0 0.0
  %1519 = vmatpush1.msra.mxu0 0.0
  %1520 = vmatprep.subr.mxu0 0.0
  %1521 = vmatpush1.msra.mxu0 0.0
  %1522 = vmatprep.subr.mxu0 0.0
  %1523 = vmatpush1.msra.mxu0 0.0
  %1524 = vmatprep.subr.mxu0 0.0
  %1525 = vmatpush1.msra.mxu0 0.0
  %1526 = vmatprep.subr.mxu0 0.0
  %1527 = vmatpush1.msra.mxu0 0.0
  %1528 = vmatprep.subr.mxu0 0.0
  %1529 = vmatpush1.msra.mxu0 0.0
  %1530 = vmatprep.subr.mxu0 0.0
  %1531 = vmatpush1.msra.mxu0 0.0
  %1532 = vmatprep.subr.mxu0 0.0
  %1533 = vmatpush1.msra.mxu0 0.0
  %1534 = vmatprep.subr.mxu0 0.0
  %1535 = vmatpush1.msra.mxu0 0.0
  %1536 = vmatprep.subr.mxu0 0.0
  %1537 = vmatpush1.msra.mxu0 0.0
  %1538 = vmatprep.subr.mxu0 0.0
  %1539 = vmatpush1.msra.mxu0 0.0
  %1540 = vmatprep.subr.mxu0 0.0
  %1541 = vmatpush1.msra.mxu0 0.0
  %1542 = vmatprep.subr.mxu0 0.0
  %1543 = vmatpush1.msra.mxu0 0.0
  %1544 = vmatprep.subr.mxu0 0.0
  %1545 = vmatpush1.msra.mxu0 0.0
  %1546 = vmatprep.subr.mxu0 0.0
  %1547 = vmatpush1.msra.mxu0 0.0
  %1548 = vmatprep.subr.mxu0 0.0
  %1549 = vmatpush1.msra.mxu0 0.0
  %1550 = vmatprep.subr.mxu0 0.0
  %1551 = vmatpush1.msra.mxu0 0.0
  %1552 = vmatprep.subr.mxu0 0.0
  %1553 = vmatpush1.msra.mxu0 0.0
  %1554 = vmatprep.subr.mxu0 0.0
  %1555 = vmatpush1.msra.mxu0 0.0
  %1556 = vmatprep.subr.mxu0 0.0
  %1557 = vmatpush1.msra.mxu0 0.0
  %1558 = vmatprep.subr.mxu0 0.0
  %1559 = vmatpush1.msra.mxu0 0.0
  %1560 = vmatprep.subr.mxu0 0.0
  %1561 = vmatpush1.msra.mxu0 0.0
  %1562 = vmatprep.subr.mxu0 0.0
  %1563 = vmatpush1.msra.mxu0 0.0
  %1564 = vmatprep.subr.mxu0 0.0
  %1565 = vmatpush1.msra.mxu0 0.0
  %1566 = vmatprep.subr.mxu0 0.0
  %1567 = vmatpush1.msra.mxu0 0.0
  %1568 = vmatprep.subr.mxu0 0.0
  %1569 = vmatpush1.msra.mxu0 0.0
  %1570 = vmatprep.subr.mxu0 0.0
  %1571 = vmatpush1.msra.mxu0 0.0
  %1572 = vmatprep.subr.mxu0 0.0
  %1573 = vmatpush1.msra.mxu0 0.0
  %1574 = vmatprep.mubr.f32.mxu0 0.0
  %1575 = vmatmul.mubr.f32.gmra.mrb[0].mxu0 %v1508
  %v1576 = vpop.f32.mrb[0].mxu0
  %v1577 = vadd.f32 0.0, %v1576
  %v1578 = vpop.f32.mrb[0].mxu0
  %v1579 = vadd.f32 0.0, %v1578
  %1580 = vdwg.mxu0
  %1581 = vmatprep.subr.mxu0 %v1500
  %1582 = vmatpush1.msra.mxu0 %v1499
  %1583 = vmatprep.subr.mxu0 0.0
  %1584 = vmatpush1.msra.mxu0 0.0
  %1585 = vmatprep.subr.mxu0 0.0
  %1586 = vmatpush1.msra.mxu0 0.0
  %1587 = vmatprep.subr.mxu0 0.0
  %1588 = vmatpush1.msra.mxu0 0.0
  %1589 = vmatprep.subr.mxu0 0.0
  %1590 = vmatpush1.msra.mxu0 0.0
  %1591 = vmatprep.subr.mxu0 0.0
  %1592 = vmatpush1.msra.mxu0 0.0
  %1593 = vmatprep.subr.mxu0 0.0
  %1594 = vmatpush1.msra.mxu0 0.0
  %1595 = vmatprep.subr.mxu0 0.0
  %1596 = vmatpush1.msra.mxu0 0.0
  %1597 = vmatprep.subr.mxu0 0.0
  %1598 = vmatpush1.msra.mxu0 0.0
  %1599 = vmatprep.subr.mxu0 0.0
  %1600 = vmatpush1.msra.mxu0 0.0
  %1601 = vmatprep.subr.mxu0 0.0
  %1602 = vmatpush1.msra.mxu0 0.0
  %1603 = vmatprep.subr.mxu0 0.0
  %1604 = vmatpush1.msra.mxu0 0.0
  %1605 = vmatprep.subr.mxu0 0.0
  %1606 = vmatpush1.msra.mxu0 0.0
  %1607 = vmatprep.subr.mxu0 0.0
  %1608 = vmatpush1.msra.mxu0 0.0
  %1609 = vmatprep.subr.mxu0 0.0
  %1610 = vmatpush1.msra.mxu0 0.0
  %1611 = vmatprep.subr.mxu0 0.0
  %1612 = vmatpush1.msra.mxu0 0.0
  %1613 = vmatprep.subr.mxu0 0.0
  %1614 = vmatpush1.msra.mxu0 0.0
  %1615 = vmatprep.subr.mxu0 0.0
  %1616 = vmatpush1.msra.mxu0 0.0
  %1617 = vmatprep.subr.mxu0 0.0
  %1618 = vmatpush1.msra.mxu0 0.0
  %1619 = vmatprep.subr.mxu0 0.0
  %1620 = vmatpush1.msra.mxu0 0.0
  %1621 = vmatprep.subr.mxu0 0.0
  %1622 = vmatpush1.msra.mxu0 0.0
  %1623 = vmatprep.subr.mxu0 0.0
  %1624 = vmatpush1.msra.mxu0 0.0
  %1625 = vmatprep.subr.mxu0 0.0
  %1626 = vmatpush1.msra.mxu0 0.0
  %1627 = vmatprep.subr.mxu0 0.0
  %1628 = vmatpush1.msra.mxu0 0.0
  %1629 = vmatprep.subr.mxu0 0.0
  %1630 = vmatpush1.msra.mxu0 0.0
  %1631 = vmatprep.subr.mxu0 0.0
  %1632 = vmatpush1.msra.mxu0 0.0
  %1633 = vmatprep.subr.mxu0 0.0
  %1634 = vmatpush1.msra.mxu0 0.0
  %1635 = vmatprep.subr.mxu0 0.0
  %1636 = vmatpush1.msra.mxu0 0.0
  %1637 = vmatprep.subr.mxu0 0.0
  %1638 = vmatpush1.msra.mxu0 0.0
  %1639 = vmatprep.subr.mxu0 0.0
  %1640 = vmatpush1.msra.mxu0 0.0
  %1641 = vmatprep.subr.mxu0 0.0
  %1642 = vmatpush1.msra.mxu0 0.0
  %1643 = vmatprep.subr.mxu0 0.0
  %1644 = vmatpush1.msra.mxu0 0.0
  %1645 = vmatprep.mubr.f32.mxu0 0.0
  %1646 = vmatmul.mubr.f32.gmra.mrb[0].mxu0 %v1508
  %v1647 = vpop.f32.mrb[0].mxu0
  %v1648 = vadd.f32 0.0, %v1647
  %v1649 = vpop.f32.mrb[0].mxu0
  %v1650 = vadd.f32 0.0, %v1649
  %1651 = vdwg.mxu0
  %1652 = vmatprep.subr.mxu0 %v1495
  %1653 = vmatpush1.msra.mxu0 %v1501
  %1654 = vmatprep.subr.mxu0 0.0
  %1655 = vmatpush1.msra.mxu0 0.0
  %1656 = vmatprep.subr.mxu0 0.0
  %1657 = vmatpush1.msra.mxu0 0.0
  %1658 = vmatprep.subr.mxu0 0.0
  %1659 = vmatpush1.msra.mxu0 0.0
  %1660 = vmatprep.subr.mxu0 0.0
  %1661 = vmatpush1.msra.mxu0 0.0
  %1662 = vmatprep.subr.mxu0 0.0
  %1663 = vmatpush1.msra.mxu0 0.0
  %1664 = vmatprep.subr.mxu0 0.0
  %1665 = vmatpush1.msra.mxu0 0.0
  %1666 = vmatprep.subr.mxu0 0.0
  %1667 = vmatpush1.msra.mxu0 0.0
  %1668 = vmatprep.subr.mxu0 0.0
  %1669 = vmatpush1.msra.mxu0 0.0
  %1670 = vmatprep.subr.mxu0 0.0
  %1671 = vmatpush1.msra.mxu0 0.0
  %1672 = vmatprep.subr.mxu0 0.0
  %1673 = vmatpush1.msra.mxu0 0.0
  %1674 = vmatprep.subr.mxu0 0.0
  %1675 = vmatpush1.msra.mxu0 0.0
  %1676 = vmatprep.subr.mxu0 0.0
  %1677 = vmatpush1.msra.mxu0 0.0
  %1678 = vmatprep.subr.mxu0 0.0
  %1679 = vmatpush1.msra.mxu0 0.0
  %1680 = vmatprep.subr.mxu0 0.0
  %1681 = vmatpush1.msra.mxu0 0.0
  %1682 = vmatprep.subr.mxu0 0.0
  %1683 = vmatpush1.msra.mxu0 0.0
  %1684 = vmatprep.subr.mxu0 0.0
  %1685 = vmatpush1.msra.mxu0 0.0
  %1686 = vmatprep.subr.mxu0 0.0
  %1687 = vmatpush1.msra.mxu0 0.0
  %1688 = vmatprep.subr.mxu0 0.0
  %1689 = vmatpush1.msra.mxu0 0.0
  %1690 = vmatprep.subr.mxu0 0.0
  %1691 = vmatpush1.msra.mxu0 0.0
  %1692 = vmatprep.subr.mxu0 0.0
  %1693 = vmatpush1.msra.mxu0 0.0
  %1694 = vmatprep.subr.mxu0 0.0
  %1695 = vmatpush1.msra.mxu0 0.0
  %1696 = vmatprep.subr.mxu0 0.0
  %1697 = vmatpush1.msra.mxu0 0.0
  %1698 = vmatprep.subr.mxu0 0.0
  %1699 = vmatpush1.msra.mxu0 0.0
  %1700 = vmatprep.subr.mxu0 0.0
  %1701 = vmatpush1.msra.mxu0 0.0
  %1702 = vmatprep.subr.mxu0 0.0
  %1703 = vmatpush1.msra.mxu0 0.0
  %1704 = vmatprep.subr.mxu0 0.0
  %1705 = vmatpush1.msra.mxu0 0.0
  %1706 = vmatprep.subr.mxu0 0.0
  %1707 = vmatpush1.msra.mxu0 0.0
  %1708 = vmatprep.subr.mxu0 0.0
  %1709 = vmatpush1.msra.mxu0 0.0
  %1710 = vmatprep.subr.mxu0 0.0
  %1711 = vmatpush1.msra.mxu0 0.0
  %1712 = vmatprep.subr.mxu0 0.0
  %1713 = vmatpush1.msra.mxu0 0.0
  %1714 = vmatprep.subr.mxu0 0.0
  %1715 = vmatpush1.msra.mxu0 0.0
  %1716 = vmatprep.mubr.f32.mxu0 0.0
  %1717 = vmatmul.mubr.f32.gmra.mrb[0].mxu0 %v1508
  %v1718 = vpop.f32.mrb[0].mxu0
  %v1719 = vadd.f32 0.0, %v1718
  %v1720 = vpop.f32.mrb[0].mxu0
  %v1721 = vadd.f32 0.0, %v1720
  %1722 = vdwg.mxu0
  %v1723 = vadd.f32 %v1476, %v1577
  %v1724 = vadd.f32 %v1477, %v1579
  %v1725 = vadd.f32 %v1478, %v1648
  %v1726 = vadd.f32 %v1479, %v1650
  %v1727 = vadd.f32 %v1480, %v1719
  %v1728 = vadd.f32 %v1481, %v1721
  %1729 = vrot.lane.b32.xlu0 %v23, 72
  %v1730 = vpop.permute.xlu0 %1729
  %1731 = vrot.lane.b32.xlu0 %v24, 91
  %v1732 = vpop.permute.xlu0 %1731
  %1733 = vrot.lane.b32.xlu0 %v25, 91
  %v1734 = vpop.permute.xlu0 %1733
  %1735 = vrot.lane.b32.xlu0 %v26, 91
  %v1736 = vpop.permute.xlu0 %1735
  %1737 = vrot.lane.b32.xlu0 %v27, 91
  %v1738 = vpop.permute.xlu0 %1737
  %1739 = vrot.lane.b32.xlu0 %v28, 91
  %v1740 = vpop.permute.xlu0 %1739
  %1741 = vrot.lane.b32.xlu0 %v29, 91
  %v1742 = vpop.permute.xlu0 %1741
  %vm1743 = vcmask 744448
  %v1744 = vsel %vm1743, %v1732, %v1734
  %v1745 = vsel %vm1743, %v1734, %v1736
  %v1746 = vsel %vm1743, %v1736, %v1738
  %v1747 = vsel %vm1743, %v1738, %v1740
  %v1748 = vsel %vm1743, %v1740, %v1742
  %v1755 = vsel %vm63, %v1730, 0
  %1757 = vmatprep.subr.mxu0 %v1745
  %1758 = vmatpush1.msra.mxu0 %v1744
  %1759 = vmatprep.subr.mxu0 0.0
  %1760 = vmatpush1.msra.mxu0 0.0
  %1761 = vmatprep.subr.mxu0 0.0
  %1762 = vmatpush1.msra.mxu0 0.0
  %1763 = vmatprep.subr.mxu0 0.0
  %1764 = vmatpush1.msra.mxu0 0.0
  %1765 = vmatprep.subr.mxu0 0.0
  %1766 = vmatpush1.msra.mxu0 0.0
  %1767 = vmatprep.subr.mxu0 0.0
  %1768 = vmatpush1.msra.mxu0 0.0
  %1769 = vmatprep.subr.mxu0 0.0
  %1770 = vmatpush1.msra.mxu0 0.0
  %1771 = vmatprep.subr.mxu0 0.0
  %1772 = vmatpush1.msra.mxu0 0.0
  %1773 = vmatprep.subr.mxu0 0.0
  %1774 = vmatpush1.msra.mxu0 0.0
  %1775 = vmatprep.subr.mxu0 0.0
  %1776 = vmatpush1.msra.mxu0 0.0
  %1777 = vmatprep.subr.mxu0 0.0
  %1778 = vmatpush1.msra.mxu0 0.0
  %1779 = vmatprep.subr.mxu0 0.0
  %1780 = vmatpush1.msra.mxu0 0.0
  %1781 = vmatprep.subr.mxu0 0.0
  %1782 = vmatpush1.msra.mxu0 0.0
  %1783 = vmatprep.subr.mxu0 0.0
  %1784 = vmatpush1.msra.mxu0 0.0
  %1785 = vmatprep.subr.mxu0 0.0
  %1786 = vmatpush1.msra.mxu0 0.0
  %1787 = vmatprep.subr.mxu0 0.0
  %1788 = vmatpush1.msra.mxu0 0.0
  %1789 = vmatprep.subr.mxu0 0.0
  %1790 = vmatpush1.msra.mxu0 0.0
  %1791 = vmatprep.subr.mxu0 0.0
  %1792 = vmatpush1.msra.mxu0 0.0
  %1793 = vmatprep.subr.mxu0 0.0
  %1794 = vmatpush1.msra.mxu0 0.0
  %1795 = vmatprep.subr.mxu0 0.0
  %1796 = vmatpush1.msra.mxu0 0.0
  %1797 = vmatprep.subr.mxu0 0.0
  %1798 = vmatpush1.msra.mxu0 0.0
  %1799 = vmatprep.subr.mxu0 0.0
  %1800 = vmatpush1.msra.mxu0 0.0
  %1801 = vmatprep.subr.mxu0 0.0
  %1802 = vmatpush1.msra.mxu0 0.0
  %1803 = vmatprep.subr.mxu0 0.0
  %1804 = vmatpush1.msra.mxu0 0.0
  %1805 = vmatprep.subr.mxu0 0.0
  %1806 = vmatpush1.msra.mxu0 0.0
  %1807 = vmatprep.subr.mxu0 0.0
  %1808 = vmatpush1.msra.mxu0 0.0
  %1809 = vmatprep.subr.mxu0 0.0
  %1810 = vmatpush1.msra.mxu0 0.0
  %1811 = vmatprep.subr.mxu0 0.0
  %1812 = vmatpush1.msra.mxu0 0.0
  %1813 = vmatprep.subr.mxu0 0.0
  %1814 = vmatpush1.msra.mxu0 0.0
  %1815 = vmatprep.subr.mxu0 0.0
  %1816 = vmatpush1.msra.mxu0 0.0
  %1817 = vmatprep.subr.mxu0 0.0
  %1818 = vmatpush1.msra.mxu0 0.0
  %1819 = vmatprep.subr.mxu0 0.0
  %1820 = vmatpush1.msra.mxu0 0.0
  %1821 = vmatprep.mubr.f32.mxu0 0.0
  %1822 = vmatmul.mubr.f32.gmra.mrb[0].mxu0 %v1755
  %v1823 = vpop.f32.mrb[0].mxu0
  %v1824 = vadd.f32 0.0, %v1823
  %v1825 = vpop.f32.mrb[0].mxu0
  %v1826 = vadd.f32 0.0, %v1825
  %1827 = vdwg.mxu0
  %1828 = vmatprep.subr.mxu0 %v1747
  %1829 = vmatpush1.msra.mxu0 %v1746
  %1830 = vmatprep.subr.mxu0 0.0
  %1831 = vmatpush1.msra.mxu0 0.0
  %1832 = vmatprep.subr.mxu0 0.0
  %1833 = vmatpush1.msra.mxu0 0.0
  %1834 = vmatprep.subr.mxu0 0.0
  %1835 = vmatpush1.msra.mxu0 0.0
  %1836 = vmatprep.subr.mxu0 0.0
  %1837 = vmatpush1.msra.mxu0 0.0
  %1838 = vmatprep.subr.mxu0 0.0
  %1839 = vmatpush1.msra.mxu0 0.0
  %1840 = vmatprep.subr.mxu0 0.0
  %1841 = vmatpush1.msra.mxu0 0.0
  %1842 = vmatprep.subr.mxu0 0.0
  %1843 = vmatpush1.msra.mxu0 0.0
  %1844 = vmatprep.subr.mxu0 0.0
  %1845 = vmatpush1.msra.mxu0 0.0
  %1846 = vmatprep.subr.mxu0 0.0
  %1847 = vmatpush1.msra.mxu0 0.0
  %1848 = vmatprep.subr.mxu0 0.0
  %1849 = vmatpush1.msra.mxu0 0.0
  %1850 = vmatprep.subr.mxu0 0.0
  %1851 = vmatpush1.msra.mxu0 0.0
  %1852 = vmatprep.subr.mxu0 0.0
  %1853 = vmatpush1.msra.mxu0 0.0
  %1854 = vmatprep.subr.mxu0 0.0
  %1855 = vmatpush1.msra.mxu0 0.0
  %1856 = vmatprep.subr.mxu0 0.0
  %1857 = vmatpush1.msra.mxu0 0.0
  %1858 = vmatprep.subr.mxu0 0.0
  %1859 = vmatpush1.msra.mxu0 0.0
  %1860 = vmatprep.subr.mxu0 0.0
  %1861 = vmatpush1.msra.mxu0 0.0
  %1862 = vmatprep.subr.mxu0 0.0
  %1863 = vmatpush1.msra.mxu0 0.0
  %1864 = vmatprep.subr.mxu0 0.0
  %1865 = vmatpush1.msra.mxu0 0.0
  %1866 = vmatprep.subr.mxu0 0.0
  %1867 = vmatpush1.msra.mxu0 0.0
  %1868 = vmatprep.subr.mxu0 0.0
  %1869 = vmatpush1.msra.mxu0 0.0
  %1870 = vmatprep.subr.mxu0 0.0
  %1871 = vmatpush1.msra.mxu0 0.0
  %1872 = vmatprep.subr.mxu0 0.0
  %1873 = vmatpush1.msra.mxu0 0.0
  %1874 = vmatprep.subr.mxu0 0.0
  %1875 = vmatpush1.msra.mxu0 0.0
  %1876 = vmatprep.subr.mxu0 0.0
  %1877 = vmatpush1.msra.mxu0 0.0
  %1878 = vmatprep.subr.mxu0 0.0
  %1879 = vmatpush1.msra.mxu0 0.0
  %1880 = vmatprep.subr.mxu0 0.0
  %1881 = vmatpush1.msra.mxu0 0.0
  %1882 = vmatprep.subr.mxu0 0.0
  %1883 = vmatpush1.msra.mxu0 0.0
  %1884 = vmatprep.subr.mxu0 0.0
  %1885 = vmatpush1.msra.mxu0 0.0
  %1886 = vmatprep.subr.mxu0 0.0
  %1887 = vmatpush1.msra.mxu0 0.0
  %1888 = vmatprep.subr.mxu0 0.0
  %1889 = vmatpush1.msra.mxu0 0.0
  %1890 = vmatprep.subr.mxu0 0.0
  %1891 = vmatpush1.msra.mxu0 0.0
  %1892 = vmatprep.mubr.f32.mxu0 0.0
  %1893 = vmatmul.mubr.f32.gmra.mrb[0].mxu0 %v1755
  %v1894 = vpop.f32.mrb[0].mxu0
  %v1895 = vadd.f32 0.0, %v1894
  %v1896 = vpop.f32.mrb[0].mxu0
  %v1897 = vadd.f32 0.0, %v1896
  %1898 = vdwg.mxu0
  %1899 = vmatprep.subr.mxu0 %v1742
  %1900 = vmatpush1.msra.mxu0 %v1748
  %1901 = vmatprep.subr.mxu0 0.0
  %1902 = vmatpush1.msra.mxu0 0.0
  %1903 = vmatprep.subr.mxu0 0.0
  %1904 = vmatpush1.msra.mxu0 0.0
  %1905 = vmatprep.subr.mxu0 0.0
  %1906 = vmatpush1.msra.mxu0 0.0
  %1907 = vmatprep.subr.mxu0 0.0
  %1908 = vmatpush1.msra.mxu0 0.0
  %1909 = vmatprep.subr.mxu0 0.0
  %1910 = vmatpush1.msra.mxu0 0.0
  %1911 = vmatprep.subr.mxu0 0.0
  %1912 = vmatpush1.msra.mxu0 0.0
  %1913 = vmatprep.subr.mxu0 0.0
  %1914 = vmatpush1.msra.mxu0 0.0
  %1915 = vmatprep.subr.mxu0 0.0
  %1916 = vmatpush1.msra.mxu0 0.0
  %1917 = vmatprep.subr.mxu0 0.0
  %1918 = vmatpush1.msra.mxu0 0.0
  %1919 = vmatprep.subr.mxu0 0.0
  %1920 = vmatpush1.msra.mxu0 0.0
  %1921 = vmatprep.subr.mxu0 0.0
  %1922 = vmatpush1.msra.mxu0 0.0
  %1923 = vmatprep.subr.mxu0 0.0
  %1924 = vmatpush1.msra.mxu0 0.0
  %1925 = vmatprep.subr.mxu0 0.0
  %1926 = vmatpush1.msra.mxu0 0.0
  %1927 = vmatprep.subr.mxu0 0.0
  %1928 = vmatpush1.msra.mxu0 0.0
  %1929 = vmatprep.subr.mxu0 0.0
  %1930 = vmatpush1.msra.mxu0 0.0
  %1931 = vmatprep.subr.mxu0 0.0
  %1932 = vmatpush1.msra.mxu0 0.0
  %1933 = vmatprep.subr.mxu0 0.0
  %1934 = vmatpush1.msra.mxu0 0.0
  %1935 = vmatprep.subr.mxu0 0.0
  %1936 = vmatpush1.msra.mxu0 0.0
  %1937 = vmatprep.subr.mxu0 0.0
  %1938 = vmatpush1.msra.mxu0 0.0
  %1939 = vmatprep.subr.mxu0 0.0
  %1940 = vmatpush1.msra.mxu0 0.0
  %1941 = vmatprep.subr.mxu0 0.0
  %1942 = vmatpush1.msra.mxu0 0.0
  %1943 = vmatprep.subr.mxu0 0.0
  %1944 = vmatpush1.msra.mxu0 0.0
  %1945 = vmatprep.subr.mxu0 0.0
  %1946 = vmatpush1.msra.mxu0 0.0
  %1947 = vmatprep.subr.mxu0 0.0
  %1948 = vmatpush1.msra.mxu0 0.0
  %1949 = vmatprep.subr.mxu0 0.0
  %1950 = vmatpush1.msra.mxu0 0.0
  %1951 = vmatprep.subr.mxu0 0.0
  %1952 = vmatpush1.msra.mxu0 0.0
  %1953 = vmatprep.subr.mxu0 0.0
  %1954 = vmatpush1.msra.mxu0 0.0
  %1955 = vmatprep.subr.mxu0 0.0
  %1956 = vmatpush1.msra.mxu0 0.0
  %1957 = vmatprep.subr.mxu0 0.0
  %1958 = vmatpush1.msra.mxu0 0.0
  %1959 = vmatprep.subr.mxu0 0.0
  %1960 = vmatpush1.msra.mxu0 0.0
  %1961 = vmatprep.subr.mxu0 0.0
  %1962 = vmatpush1.msra.mxu0 0.0
  %1963 = vmatprep.mubr.f32.mxu0 0.0
  %1964 = vmatmul.mubr.f32.gmra.mrb[0].mxu0 %v1755
  %v1965 = vpop.f32.mrb[0].mxu0
  %v1966 = vadd.f32 0.0, %v1965
  %v1967 = vpop.f32.mrb[0].mxu0
  %v1968 = vadd.f32 0.0, %v1967
  %1969 = vdwg.mxu0
  %v1970 = vadd.f32 %v1723, %v1824
  %v1971 = vadd.f32 %v1724, %v1826
  %v1972 = vadd.f32 %v1725, %v1895
  %v1973 = vadd.f32 %v1726, %v1897
  %v1974 = vadd.f32 %v1727, %v1966
  %v1975 = vadd.f32 %v1728, %v1968
  %1976 = vrot.lane.b32.xlu0 %v23, 64
  %v1977 = vpop.permute.xlu0 %1976
  %1978 = vrot.lane.b32.xlu0 %v24, 90
  %v1979 = vpop.permute.xlu0 %1978
  %1980 = vrot.lane.b32.xlu0 %v25, 90
  %v1981 = vpop.permute.xlu0 %1980
  %1982 = vrot.lane.b32.xlu0 %v26, 90
  %v1983 = vpop.permute.xlu0 %1982
  %1984 = vrot.lane.b32.xlu0 %v27, 90
  %v1985 = vpop.permute.xlu0 %1984
  %1986 = vrot.lane.b32.xlu0 %v28, 90
  %v1987 = vpop.permute.xlu0 %1986
  %1988 = vrot.lane.b32.xlu0 %v29, 90
  %v1989 = vpop.permute.xlu0 %1988
  %vm1990 = vcmask 736256
  %v1991 = vsel %vm1990, %v1979, %v1981
  %v1992 = vsel %vm1990, %v1981, %v1983
  %v1993 = vsel %vm1990, %v1983, %v1985
  %v1994 = vsel %vm1990, %v1985, %v1987
  %v1995 = vsel %vm1990, %v1987, %v1989
  %v2002 = vsel %vm63, %v1977, 0
  %2004 = vmatprep.subr.mxu0 %v1992
  %2005 = vmatpush1.msra.mxu0 %v1991
  %2006 = vmatprep.subr.mxu0 0.0
  %2007 = vmatpush1.msra.mxu0 0.0
  %2008 = vmatprep.subr.mxu0 0.0
  %2009 = vmatpush1.msra.mxu0 0.0
  %2010 = vmatprep.subr.mxu0 0.0
  %2011 = vmatpush1.msra.mxu0 0.0
  %2012 = vmatprep.subr.mxu0 0.0
  %2013 = vmatpush1.msra.mxu0 0.0
  %2014 = vmatprep.subr.mxu0 0.0
  %2015 = vmatpush1.msra.mxu0 0.0
  %2016 = vmatprep.subr.mxu0 0.0
  %2017 = vmatpush1.msra.mxu0 0.0
  %2018 = vmatprep.subr.mxu0 0.0
  %2019 = vmatpush1.msra.mxu0 0.0
  %2020 = vmatprep.subr.mxu0 0.0
  %2021 = vmatpush1.msra.mxu0 0.0
  %2022 = vmatprep.subr.mxu0 0.0
  %2023 = vmatpush1.msra.mxu0 0.0
  %2024 = vmatprep.subr.mxu0 0.0
  %2025 = vmatpush1.msra.mxu0 0.0
  %2026 = vmatprep.subr.mxu0 0.0
  %2027 = vmatpush1.msra.mxu0 0.0
  %2028 = vmatprep.subr.mxu0 0.0
  %2029 = vmatpush1.msra.mxu0 0.0
  %2030 = vmatprep.subr.mxu0 0.0
  %2031 = vmatpush1.msra.mxu0 0.0
  %2032 = vmatprep.subr.mxu0 0.0
  %2033 = vmatpush1.msra.mxu0 0.0
  %2034 = vmatprep.subr.mxu0 0.0
  %2035 = vmatpush1.msra.mxu0 0.0
  %2036 = vmatprep.subr.mxu0 0.0
  %2037 = vmatpush1.msra.mxu0 0.0
  %2038 = vmatprep.subr.mxu0 0.0
  %2039 = vmatpush1.msra.mxu0 0.0
  %2040 = vmatprep.subr.mxu0 0.0
  %2041 = vmatpush1.msra.mxu0 0.0
  %2042 = vmatprep.subr.mxu0 0.0
  %2043 = vmatpush1.msra.mxu0 0.0
  %2044 = vmatprep.subr.mxu0 0.0
  %2045 = vmatpush1.msra.mxu0 0.0
  %2046 = vmatprep.subr.mxu0 0.0
  %2047 = vmatpush1.msra.mxu0 0.0
  %2048 = vmatprep.subr.mxu0 0.0
  %2049 = vmatpush1.msra.mxu0 0.0
  %2050 = vmatprep.subr.mxu0 0.0
  %2051 = vmatpush1.msra.mxu0 0.0
  %2052 = vmatprep.subr.mxu0 0.0
  %2053 = vmatpush1.msra.mxu0 0.0
  %2054 = vmatprep.subr.mxu0 0.0
  %2055 = vmatpush1.msra.mxu0 0.0
  %2056 = vmatprep.subr.mxu0 0.0
  %2057 = vmatpush1.msra.mxu0 0.0
  %2058 = vmatprep.subr.mxu0 0.0
  %2059 = vmatpush1.msra.mxu0 0.0
  %2060 = vmatprep.subr.mxu0 0.0
  %2061 = vmatpush1.msra.mxu0 0.0
  %2062 = vmatprep.subr.mxu0 0.0
  %2063 = vmatpush1.msra.mxu0 0.0
  %2064 = vmatprep.subr.mxu0 0.0
  %2065 = vmatpush1.msra.mxu0 0.0
  %2066 = vmatprep.subr.mxu0 0.0
  %2067 = vmatpush1.msra.mxu0 0.0
  %2068 = vmatprep.mubr.f32.mxu0 0.0
  %2069 = vmatmul.mubr.f32.gmra.mrb[0].mxu0 %v2002
  %v2070 = vpop.f32.mrb[0].mxu0
  %v2071 = vadd.f32 0.0, %v2070
  %v2072 = vpop.f32.mrb[0].mxu0
  %v2073 = vadd.f32 0.0, %v2072
  %2074 = vdwg.mxu0
  %2075 = vmatprep.subr.mxu0 %v1994
  %2076 = vmatpush1.msra.mxu0 %v1993
  %2077 = vmatprep.subr.mxu0 0.0
  %2078 = vmatpush1.msra.mxu0 0.0
  %2079 = vmatprep.subr.mxu0 0.0
  %2080 = vmatpush1.msra.mxu0 0.0
  %2081 = vmatprep.subr.mxu0 0.0
  %2082 = vmatpush1.msra.mxu0 0.0
  %2083 = vmatprep.subr.mxu0 0.0
  %2084 = vmatpush1.msra.mxu0 0.0
  %2085 = vmatprep.subr.mxu0 0.0
  %2086 = vmatpush1.msra.mxu0 0.0
  %2087 = vmatprep.subr.mxu0 0.0
  %2088 = vmatpush1.msra.mxu0 0.0
  %2089 = vmatprep.subr.mxu0 0.0
  %2090 = vmatpush1.msra.mxu0 0.0
  %2091 = vmatprep.subr.mxu0 0.0
  %2092 = vmatpush1.msra.mxu0 0.0
  %2093 = vmatprep.subr.mxu0 0.0
  %2094 = vmatpush1.msra.mxu0 0.0
  %2095 = vmatprep.subr.mxu0 0.0
  %2096 = vmatpush1.msra.mxu0 0.0
  %2097 = vmatprep.subr.mxu0 0.0
  %2098 = vmatpush1.msra.mxu0 0.0
  %2099 = vmatprep.subr.mxu0 0.0
  %2100 = vmatpush1.msra.mxu0 0.0
  %2101 = vmatprep.subr.mxu0 0.0
  %2102 = vmatpush1.msra.mxu0 0.0
  %2103 = vmatprep.subr.mxu0 0.0
  %2104 = vmatpush1.msra.mxu0 0.0
  %2105 = vmatprep.subr.mxu0 0.0
  %2106 = vmatpush1.msra.mxu0 0.0
  %2107 = vmatprep.subr.mxu0 0.0
  %2108 = vmatpush1.msra.mxu0 0.0
  %2109 = vmatprep.subr.mxu0 0.0
  %2110 = vmatpush1.msra.mxu0 0.0
  %2111 = vmatprep.subr.mxu0 0.0
  %2112 = vmatpush1.msra.mxu0 0.0
  %2113 = vmatprep.subr.mxu0 0.0
  %2114 = vmatpush1.msra.mxu0 0.0
  %2115 = vmatprep.subr.mxu0 0.0
  %2116 = vmatpush1.msra.mxu0 0.0
  %2117 = vmatprep.subr.mxu0 0.0
  %2118 = vmatpush1.msra.mxu0 0.0
  %2119 = vmatprep.subr.mxu0 0.0
  %2120 = vmatpush1.msra.mxu0 0.0
  %2121 = vmatprep.subr.mxu0 0.0
  %2122 = vmatpush1.msra.mxu0 0.0
  %2123 = vmatprep.subr.mxu0 0.0
  %2124 = vmatpush1.msra.mxu0 0.0
  %2125 = vmatprep.subr.mxu0 0.0
  %2126 = vmatpush1.msra.mxu0 0.0
  %2127 = vmatprep.subr.mxu0 0.0
  %2128 = vmatpush1.msra.mxu0 0.0
  %2129 = vmatprep.subr.mxu0 0.0
  %2130 = vmatpush1.msra.mxu0 0.0
  %2131 = vmatprep.subr.mxu0 0.0
  %2132 = vmatpush1.msra.mxu0 0.0
  %2133 = vmatprep.subr.mxu0 0.0
  %2134 = vmatpush1.msra.mxu0 0.0
  %2135 = vmatprep.subr.mxu0 0.0
  %2136 = vmatpush1.msra.mxu0 0.0
  %2137 = vmatprep.subr.mxu0 0.0
  %2138 = vmatpush1.msra.mxu0 0.0
  %2139 = vmatprep.mubr.f32.mxu0 0.0
  %2140 = vmatmul.mubr.f32.gmra.mrb[0].mxu0 %v2002
  %v2141 = vpop.f32.mrb[0].mxu0
  %v2142 = vadd.f32 0.0, %v2141
  %v2143 = vpop.f32.mrb[0].mxu0
  %v2144 = vadd.f32 0.0, %v2143
  %2145 = vdwg.mxu0
  %2146 = vmatprep.subr.mxu0 %v1989
  %2147 = vmatpush1.msra.mxu0 %v1995
  %2148 = vmatprep.subr.mxu0 0.0
  %2149 = vmatpush1.msra.mxu0 0.0
  %2150 = vmatprep.subr.mxu0 0.0
  %2151 = vmatpush1.msra.mxu0 0.0
  %2152 = vmatprep.subr.mxu0 0.0
  %2153 = vmatpush1.msra.mxu0 0.0
  %2154 = vmatprep.subr.mxu0 0.0
  %2155 = vmatpush1.msra.mxu0 0.0
  %2156 = vmatprep.subr.mxu0 0.0
  %2157 = vmatpush1.msra.mxu0 0.0
  %2158 = vmatprep.subr.mxu0 0.0
  %2159 = vmatpush1.msra.mxu0 0.0
  %2160 = vmatprep.subr.mxu0 0.0
  %2161 = vmatpush1.msra.mxu0 0.0
  %2162 = vmatprep.subr.mxu0 0.0
  %2163 = vmatpush1.msra.mxu0 0.0
  %2164 = vmatprep.subr.mxu0 0.0
  %2165 = vmatpush1.msra.mxu0 0.0
  %2166 = vmatprep.subr.mxu0 0.0
  %2167 = vmatpush1.msra.mxu0 0.0
  %2168 = vmatprep.subr.mxu0 0.0
  %2169 = vmatpush1.msra.mxu0 0.0
  %2170 = vmatprep.subr.mxu0 0.0
  %2171 = vmatpush1.msra.mxu0 0.0
  %2172 = vmatprep.subr.mxu0 0.0
  %2173 = vmatpush1.msra.mxu0 0.0
  %2174 = vmatprep.subr.mxu0 0.0
  %2175 = vmatpush1.msra.mxu0 0.0
  %2176 = vmatprep.subr.mxu0 0.0
  %2177 = vmatpush1.msra.mxu0 0.0
  %2178 = vmatprep.subr.mxu0 0.0
  %2179 = vmatpush1.msra.mxu0 0.0
  %2180 = vmatprep.subr.mxu0 0.0
  %2181 = vmatpush1.msra.mxu0 0.0
  %2182 = vmatprep.subr.mxu0 0.0
  %2183 = vmatpush1.msra.mxu0 0.0
  %2184 = vmatprep.subr.mxu0 0.0
  %2185 = vmatpush1.msra.mxu0 0.0
  %2186 = vmatprep.subr.mxu0 0.0
  %2187 = vmatpush1.msra.mxu0 0.0
  %2188 = vmatprep.subr.mxu0 0.0
  %2189 = vmatpush1.msra.mxu0 0.0
  %2190 = vmatprep.subr.mxu0 0.0
  %2191 = vmatpush1.msra.mxu0 0.0
  %2192 = vmatprep.subr.mxu0 0.0
  %2193 = vmatpush1.msra.mxu0 0.0
  %2194 = vmatprep.subr.mxu0 0.0
  %2195 = vmatpush1.msra.mxu0 0.0
  %2196 = vmatprep.subr.mxu0 0.0
  %2197 = vmatpush1.msra.mxu0 0.0
  %2198 = vmatprep.subr.mxu0 0.0
  %2199 = vmatpush1.msra.mxu0 0.0
  %2200 = vmatprep.subr.mxu0 0.0
  %2201 = vmatpush1.msra.mxu0 0.0
  %2202 = vmatprep.subr.mxu0 0.0
  %2203 = vmatpush1.msra.mxu0 0.0
  %2204 = vmatprep.subr.mxu0 0.0
  %2205 = vmatpush1.msra.mxu0 0.0
  %2206 = vmatprep.subr.mxu0 0.0
  %2207 = vmatpush1.msra.mxu0 0.0
  %2208 = vmatprep.subr.mxu0 0.0
  %2209 = vmatpush1.msra.mxu0 0.0
  %2210 = vmatprep.mubr.f32.mxu0 0.0
  %2211 = vmatmul.mubr.f32.gmra.mrb[0].mxu0 %v2002
  %v2212 = vpop.f32.mrb[0].mxu0
  %v2213 = vadd.f32 0.0, %v2212
  %v2214 = vpop.f32.mrb[0].mxu0
  %v2215 = vadd.f32 0.0, %v2214
  %2216 = vdwg.mxu0
  %v2217 = vadd.f32 %v1970, %v2071
  %v2218 = vadd.f32 %v1971, %v2073
  %v2219 = vadd.f32 %v1972, %v2142
  %v2220 = vadd.f32 %v1973, %v2144
  %v2221 = vadd.f32 %v1974, %v2213
  %v2222 = vadd.f32 %v1975, %v2215
  %v2223 = vld [vmem:[%s2] sm:$0xff]
  %2225 = vset.pattern.permute.xlu0 0
  %2226 = vperm.xlu0 %2225, %v2223
  %v2227 = vpop.permute.xlu0 %2226
  %v2229 = vadd.f32 %v2217, %v2227
  %v2230 = vadd.f32 %v2218, %v2227
  %v2231 = vadd.f32 %v2219, %v2227
  %v2232 = vadd.f32 %v2220, %v2227
  %v2233 = vadd.f32 %v2221, %v2227
  %v2234 = vadd.f32 %v2222, %v2227
  %v2235 = vmax.f32 %v2229, 0.0
  %v2236 = vmax.f32 %v2230, 0.0
  %v2237 = vmax.f32 %v2231, 0.0
  %v2238 = vmax.f32 %v2232, 0.0
  %v2239 = vmax.f32 %v2233, 0.0
  %v2240 = vmax.f32 %v2234, 0.0
  %v2241 = vld [vmem:[%s5] sm:$0x3f]
  %v2243 = vlaneseq
  %v2244 = vshrl.u32 %v2243, 7
  %v2245 = vsub.s32 0, %v2244
  %v2246 = vrot.slane %v2241, %v2245
  %v2247 = vlaneseq
  %v2248 = vshrl.u32 %v2247, 7
  %v2249 = vsub.s32 1, %v2248
  %v2250 = vrot.slane %v2241, %v2249
  %v2251 = vlaneseq
  %v2252 = vshrl.u32 %v2251, 7
  %v2253 = vsub.s32 2, %v2252
  %v2254 = vrot.slane %v2241, %v2253
  %v2255 = vlaneseq
  %v2256 = vshrl.u32 %v2255, 7
  %v2257 = vsub.s32 3, %v2256
  %v2258 = vrot.slane %v2241, %v2257
  %v2259 = vlaneseq
  %v2260 = vshrl.u32 %v2259, 7
  %v2261 = vsub.s32 4, %v2260
  %v2262 = vrot.slane %v2241, %v2261
  %v2263 = vlaneseq
  %v2264 = vshrl.u32 %v2263, 7
  %v2265 = vsub.s32 5, %v2264
  %v2266 = vrot.slane %v2241, %v2265
  %v2273 = vmul.f32 %v2235, %v2246
  %v2274 = vmul.f32 %v2236, %v2250
  %v2275 = vmul.f32 %v2237, %v2254
  %v2276 = vmul.f32 %v2238, %v2258
  %v2277 = vmul.f32 %v2239, %v2262
  %v2278 = vmul.f32 %v2240, %v2266
  %2279 = vst [vmem:[#allocation2] sm:$0xff] %v2273
  %2280 = vst [vmem:[#allocation2 + $0x8] sm:$0xff] %v2274
  %2281 = vst [vmem:[#allocation2 + $0x10] sm:$0xff] %v2275
  %2282 = vst [vmem:[#allocation2 + $0x18] sm:$0xff] %v2276
  %2283 = vst [vmem:[#allocation2 + $0x20] sm:$0xff] %v2277
  %vm2284 = vcmask 375808
  %2285 = vst.msk [vmem:[#allocation2 + $0x28] sm:$0xff] %vm2284, %v2278
  %v2286 = vld [vmem:[%s3] sm:$0xff]
  %v2287 = vld [vmem:[#allocation2] sm:$0xff]
  %v2288 = vld [vmem:[#allocation2 + $0x8] sm:$0xff]
  %v2289 = vld [vmem:[#allocation2 + $0x10] sm:$0xff]
  %v2290 = vld [vmem:[#allocation2 + $0x18] sm:$0xff]
  %v2291 = vld [vmem:[#allocation2 + $0x20] sm:$0xff]
  %v2292 = vld [vmem:[#allocation2 + $0x28] sm:$0xff]
  %2294 = vrot.lane.b32.xlu0 %v2286, 120
  %v2295 = vpop.permute.xlu0 %2294
  %2302 = vrot.lane.b32.xlu0 %v2287, 127
  %v2303 = vpop.permute.xlu0 %2302
  %2304 = vrot.lane.b32.xlu0 %v2288, 127
  %v2305 = vpop.permute.xlu0 %2304
  %2306 = vrot.lane.b32.xlu0 %v2289, 127
  %v2307 = vpop.permute.xlu0 %2306
  %2308 = vrot.lane.b32.xlu0 %v2290, 127
  %v2309 = vpop.permute.xlu0 %2308
  %2310 = vrot.lane.b32.xlu0 %v2291, 127
  %v2311 = vpop.permute.xlu0 %2310
  %2312 = vrot.lane.b32.xlu0 %v2292, 127
  %v2313 = vpop.permute.xlu0 %2312
  %v2314 = vsel %vm51, %v2303, %v2305
  %v2315 = vsel %vm51, %v2305, %v2307
  %v2316 = vsel %vm51, %v2307, %v2309
  %v2317 = vsel %vm51, %v2309, %v2311
  %v2318 = vsel %vm51, %v2311, %v2313
  %v2325 = vsel %vm63, %v2295, 0
  %2327 = vmatprep.subr.mxu0 %v2315
  %2328 = vmatpush1.msra.mxu0 %v2314
  %2329 = vmatprep.subr.mxu0 0.0
  %2330 = vmatpush1.msra.mxu0 0.0
  %2331 = vmatprep.subr.mxu0 0.0
  %2332 = vmatpush1.msra.mxu0 0.0
  %2333 = vmatprep.subr.mxu0 0.0
  %2334 = vmatpush1.msra.mxu0 0.0
  %2335 = vmatprep.subr.mxu0 0.0
  %2336 = vmatpush1.msra.mxu0 0.0
  %2337 = vmatprep.subr.mxu0 0.0
  %2338 = vmatpush1.msra.mxu0 0.0
  %2339 = vmatprep.subr.mxu0 0.0
  %2340 = vmatpush1.msra.mxu0 0.0
  %2341 = vmatprep.subr.mxu0 0.0
  %2342 = vmatpush1.msra.mxu0 0.0
  %2343 = vmatprep.subr.mxu0 0.0
  %2344 = vmatpush1.msra.mxu0 0.0
  %2345 = vmatprep.subr.mxu0 0.0
  %2346 = vmatpush1.msra.mxu0 0.0
  %2347 = vmatprep.subr.mxu0 0.0
  %2348 = vmatpush1.msra.mxu0 0.0
  %2349 = vmatprep.subr.mxu0 0.0
  %2350 = vmatpush1.msra.mxu0 0.0
  %2351 = vmatprep.subr.mxu0 0.0
  %2352 = vmatpush1.msra.mxu0 0.0
  %2353 = vmatprep.subr.mxu0 0.0
  %2354 = vmatpush1.msra.mxu0 0.0
  %2355 = vmatprep.subr.mxu0 0.0
  %2356 = vmatpush1.msra.mxu0 0.0
  %2357 = vmatprep.subr.mxu0 0.0
  %2358 = vmatpush1.msra.mxu0 0.0
  %2359 = vmatprep.subr.mxu0 0.0
  %2360 = vmatpush1.msra.mxu0 0.0
  %2361 = vmatprep.subr.mxu0 0.0
  %2362 = vmatpush1.msra.mxu0 0.0
  %2363 = vmatprep.subr.mxu0 0.0
  %2364 = vmatpush1.msra.mxu0 0.0
  %2365 = vmatprep.subr.mxu0 0.0
  %2366 = vmatpush1.msra.mxu0 0.0
  %2367 = vmatprep.subr.mxu0 0.0
  %2368 = vmatpush1.msra.mxu0 0.0
  %2369 = vmatprep.subr.mxu0 0.0
  %2370 = vmatpush1.msra.mxu0 0.0
  %2371 = vmatprep.subr.mxu0 0.0
  %2372 = vmatpush1.msra.mxu0 0.0
  %2373 = vmatprep.subr.mxu0 0.0
  %2374 = vmatpush1.msra.mxu0 0.0
  %2375 = vmatprep.subr.mxu0 0.0
  %2376 = vmatpush1.msra.mxu0 0.0
  %2377 = vmatprep.subr.mxu0 0.0
  %2378 = vmatpush1.msra.mxu0 0.0
  %2379 = vmatprep.subr.mxu0 0.0
  %2380 = vmatpush1.msra.mxu0 0.0
  %2381 = vmatprep.subr.mxu0 0.0
  %2382 = vmatpush1.msra.mxu0 0.0
  %2383 = vmatprep.subr.mxu0 0.0
  %2384 = vmatpush1.msra.mxu0 0.0
  %2385 = vmatprep.subr.mxu0 0.0
  %2386 = vmatpush1.msra.mxu0 0.0
  %2387 = vmatprep.subr.mxu0 0.0
  %2388 = vmatpush1.msra.mxu0 0.0
  %2389 = vmatprep.subr.mxu0 0.0
  %2390 = vmatpush1.msra.mxu0 0.0
  %2391 = vmatprep.mubr.f32.mxu0 0.0
  %2392 = vmatmul.mubr.f32.gmra.mrb[0].mxu0 %v2325
  %v2393 = vpop.f32.mrb[0].mxu0
  %v2394 = vadd.f32 0.0, %v2393
  %v2395 = vpop.f32.mrb[0].mxu0
  %v2396 = vadd.f32 0.0, %v2395
  %2397 = vdwg.mxu0
  %2398 = vmatprep.subr.mxu0 %v2317
  %2399 = vmatpush1.msra.mxu0 %v2316
  %2400 = vmatprep.subr.mxu0 0.0
  %2401 = vmatpush1.msra.mxu0 0.0
  %2402 = vmatprep.subr.mxu0 0.0
  %2403 = vmatpush1.msra.mxu0 0.0
  %2404 = vmatprep.subr.mxu0 0.0
  %2405 = vmatpush1.msra.mxu0 0.0
  %2406 = vmatprep.subr.mxu0 0.0
  %2407 = vmatpush1.msra.mxu0 0.0
  %2408 = vmatprep.subr.mxu0 0.0
  %2409 = vmatpush1.msra.mxu0 0.0
  %2410 = vmatprep.subr.mxu0 0.0
  %2411 = vmatpush1.msra.mxu0 0.0
  %2412 = vmatprep.subr.mxu0 0.0
  %2413 = vmatpush1.msra.mxu0 0.0
  %2414 = vmatprep.subr.mxu0 0.0
  %2415 = vmatpush1.msra.mxu0 0.0
  %2416 = vmatprep.subr.mxu0 0.0
  %2417 = vmatpush1.msra.mxu0 0.0
  %2418 = vmatprep.subr.mxu0 0.0
  %2419 = vmatpush1.msra.mxu0 0.0
  %2420 = vmatprep.subr.mxu0 0.0
  %2421 = vmatpush1.msra.mxu0 0.0
  %2422 = vmatprep.subr.mxu0 0.0
  %2423 = vmatpush1.msra.mxu0 0.0
  %2424 = vmatprep.subr.mxu0 0.0
  %2425 = vmatpush1.msra.mxu0 0.0
  %2426 = vmatprep.subr.mxu0 0.0
  %2427 = vmatpush1.msra.mxu0 0.0
  %2428 = vmatprep.subr.mxu0 0.0
  %2429 = vmatpush1.msra.mxu0 0.0
  %2430 = vmatprep.subr.mxu0 0.0
  %2431 = vmatpush1.msra.mxu0 0.0
  %2432 = vmatprep.subr.mxu0 0.0
  %2433 = vmatpush1.msra.mxu0 0.0
  %2434 = vmatprep.subr.mxu0 0.0
  %2435 = vmatpush1.msra.mxu0 0.0
  %2436 = vmatprep.subr.mxu0 0.0
  %2437 = vmatpush1.msra.mxu0 0.0
  %2438 = vmatprep.subr.mxu0 0.0
  %2439 = vmatpush1.msra.mxu0 0.0
  %2440 = vmatprep.subr.mxu0 0.0
  %2441 = vmatpush1.msra.mxu0 0.0
  %2442 = vmatprep.subr.mxu0 0.0
  %2443 = vmatpush1.msra.mxu0 0.0
  %2444 = vmatprep.subr.mxu0 0.0
  %2445 = vmatpush1.msra.mxu0 0.0
  %2446 = vmatprep.subr.mxu0 0.0
  %2447 = vmatpush1.msra.mxu0 0.0
  %2448 = vmatprep.subr.mxu0 0.0
  %2449 = vmatpush1.msra.mxu0 0.0
  %2450 = vmatprep.subr.mxu0 0.0
  %2451 = vmatpush1.msra.mxu0 0.0
  %2452 = vmatprep.subr.mxu0 0.0
  %2453 = vmatpush1.msra.mxu0 0.0
  %2454 = vmatprep.subr.mxu0 0.0
  %2455 = vmatpush1.msra.mxu0 0.0
  %2456 = vmatprep.subr.mxu0 0.0
  %2457 = vmatpush1.msra.mxu0 0.0
  %2458 = vmatprep.subr.mxu0 0.0
  %2459 = vmatpush1.msra.mxu0 0.0
  %2460 = vmatprep.subr.mxu0 0.0
  %2461 = vmatpush1.msra.mxu0 0.0
  %2462 = vmatprep.mubr.f32.mxu0 0.0
  %2463 = vmatmul.mubr.f32.gmra.mrb[0].mxu0 %v2325
  %v2464 = vpop.f32.mrb[0].mxu0
  %v2465 = vadd.f32 0.0, %v2464
  %v2466 = vpop.f32.mrb[0].mxu0
  %v2467 = vadd.f32 0.0, %v2466
  %2468 = vdwg.mxu0
  %2469 = vmatprep.subr.mxu0 %v2313
  %2470 = vmatpush1.msra.mxu0 %v2318
  %2471 = vmatprep.subr.mxu0 0.0
  %2472 = vmatpush1.msra.mxu0 0.0
  %2473 = vmatprep.subr.mxu0 0.0
  %2474 = vmatpush1.msra.mxu0 0.0
  %2475 = vmatprep.subr.mxu0 0.0
  %2476 = vmatpush1.msra.mxu0 0.0
  %2477 = vmatprep.subr.mxu0 0.0
  %2478 = vmatpush1.msra.mxu0 0.0
  %2479 = vmatprep.subr.mxu0 0.0
  %2480 = vmatpush1.msra.mxu0 0.0
  %2481 = vmatprep.subr.mxu0 0.0
  %2482 = vmatpush1.msra.mxu0 0.0
  %2483 = vmatprep.subr.mxu0 0.0
  %2484 = vmatpush1.msra.mxu0 0.0
  %2485 = vmatprep.subr.mxu0 0.0
  %2486 = vmatpush1.msra.mxu0 0.0
  %2487 = vmatprep.subr.mxu0 0.0
  %2488 = vmatpush1.msra.mxu0 0.0
  %2489 = vmatprep.subr.mxu0 0.0
  %2490 = vmatpush1.msra.mxu0 0.0
  %2491 = vmatprep.subr.mxu0 0.0
  %2492 = vmatpush1.msra.mxu0 0.0
  %2493 = vmatprep.subr.mxu0 0.0
  %2494 = vmatpush1.msra.mxu0 0.0
  %2495 = vmatprep.subr.mxu0 0.0
  %2496 = vmatpush1.msra.mxu0 0.0
  %2497 = vmatprep.subr.mxu0 0.0
  %2498 = vmatpush1.msra.mxu0 0.0
  %2499 = vmatprep.subr.mxu0 0.0
  %2500 = vmatpush1.msra.mxu0 0.0
  %2501 = vmatprep.subr.mxu0 0.0
  %2502 = vmatpush1.msra.mxu0 0.0
  %2503 = vmatprep.subr.mxu0 0.0
  %2504 = vmatpush1.msra.mxu0 0.0
  %2505 = vmatprep.subr.mxu0 0.0
  %2506 = vmatpush1.msra.mxu0 0.0
  %2507 = vmatprep.subr.mxu0 0.0
  %2508 = vmatpush1.msra.mxu0 0.0
  %2509 = vmatprep.subr.mxu0 0.0
  %2510 = vmatpush1.msra.mxu0 0.0
  %2511 = vmatprep.subr.mxu0 0.0
  %2512 = vmatpush1.msra.mxu0 0.0
  %2513 = vmatprep.subr.mxu0 0.0
  %2514 = vmatpush1.msra.mxu0 0.0
  %2515 = vmatprep.subr.mxu0 0.0
  %2516 = vmatpush1.msra.mxu0 0.0
  %2517 = vmatprep.subr.mxu0 0.0
  %2518 = vmatpush1.msra.mxu0 0.0
  %2519 = vmatprep.subr.mxu0 0.0
  %2520 = vmatpush1.msra.mxu0 0.0
  %2521 = vmatprep.subr.mxu0 0.0
  %2522 = vmatpush1.msra.mxu0 0.0
  %2523 = vmatprep.subr.mxu0 0.0
  %2524 = vmatpush1.msra.mxu0 0.0
  %2525 = vmatprep.subr.mxu0 0.0
  %2526 = vmatpush1.msra.mxu0 0.0
  %2527 = vmatprep.subr.mxu0 0.0
  %2528 = vmatpush1.msra.mxu0 0.0
  %2529 = vmatprep.subr.mxu0 0.0
  %2530 = vmatpush1.msra.mxu0 0.0
  %2531 = vmatprep.subr.mxu0 0.0
  %2532 = vmatpush1.msra.mxu0 0.0
  %2533 = vmatprep.mubr.f32.mxu0 0.0
  %2534 = vmatmul.mubr.f32.gmra.mrb[0].mxu0 %v2325
  %v2535 = vpop.f32.mrb[0].mxu0
  %v2536 = vadd.f32 0.0, %v2535
  %v2537 = vpop.f32.mrb[0].mxu0
  %v2538 = vadd.f32 0.0, %v2537
  %2539 = vdwg.mxu0
  %v2540 = vsel %vm63, %v2286, 0
  %2542 = vmatprep.subr.mxu0 %v2288
  %2543 = vmatpush1.msra.mxu0 %v2287
  %2544 = vmatprep.subr.mxu0 0.0
  %2545 = vmatpush1.msra.mxu0 0.0
  %2546 = vmatprep.subr.mxu0 0.0
  %2547 = vmatpush1.msra.mxu0 0.0
  %2548 = vmatprep.subr.mxu0 0.0
  %2549 = vmatpush1.msra.mxu0 0.0
  %2550 = vmatprep.subr.mxu0 0.0
  %2551 = vmatpush1.msra.mxu0 0.0
  %2552 = vmatprep.subr.mxu0 0.0
  %2553 = vmatpush1.msra.mxu0 0.0
  %2554 = vmatprep.subr.mxu0 0.0
  %2555 = vmatpush1.msra.mxu0 0.0
  %2556 = vmatprep.subr.mxu0 0.0
  %2557 = vmatpush1.msra.mxu0 0.0
  %2558 = vmatprep.subr.mxu0 0.0
  %2559 = vmatpush1.msra.mxu0 0.0
  %2560 = vmatprep.subr.mxu0 0.0
  %2561 = vmatpush1.msra.mxu0 0.0
  %2562 = vmatprep.subr.mxu0 0.0
  %2563 = vmatpush1.msra.mxu0 0.0
  %2564 = vmatprep.subr.mxu0 0.0
  %2565 = vmatpush1.msra.mxu0 0.0
  %2566 = vmatprep.subr.mxu0 0.0
  %2567 = vmatpush1.msra.mxu0 0.0
  %2568 = vmatprep.subr.mxu0 0.0
  %2569 = vmatpush1.msra.mxu0 0.0
  %2570 = vmatprep.subr.mxu0 0.0
  %2571 = vmatpush1.msra.mxu0 0.0
  %2572 = vmatprep.subr.mxu0 0.0
  %2573 = vmatpush1.msra.mxu0 0.0
  %2574 = vmatprep.subr.mxu0 0.0
  %2575 = vmatpush1.msra.mxu0 0.0
  %2576 = vmatprep.subr.mxu0 0.0
  %2577 = vmatpush1.msra.mxu0 0.0
  %2578 = vmatprep.subr.mxu0 0.0
  %2579 = vmatpush1.msra.mxu0 0.0
  %2580 = vmatprep.subr.mxu0 0.0
  %2581 = vmatpush1.msra.mxu0 0.0
  %2582 = vmatprep.subr.mxu0 0.0
  %2583 = vmatpush1.msra.mxu0 0.0
  %2584 = vmatprep.subr.mxu0 0.0
  %2585 = vmatpush1.msra.mxu0 0.0
  %2586 = vmatprep.subr.mxu0 0.0
  %2587 = vmatpush1.msra.mxu0 0.0
  %2588 = vmatprep.subr.mxu0 0.0
  %2589 = vmatpush1.msra.mxu0 0.0
  %2590 = vmatprep.subr.mxu0 0.0
  %2591 = vmatpush1.msra.mxu0 0.0
  %2592 = vmatprep.subr.mxu0 0.0
  %2593 = vmatpush1.msra.mxu0 0.0
  %2594 = vmatprep.subr.mxu0 0.0
  %2595 = vmatpush1.msra.mxu0 0.0
  %2596 = vmatprep.subr.mxu0 0.0
  %2597 = vmatpush1.msra.mxu0 0.0
  %2598 = vmatprep.subr.mxu0 0.0
  %2599 = vmatpush1.msra.mxu0 0.0
  %2600 = vmatprep.subr.mxu0 0.0
  %2601 = vmatpush1.msra.mxu0 0.0
  %2602 = vmatprep.subr.mxu0 0.0
  %2603 = vmatpush1.msra.mxu0 0.0
  %2604 = vmatprep.subr.mxu0 0.0
  %2605 = vmatpush1.msra.mxu0 0.0
  %2606 = vmatprep.mubr.f32.mxu0 0.0
  %2607 = vmatmul.mubr.f32.gmra.mrb[0].mxu0 %v2540
  %v2608 = vpop.f32.mrb[0].mxu0
  %v2609 = vadd.f32 %v2394, %v2608
  %v2610 = vpop.f32.mrb[0].mxu0
  %v2611 = vadd.f32 %v2396, %v2610
  %2612 = vdwg.mxu0
  %2613 = vmatprep.subr.mxu0 %v2290
  %2614 = vmatpush1.msra.mxu0 %v2289
  %2615 = vmatprep.subr.mxu0 0.0
  %2616 = vmatpush1.msra.mxu0 0.0
  %2617 = vmatprep.subr.mxu0 0.0
  %2618 = vmatpush1.msra.mxu0 0.0
  %2619 = vmatprep.subr.mxu0 0.0
  %2620 = vmatpush1.msra.mxu0 0.0
  %2621 = vmatprep.subr.mxu0 0.0
  %2622 = vmatpush1.msra.mxu0 0.0
  %2623 = vmatprep.subr.mxu0 0.0
  %2624 = vmatpush1.msra.mxu0 0.0
  %2625 = vmatprep.subr.mxu0 0.0
  %2626 = vmatpush1.msra.mxu0 0.0
  %2627 = vmatprep.subr.mxu0 0.0
  %2628 = vmatpush1.msra.mxu0 0.0
  %2629 = vmatprep.subr.mxu0 0.0
  %2630 = vmatpush1.msra.mxu0 0.0
  %2631 = vmatprep.subr.mxu0 0.0
  %2632 = vmatpush1.msra.mxu0 0.0
  %2633 = vmatprep.subr.mxu0 0.0
  %2634 = vmatpush1.msra.mxu0 0.0
  %2635 = vmatprep.subr.mxu0 0.0
  %2636 = vmatpush1.msra.mxu0 0.0
  %2637 = vmatprep.subr.mxu0 0.0
  %2638 = vmatpush1.msra.mxu0 0.0
  %2639 = vmatprep.subr.mxu0 0.0
  %2640 = vmatpush1.msra.mxu0 0.0
  %2641 = vmatprep.subr.mxu0 0.0
  %2642 = vmatpush1.msra.mxu0 0.0
  %2643 = vmatprep.subr.mxu0 0.0
  %2644 = vmatpush1.msra.mxu0 0.0
  %2645 = vmatprep.subr.mxu0 0.0
  %2646 = vmatpush1.msra.mxu0 0.0
  %2647 = vmatprep.subr.mxu0 0.0
  %2648 = vmatpush1.msra.mxu0 0.0
  %2649 = vmatprep.subr.mxu0 0.0
  %2650 = vmatpush1.msra.mxu0 0.0
  %2651 = vmatprep.subr.mxu0 0.0
  %2652 = vmatpush1.msra.mxu0 0.0
  %2653 = vmatprep.subr.mxu0 0.0
  %2654 = vmatpush1.msra.mxu0 0.0
  %2655 = vmatprep.subr.mxu0 0.0
  %2656 = vmatpush1.msra.mxu0 0.0
  %2657 = vmatprep.subr.mxu0 0.0
  %2658 = vmatpush1.msra.mxu0 0.0
  %2659 = vmatprep.subr.mxu0 0.0
  %2660 = vmatpush1.msra.mxu0 0.0
  %2661 = vmatprep.subr.mxu0 0.0
  %2662 = vmatpush1.msra.mxu0 0.0
  %2663 = vmatprep.subr.mxu0 0.0
  %2664 = vmatpush1.msra.mxu0 0.0
  %2665 = vmatprep.subr.mxu0 0.0
  %2666 = vmatpush1.msra.mxu0 0.0
  %2667 = vmatprep.subr.mxu0 0.0
  %2668 = vmatpush1.msra.mxu0 0.0
  %2669 = vmatprep.subr.mxu0 0.0
  %2670 = vmatpush1.msra.mxu0 0.0
  %2671 = vmatprep.subr.mxu0 0.0
  %2672 = vmatpush1.msra.mxu0 0.0
  %2673 = vmatprep.subr.mxu0 0.0
  %2674 = vmatpush1.msra.mxu0 0.0
  %2675 = vmatprep.subr.mxu0 0.0
  %2676 = vmatpush1.msra.mxu0 0.0
  %2677 = vmatprep.mubr.f32.mxu0 0.0
  %2678 = vmatmul.mubr.f32.gmra.mrb[0].mxu0 %v2540
  %v2679 = vpop.f32.mrb[0].mxu0
  %v2680 = vadd.f32 %v2465, %v2679
  %v2681 = vpop.f32.mrb[0].mxu0
  %v2682 = vadd.f32 %v2467, %v2681
  %2683 = vdwg.mxu0
  %2684 = vmatprep.subr.mxu0 %v2292
  %2685 = vmatpush1.msra.mxu0 %v2291
  %2686 = vmatprep.subr.mxu0 0.0
  %2687 = vmatpush1.msra.mxu0 0.0
  %2688 = vmatprep.subr.mxu0 0.0
  %2689 = vmatpush1.msra.mxu0 0.0
  %2690 = vmatprep.subr.mxu0 0.0
  %2691 = vmatpush1.msra.mxu0 0.0
  %2692 = vmatprep.subr.mxu0 0.0
  %2693 = vmatpush1.msra.mxu0 0.0
  %2694 = vmatprep.subr.mxu0 0.0
  %2695 = vmatpush1.msra.mxu0 0.0
  %2696 = vmatprep.subr.mxu0 0.0
  %2697 = vmatpush1.msra.mxu0 0.0
  %2698 = vmatprep.subr.mxu0 0.0
  %2699 = vmatpush1.msra.mxu0 0.0
  %2700 = vmatprep.subr.mxu0 0.0
  %2701 = vmatpush1.msra.mxu0 0.0
  %2702 = vmatprep.subr.mxu0 0.0
  %2703 = vmatpush1.msra.mxu0 0.0
  %2704 = vmatprep.subr.mxu0 0.0
  %2705 = vmatpush1.msra.mxu0 0.0
  %2706 = vmatprep.subr.mxu0 0.0
  %2707 = vmatpush1.msra.mxu0 0.0
  %2708 = vmatprep.subr.mxu0 0.0
  %2709 = vmatpush1.msra.mxu0 0.0
  %2710 = vmatprep.subr.mxu0 0.0
  %2711 = vmatpush1.msra.mxu0 0.0
  %2712 = vmatprep.subr.mxu0 0.0
  %2713 = vmatpush1.msra.mxu0 0.0
  %2714 = vmatprep.subr.mxu0 0.0
  %2715 = vmatpush1.msra.mxu0 0.0
  %2716 = vmatprep.subr.mxu0 0.0
  %2717 = vmatpush1.msra.mxu0 0.0
  %2718 = vmatprep.subr.mxu0 0.0
  %2719 = vmatpush1.msra.mxu0 0.0
  %2720 = vmatprep.subr.mxu0 0.0
  %2721 = vmatpush1.msra.mxu0 0.0
  %2722 = vmatprep.subr.mxu0 0.0
  %2723 = vmatpush1.msra.mxu0 0.0
  %2724 = vmatprep.subr.mxu0 0.0
  %2725 = vmatpush1.msra.mxu0 0.0
  %2726 = vmatprep.subr.mxu0 0.0
  %2727 = vmatpush1.msra.mxu0 0.0
  %2728 = vmatprep.subr.mxu0 0.0
  %2729 = vmatpush1.msra.mxu0 0.0
  %2730 = vmatprep.subr.mxu0 0.0
  %2731 = vmatpush1.msra.mxu0 0.0
  %2732 = vmatprep.subr.mxu0 0.0
  %2733 = vmatpush1.msra.mxu0 0.0
  %2734 = vmatprep.subr.mxu0 0.0
  %2735 = vmatpush1.msra.mxu0 0.0
  %2736 = vmatprep.subr.mxu0 0.0
  %2737 = vmatpush1.msra.mxu0 0.0
  %2738 = vmatprep.subr.mxu0 0.0
  %2739 = vmatpush1.msra.mxu0 0.0
  %2740 = vmatprep.subr.mxu0 0.0
  %2741 = vmatpush1.msra.mxu0 0.0
  %2742 = vmatprep.subr.mxu0 0.0
  %2743 = vmatpush1.msra.mxu0 0.0
  %2744 = vmatprep.subr.mxu0 0.0
  %2745 = vmatpush1.msra.mxu0 0.0
  %2746 = vmatprep.subr.mxu0 0.0
  %2747 = vmatpush1.msra.mxu0 0.0
  %2748 = vmatprep.mubr.f32.mxu0 0.0
  %2749 = vmatmul.mubr.f32.gmra.mrb[0].mxu0 %v2540
  %v2750 = vpop.f32.mrb[0].mxu0
  %v2751 = vadd.f32 %v2536, %v2750
  %v2752 = vpop.f32.mrb[0].mxu0
  %v2753 = vadd.f32 %v2538, %v2752
  %2754 = vdwg.mxu0
  %2755 = vrot.lane.b32.xlu0 %v2286, 112
  %v2756 = vpop.permute.xlu0 %2755
  %2757 = vrot.lane.b32.xlu0 %v2287, 126
  %v2758 = vpop.permute.xlu0 %2757
  %2759 = vrot.lane.b32.xlu0 %v2288, 126
  %v2760 = vpop.permute.xlu0 %2759
  %2761 = vrot.lane.b32.xlu0 %v2289, 126
  %v2762 = vpop.permute.xlu0 %2761
  %2763 = vrot.lane.b32.xlu0 %v2290, 126
  %v2764 = vpop.permute.xlu0 %2763
  %2765 = vrot.lane.b32.xlu0 %v2291, 126
  %v2766 = vpop.permute.xlu0 %2765
  %2767 = vrot.lane.b32.xlu0 %v2292, 126
  %v2768 = vpop.permute.xlu0 %2767
  %v2769 = vsel %vm508, %v2758, %v2760
  %v2770 = vsel %vm508, %v2760, %v2762
  %v2771 = vsel %vm508, %v2762, %v2764
  %v2772 = vsel %vm508, %v2764, %v2766
  %v2773 = vsel %vm508, %v2766, %v2768
  %v2780 = vsel %vm63, %v2756, 0
  %2782 = vmatprep.subr.mxu0 %v2770
  %2783 = vmatpush1.msra.mxu0 %v2769
  %2784 = vmatprep.subr.mxu0 0.0
  %2785 = vmatpush1.msra.mxu0 0.0
  %2786 = vmatprep.subr.mxu0 0.0
  %2787 = vmatpush1.msra.mxu0 0.0
  %2788 = vmatprep.subr.mxu0 0.0
  %2789 = vmatpush1.msra.mxu0 0.0
  %2790 = vmatprep.subr.mxu0 0.0
  %2791 = vmatpush1.msra.mxu0 0.0
  %2792 = vmatprep.subr.mxu0 0.0
  %2793 = vmatpush1.msra.mxu0 0.0
  %2794 = vmatprep.subr.mxu0 0.0
  %2795 = vmatpush1.msra.mxu0 0.0
  %2796 = vmatprep.subr.mxu0 0.0
  %2797 = vmatpush1.msra.mxu0 0.0
  %2798 = vmatprep.subr.mxu0 0.0
  %2799 = vmatpush1.msra.mxu0 0.0
  %2800 = vmatprep.subr.mxu0 0.0
  %2801 = vmatpush1.msra.mxu0 0.0
  %2802 = vmatprep.subr.mxu0 0.0
  %2803 = vmatpush1.msra.mxu0 0.0
  %2804 = vmatprep.subr.mxu0 0.0
  %2805 = vmatpush1.msra.mxu0 0.0
  %2806 = vmatprep.subr.mxu0 0.0
  %2807 = vmatpush1.msra.mxu0 0.0
  %2808 = vmatprep.subr.mxu0 0.0
  %2809 = vmatpush1.msra.mxu0 0.0
  %2810 = vmatprep.subr.mxu0 0.0
  %2811 = vmatpush1.msra.mxu0 0.0
  %2812 = vmatprep.subr.mxu0 0.0
  %2813 = vmatpush1.msra.mxu0 0.0
  %2814 = vmatprep.subr.mxu0 0.0
  %2815 = vmatpush1.msra.mxu0 0.0
  %2816 = vmatprep.subr.mxu0 0.0
  %2817 = vmatpush1.msra.mxu0 0.0
  %2818 = vmatprep.subr.mxu0 0.0
  %2819 = vmatpush1.msra.mxu0 0.0
  %2820 = vmatprep.subr.mxu0 0.0
  %2821 = vmatpush1.msra.mxu0 0.0
  %2822 = vmatprep.subr.mxu0 0.0
  %2823 = vmatpush1.msra.mxu0 0.0
  %2824 = vmatprep.subr.mxu0 0.0
  %2825 = vmatpush1.msra.mxu0 0.0
  %2826 = vmatprep.subr.mxu0 0.0
  %2827 = vmatpush1.msra.mxu0 0.0
  %2828 = vmatprep.subr.mxu0 0.0
  %2829 = vmatpush1.msra.mxu0 0.0
  %2830 = vmatprep.subr.mxu0 0.0
  %2831 = vmatpush1.msra.mxu0 0.0
  %2832 = vmatprep.subr.mxu0 0.0
  %2833 = vmatpush1.msra.mxu0 0.0
  %2834 = vmatprep.subr.mxu0 0.0
  %2835 = vmatpush1.msra.mxu0 0.0
  %2836 = vmatprep.subr.mxu0 0.0
  %2837 = vmatpush1.msra.mxu0 0.0
  %2838 = vmatprep.subr.mxu0 0.0
  %2839 = vmatpush1.msra.mxu0 0.0
  %2840 = vmatprep.subr.mxu0 0.0
  %2841 = vmatpush1.msra.mxu0 0.0
  %2842 = vmatprep.subr.mxu0 0.0
  %2843 = vmatpush1.msra.mxu0 0.0
  %2844 = vmatprep.subr.mxu0 0.0
  %2845 = vmatpush1.msra.mxu0 0.0
  %2846 = vmatprep.mubr.f32.mxu0 0.0
  %2847 = vmatmul.mubr.f32.gmra.mrb[0].mxu0 %v2780
  %v2848 = vpop.f32.mrb[0].mxu0
  %v2849 = vadd.f32 0.0, %v2848
  %v2850 = vpop.f32.mrb[0].mxu0
  %v2851 = vadd.f32 0.0, %v2850
  %2852 = vdwg.mxu0
  %2853 = vmatprep.subr.mxu0 %v2772
  %2854 = vmatpush1.msra.mxu0 %v2771
  %2855 = vmatprep.subr.mxu0 0.0
  %2856 = vmatpush1.msra.mxu0 0.0
  %2857 = vmatprep.subr.mxu0 0.0
  %2858 = vmatpush1.msra.mxu0 0.0
  %2859 = vmatprep.subr.mxu0 0.0
  %2860 = vmatpush1.msra.mxu0 0.0
  %2861 = vmatprep.subr.mxu0 0.0
  %2862 = vmatpush1.msra.mxu0 0.0
  %2863 = vmatprep.subr.mxu0 0.0
  %2864 = vmatpush1.msra.mxu0 0.0
  %2865 = vmatprep.subr.mxu0 0.0
  %2866 = vmatpush1.msra.mxu0 0.0
  %2867 = vmatprep.subr.mxu0 0.0
  %2868 = vmatpush1.msra.mxu0 0.0
  %2869 = vmatprep.subr.mxu0 0.0
  %2870 = vmatpush1.msra.mxu0 0.0
  %2871 = vmatprep.subr.mxu0 0.0
  %2872 = vmatpush1.msra.mxu0 0.0
  %2873 = vmatprep.subr.mxu0 0.0
  %2874 = vmatpush1.msra.mxu0 0.0
  %2875 = vmatprep.subr.mxu0 0.0
  %2876 = vmatpush1.msra.mxu0 0.0
  %2877 = vmatprep.subr.mxu0 0.0
  %2878 = vmatpush1.msra.mxu0 0.0
  %2879 = vmatprep.subr.mxu0 0.0
  %2880 = vmatpush1.msra.mxu0 0.0
  %2881 = vmatprep.subr.mxu0 0.0
  %2882 = vmatpush1.msra.mxu0 0.0
  %2883 = vmatprep.subr.mxu0 0.0
  %2884 = vmatpush1.msra.mxu0 0.0
  %2885 = vmatprep.subr.mxu0 0.0
  %2886 = vmatpush1.msra.mxu0 0.0
  %2887 = vmatprep.subr.mxu0 0.0
  %2888 = vmatpush1.msra.mxu0 0.0
  %2889 = vmatprep.subr.mxu0 0.0
  %2890 = vmatpush1.msra.mxu0 0.0
  %2891 = vmatprep.subr.mxu0 0.0
  %2892 = vmatpush1.msra.mxu0 0.0
  %2893 = vmatprep.subr.mxu0 0.0
  %2894 = vmatpush1.msra.mxu0 0.0
  %2895 = vmatprep.subr.mxu0 0.0
  %2896 = vmatpush1.msra.mxu0 0.0
  %2897 = vmatprep.subr.mxu0 0.0
  %2898 = vmatpush1.msra.mxu0 0.0
  %2899 = vmatprep.subr.mxu0 0.0
  %2900 = vmatpush1.msra.mxu0 0.0
  %2901 = vmatprep.subr.mxu0 0.0
  %2902 = vmatpush1.msra.mxu0 0.0
  %2903 = vmatprep.subr.mxu0 0.0
  %2904 = vmatpush1.msra.mxu0 0.0
  %2905 = vmatprep.subr.mxu0 0.0
  %2906 = vmatpush1.msra.mxu0 0.0
  %2907 = vmatprep.subr.mxu0 0.0
  %2908 = vmatpush1.msra.mxu0 0.0
  %2909 = vmatprep.subr.mxu0 0.0
  %2910 = vmatpush1.msra.mxu0 0.0
  %2911 = vmatprep.subr.mxu0 0.0
  %2912 = vmatpush1.msra.mxu0 0.0
  %2913 = vmatprep.subr.mxu0 0.0
  %2914 = vmatpush1.msra.mxu0 0.0
  %2915 = vmatprep.subr.mxu0 0.0
  %2916 = vmatpush1.msra.mxu0 0.0
  %2917 = vmatprep.mubr.f32.mxu0 0.0
  %2918 = vmatmul.mubr.f32.gmra.mrb[0].mxu0 %v2780
  %v2919 = vpop.f32.mrb[0].mxu0
  %v2920 = vadd.f32 0.0, %v2919
  %v2921 = vpop.f32.mrb[0].mxu0
  %v2922 = vadd.f32 0.0, %v2921
  %2923 = vdwg.mxu0
  %2924 = vmatprep.subr.mxu0 %v2768
  %2925 = vmatpush1.msra.mxu0 %v2773
  %2926 = vmatprep.subr.mxu0 0.0
  %2927 = vmatpush1.msra.mxu0 0.0
  %2928 = vmatprep.subr.mxu0 0.0
  %2929 = vmatpush1.msra.mxu0 0.0
  %2930 = vmatprep.subr.mxu0 0.0
  %2931 = vmatpush1.msra.mxu0 0.0
  %2932 = vmatprep.subr.mxu0 0.0
  %2933 = vmatpush1.msra.mxu0 0.0
  %2934 = vmatprep.subr.mxu0 0.0
  %2935 = vmatpush1.msra.mxu0 0.0
  %2936 = vmatprep.subr.mxu0 0.0
  %2937 = vmatpush1.msra.mxu0 0.0
  %2938 = vmatprep.subr.mxu0 0.0
  %2939 = vmatpush1.msra.mxu0 0.0
  %2940 = vmatprep.subr.mxu0 0.0
  %2941 = vmatpush1.msra.mxu0 0.0
  %2942 = vmatprep.subr.mxu0 0.0
  %2943 = vmatpush1.msra.mxu0 0.0
  %2944 = vmatprep.subr.mxu0 0.0
  %2945 = vmatpush1.msra.mxu0 0.0
  %2946 = vmatprep.subr.mxu0 0.0
  %2947 = vmatpush1.msra.mxu0 0.0
  %2948 = vmatprep.subr.mxu0 0.0
  %2949 = vmatpush1.msra.mxu0 0.0
  %2950 = vmatprep.subr.mxu0 0.0
  %2951 = vmatpush1.msra.mxu0 0.0
  %2952 = vmatprep.subr.mxu0 0.0
  %2953 = vmatpush1.msra.mxu0 0.0
  %2954 = vmatprep.subr.mxu0 0.0
  %2955 = vmatpush1.msra.mxu0 0.0
  %2956 = vmatprep.subr.mxu0 0.0
  %2957 = vmatpush1.msra.mxu0 0.0
  %2958 = vmatprep.subr.mxu0 0.0
  %2959 = vmatpush1.msra.mxu0 0.0
  %2960 = vmatprep.subr.mxu0 0.0
  %2961 = vmatpush1.msra.mxu0 0.0
  %2962 = vmatprep.subr.mxu0 0.0
  %2963 = vmatpush1.msra.mxu0 0.0
  %2964 = vmatprep.subr.mxu0 0.0
  %2965 = vmatpush1.msra.mxu0 0.0
  %2966 = vmatprep.subr.mxu0 0.0
  %2967 = vmatpush1.msra.mxu0 0.0
  %2968 = vmatprep.subr.mxu0 0.0
  %2969 = vmatpush1.msra.mxu0 0.0
  %2970 = vmatprep.subr.mxu0 0.0
  %2971 = vmatpush1.msra.mxu0 0.0
  %2972 = vmatprep.subr.mxu0 0.0
  %2973 = vmatpush1.msra.mxu0 0.0
  %2974 = vmatprep.subr.mxu0 0.0
  %2975 = vmatpush1.msra.mxu0 0.0
  %2976 = vmatprep.subr.mxu0 0.0
  %2977 = vmatpush1.msra.mxu0 0.0
  %2978 = vmatprep.subr.mxu0 0.0
  %2979 = vmatpush1.msra.mxu0 0.0
  %2980 = vmatprep.subr.mxu0 0.0
  %2981 = vmatpush1.msra.mxu0 0.0
  %2982 = vmatprep.subr.mxu0 0.0
  %2983 = vmatpush1.msra.mxu0 0.0
  %2984 = vmatprep.subr.mxu0 0.0
  %2985 = vmatpush1.msra.mxu0 0.0
  %2986 = vmatprep.subr.mxu0 0.0
  %2987 = vmatpush1.msra.mxu0 0.0
  %2988 = vmatprep.mubr.f32.mxu0 0.0
  %2989 = vmatmul.mubr.f32.gmra.mrb[0].mxu0 %v2780
  %v2990 = vpop.f32.mrb[0].mxu0
  %v2991 = vadd.f32 0.0, %v2990
  %v2992 = vpop.f32.mrb[0].mxu0
  %v2993 = vadd.f32 0.0, %v2992
  %2994 = vdwg.mxu0
  %v2995 = vadd.f32 %v2609, %v2849
  %v2996 = vadd.f32 %v2611, %v2851
  %v2997 = vadd.f32 %v2680, %v2920
  %v2998 = vadd.f32 %v2682, %v2922
  %v2999 = vadd.f32 %v2751, %v2991
  %v3000 = vadd.f32 %v2753, %v2993
  %3001 = vrot.lane.b32.xlu0 %v2286, 104
  %v3002 = vpop.permute.xlu0 %3001
  %3003 = vrot.lane.b32.xlu0 %v2287, 110
  %v3004 = vpop.permute.xlu0 %3003
  %3005 = vrot.lane.b32.xlu0 %v2288, 110
  %v3006 = vpop.permute.xlu0 %3005
  %3007 = vrot.lane.b32.xlu0 %v2289, 110
  %v3008 = vpop.permute.xlu0 %3007
  %3009 = vrot.lane.b32.xlu0 %v2290, 110
  %v3010 = vpop.permute.xlu0 %3009
  %3011 = vrot.lane.b32.xlu0 %v2291, 110
  %v3012 = vpop.permute.xlu0 %3011
  %3013 = vrot.lane.b32.xlu0 %v2292, 110
  %v3014 = vpop.permute.xlu0 %3013
  %v3015 = vsel %vm755, %v3004, %v3006
  %v3016 = vsel %vm755, %v3006, %v3008
  %v3017 = vsel %vm755, %v3008, %v3010
  %v3018 = vsel %vm755, %v3010, %v3012
  %v3019 = vsel %vm755, %v3012, %v3014
  %v3026 = vsel %vm63, %v3002, 0
  %3028 = vmatprep.subr.mxu0 %v3016
  %3029 = vmatpush1.msra.mxu0 %v3015
  %3030 = vmatprep.subr.mxu0 0.0
  %3031 = vmatpush1.msra.mxu0 0.0
  %3032 = vmatprep.subr.mxu0 0.0
  %3033 = vmatpush1.msra.mxu0 0.0
  %3034 = vmatprep.subr.mxu0 0.0
  %3035 = vmatpush1.msra.mxu0 0.0
  %3036 = vmatprep.subr.mxu0 0.0
  %3037 = vmatpush1.msra.mxu0 0.0
  %3038 = vmatprep.subr.mxu0 0.0
  %3039 = vmatpush1.msra.mxu0 0.0
  %3040 = vmatprep.subr.mxu0 0.0
  %3041 = vmatpush1.msra.mxu0 0.0
  %3042 = vmatprep.subr.mxu0 0.0
  %3043 = vmatpush1.msra.mxu0 0.0
  %3044 = vmatprep.subr.mxu0 0.0
  %3045 = vmatpush1.msra.mxu0 0.0
  %3046 = vmatprep.subr.mxu0 0.0
  %3047 = vmatpush1.msra.mxu0 0.0
  %3048 = vmatprep.subr.mxu0 0.0
  %3049 = vmatpush1.msra.mxu0 0.0
  %3050 = vmatprep.subr.mxu0 0.0
  %3051 = vmatpush1.msra.mxu0 0.0
  %3052 = vmatprep.subr.mxu0 0.0
  %3053 = vmatpush1.msra.mxu0 0.0
  %3054 = vmatprep.subr.mxu0 0.0
  %3055 = vmatpush1.msra.mxu0 0.0
  %3056 = vmatprep.subr.mxu0 0.0
  %3057 = vmatpush1.msra.mxu0 0.0
  %3058 = vmatprep.subr.mxu0 0.0
  %3059 = vmatpush1.msra.mxu0 0.0
  %3060 = vmatprep.subr.mxu0 0.0
  %3061 = vmatpush1.msra.mxu0 0.0
  %3062 = vmatprep.subr.mxu0 0.0
  %3063 = vmatpush1.msra.mxu0 0.0
  %3064 = vmatprep.subr.mxu0 0.0
  %3065 = vmatpush1.msra.mxu0 0.0
  %3066 = vmatprep.subr.mxu0 0.0
  %3067 = vmatpush1.msra.mxu0 0.0
  %3068 = vmatprep.subr.mxu0 0.0
  %3069 = vmatpush1.msra.mxu0 0.0
  %3070 = vmatprep.subr.mxu0 0.0
  %3071 = vmatpush1.msra.mxu0 0.0
  %3072 = vmatprep.subr.mxu0 0.0
  %3073 = vmatpush1.msra.mxu0 0.0
  %3074 = vmatprep.subr.mxu0 0.0
  %3075 = vmatpush1.msra.mxu0 0.0
  %3076 = vmatprep.subr.mxu0 0.0
  %3077 = vmatpush1.msra.mxu0 0.0
  %3078 = vmatprep.subr.mxu0 0.0
  %3079 = vmatpush1.msra.mxu0 0.0
  %3080 = vmatprep.subr.mxu0 0.0
  %3081 = vmatpush1.msra.mxu0 0.0
  %3082 = vmatprep.subr.mxu0 0.0
  %3083 = vmatpush1.msra.mxu0 0.0
  %3084 = vmatprep.subr.mxu0 0.0
  %3085 = vmatpush1.msra.mxu0 0.0
  %3086 = vmatprep.subr.mxu0 0.0
  %3087 = vmatpush1.msra.mxu0 0.0
  %3088 = vmatprep.subr.mxu0 0.0
  %3089 = vmatpush1.msra.mxu0 0.0
  %3090 = vmatprep.subr.mxu0 0.0
  %3091 = vmatpush1.msra.mxu0 0.0
  %3092 = vmatprep.mubr.f32.mxu0 0.0
  %3093 = vmatmul.mubr.f32.gmra.mrb[0].mxu0 %v3026
  %v3094 = vpop.f32.mrb[0].mxu0
  %v3095 = vadd.f32 0.0, %v3094
  %v3096 = vpop.f32.mrb[0].mxu0
  %v3097 = vadd.f32 0.0, %v3096
  %3098 = vdwg.mxu0
  %3099 = vmatprep.subr.mxu0 %v3018
  %3100 = vmatpush1.msra.mxu0 %v3017
  %3101 = vmatprep.subr.mxu0 0.0
  %3102 = vmatpush1.msra.mxu0 0.0
  %3103 = vmatprep.subr.mxu0 0.0
  %3104 = vmatpush1.msra.mxu0 0.0
  %3105 = vmatprep.subr.mxu0 0.0
  %3106 = vmatpush1.msra.mxu0 0.0
  %3107 = vmatprep.subr.mxu0 0.0
  %3108 = vmatpush1.msra.mxu0 0.0
  %3109 = vmatprep.subr.mxu0 0.0
  %3110 = vmatpush1.msra.mxu0 0.0
  %3111 = vmatprep.subr.mxu0 0.0
  %3112 = vmatpush1.msra.mxu0 0.0
  %3113 = vmatprep.subr.mxu0 0.0
  %3114 = vmatpush1.msra.mxu0 0.0
  %3115 = vmatprep.subr.mxu0 0.0
  %3116 = vmatpush1.msra.mxu0 0.0
  %3117 = vmatprep.subr.mxu0 0.0
  %3118 = vmatpush1.msra.mxu0 0.0
  %3119 = vmatprep.subr.mxu0 0.0
  %3120 = vmatpush1.msra.mxu0 0.0
  %3121 = vmatprep.subr.mxu0 0.0
  %3122 = vmatpush1.msra.mxu0 0.0
  %3123 = vmatprep.subr.mxu0 0.0
  %3124 = vmatpush1.msra.mxu0 0.0
  %3125 = vmatprep.subr.mxu0 0.0
  %3126 = vmatpush1.msra.mxu0 0.0
  %3127 = vmatprep.subr.mxu0 0.0
  %3128 = vmatpush1.msra.mxu0 0.0
  %3129 = vmatprep.subr.mxu0 0.0
  %3130 = vmatpush1.msra.mxu0 0.0
  %3131 = vmatprep.subr.mxu0 0.0
  %3132 = vmatpush1.msra.mxu0 0.0
  %3133 = vmatprep.subr.mxu0 0.0
  %3134 = vmatpush1.msra.mxu0 0.0
  %3135 = vmatprep.subr.mxu0 0.0
  %3136 = vmatpush1.msra.mxu0 0.0
  %3137 = vmatprep.subr.mxu0 0.0
  %3138 = vmatpush1.msra.mxu0 0.0
  %3139 = vmatprep.subr.mxu0 0.0
  %3140 = vmatpush1.msra.mxu0 0.0
  %3141 = vmatprep.subr.mxu0 0.0
  %3142 = vmatpush1.msra.mxu0 0.0
  %3143 = vmatprep.subr.mxu0 0.0
  %3144 = vmatpush1.msra.mxu0 0.0
  %3145 = vmatprep.subr.mxu0 0.0
  %3146 = vmatpush1.msra.mxu0 0.0
  %3147 = vmatprep.subr.mxu0 0.0
  %3148 = vmatpush1.msra.mxu0 0.0
  %3149 = vmatprep.subr.mxu0 0.0
  %3150 = vmatpush1.msra.mxu0 0.0
  %3151 = vmatprep.subr.mxu0 0.0
  %3152 = vmatpush1.msra.mxu0 0.0
  %3153 = vmatprep.subr.mxu0 0.0
  %3154 = vmatpush1.msra.mxu0 0.0
  %3155 = vmatprep.subr.mxu0 0.0
  %3156 = vmatpush1.msra.mxu0 0.0
  %3157 = vmatprep.subr.mxu0 0.0
  %3158 = vmatpush1.msra.mxu0 0.0
  %3159 = vmatprep.subr.mxu0 0.0
  %3160 = vmatpush1.msra.mxu0 0.0
  %3161 = vmatprep.subr.mxu0 0.0
  %3162 = vmatpush1.msra.mxu0 0.0
  %3163 = vmatprep.mubr.f32.mxu0 0.0
  %3164 = vmatmul.mubr.f32.gmra.mrb[0].mxu0 %v3026
  %v3165 = vpop.f32.mrb[0].mxu0
  %v3166 = vadd.f32 0.0, %v3165
  %v3167 = vpop.f32.mrb[0].mxu0
  %v3168 = vadd.f32 0.0, %v3167
  %3169 = vdwg.mxu0
  %3170 = vmatprep.subr.mxu0 %v3014
  %3171 = vmatpush1.msra.mxu0 %v3019
  %3172 = vmatprep.subr.mxu0 0.0
  %3173 = vmatpush1.msra.mxu0 0.0
  %3174 = vmatprep.subr.mxu0 0.0
  %3175 = vmatpush1.msra.mxu0 0.0
  %3176 = vmatprep.subr.mxu0 0.0
  %3177 = vmatpush1.msra.mxu0 0.0
  %3178 = vmatprep.subr.mxu0 0.0
  %3179 = vmatpush1.msra.mxu0 0.0
  %3180 = vmatprep.subr.mxu0 0.0
  %3181 = vmatpush1.msra.mxu0 0.0
  %3182 = vmatprep.subr.mxu0 0.0
  %3183 = vmatpush1.msra.mxu0 0.0
  %3184 = vmatprep.subr.mxu0 0.0
  %3185 = vmatpush1.msra.mxu0 0.0
  %3186 = vmatprep.subr.mxu0 0.0
  %3187 = vmatpush1.msra.mxu0 0.0
  %3188 = vmatprep.subr.mxu0 0.0
  %3189 = vmatpush1.msra.mxu0 0.0
  %3190 = vmatprep.subr.mxu0 0.0
  %3191 = vmatpush1.msra.mxu0 0.0
  %3192 = vmatprep.subr.mxu0 0.0
  %3193 = vmatpush1.msra.mxu0 0.0
  %3194 = vmatprep.subr.mxu0 0.0
  %3195 = vmatpush1.msra.mxu0 0.0
  %3196 = vmatprep.subr.mxu0 0.0
  %3197 = vmatpush1.msra.mxu0 0.0
  %3198 = vmatprep.subr.mxu0 0.0
  %3199 = vmatpush1.msra.mxu0 0.0
  %3200 = vmatprep.subr.mxu0 0.0
  %3201 = vmatpush1.msra.mxu0 0.0
  %3202 = vmatprep.subr.mxu0 0.0
  %3203 = vmatpush1.msra.mxu0 0.0
  %3204 = vmatprep.subr.mxu0 0.0
  %3205 = vmatpush1.msra.mxu0 0.0
  %3206 = vmatprep.subr.mxu0 0.0
  %3207 = vmatpush1.msra.mxu0 0.0
  %3208 = vmatprep.subr.mxu0 0.0
  %3209 = vmatpush1.msra.mxu0 0.0
  %3210 = vmatprep.subr.mxu0 0.0
  %3211 = vmatpush1.msra.mxu0 0.0
  %3212 = vmatprep.subr.mxu0 0.0
  %3213 = vmatpush1.msra.mxu0 0.0
  %3214 = vmatprep.subr.mxu0 0.0
  %3215 = vmatpush1.msra.mxu0 0.0
  %3216 = vmatprep.subr.mxu0 0.0
  %3217 = vmatpush1.msra.mxu0 0.0
  %3218 = vmatprep.subr.mxu0 0.0
  %3219 = vmatpush1.msra.mxu0 0.0
  %3220 = vmatprep.subr.mxu0 0.0
  %3221 = vmatpush1.msra.mxu0 0.0
  %3222 = vmatprep.subr.mxu0 0.0
  %3223 = vmatpush1.msra.mxu0 0.0
  %3224 = vmatprep.subr.mxu0 0.0
  %3225 = vmatpush1.msra.mxu0 0.0
  %3226 = vmatprep.subr.mxu0 0.0
  %3227 = vmatpush1.msra.mxu0 0.0
  %3228 = vmatprep.subr.mxu0 0.0
  %3229 = vmatpush1.msra.mxu0 0.0
  %3230 = vmatprep.subr.mxu0 0.0
  %3231 = vmatpush1.msra.mxu0 0.0
  %3232 = vmatprep.subr.mxu0 0.0
  %3233 = vmatpush1.msra.mxu0 0.0
  %3234 = vmatprep.mubr.f32.mxu0 0.0
  %3235 = vmatmul.mubr.f32.gmra.mrb[0].mxu0 %v3026
  %v3236 = vpop.f32.mrb[0].mxu0
  %v3237 = vadd.f32 0.0, %v3236
  %v3238 = vpop.f32.mrb[0].mxu0
  %v3239 = vadd.f32 0.0, %v3238
  %3240 = vdwg.mxu0
  %v3241 = vadd.f32 %v2995, %v3095
  %v3242 = vadd.f32 %v2996, %v3097
  %v3243 = vadd.f32 %v2997, %v3166
  %v3244 = vadd.f32 %v2998, %v3168
  %v3245 = vadd.f32 %v2999, %v3237
  %v3246 = vadd.f32 %v3000, %v3239
  %3247 = vrot.lane.b32.xlu0 %v2286, 96
  %v3248 = vpop.permute.xlu0 %3247
  %3249 = vrot.lane.b32.xlu0 %v2287, 109
  %v3250 = vpop.permute.xlu0 %3249
  %3251 = vrot.lane.b32.xlu0 %v2288, 109
  %v3252 = vpop.permute.xlu0 %3251
  %3253 = vrot.lane.b32.xlu0 %v2289, 109
  %v3254 = vpop.permute.xlu0 %3253
  %3255 = vrot.lane.b32.xlu0 %v2290, 109
  %v3256 = vpop.permute.xlu0 %3255
  %3257 = vrot.lane.b32.xlu0 %v2291, 109
  %v3258 = vpop.permute.xlu0 %3257
  %3259 = vrot.lane.b32.xlu0 %v2292, 109
  %v3260 = vpop.permute.xlu0 %3259
  %v3261 = vsel %vm1002, %v3250, %v3252
  %v3262 = vsel %vm1002, %v3252, %v3254
  %v3263 = vsel %vm1002, %v3254, %v3256
  %v3264 = vsel %vm1002, %v3256, %v3258
  %v3265 = vsel %vm1002, %v3258, %v3260
  %v3272 = vsel %vm63, %v3248, 0
  %3274 = vmatprep.subr.mxu0 %v3262
  %3275 = vmatpush1.msra.mxu0 %v3261
  %3276 = vmatprep.subr.mxu0 0.0
  %3277 = vmatpush1.msra.mxu0 0.0
  %3278 = vmatprep.subr.mxu0 0.0
  %3279 = vmatpush1.msra.mxu0 0.0
  %3280 = vmatprep.subr.mxu0 0.0
  %3281 = vmatpush1.msra.mxu0 0.0
  %3282 = vmatprep.subr.mxu0 0.0
  %3283 = vmatpush1.msra.mxu0 0.0
  %3284 = vmatprep.subr.mxu0 0.0
  %3285 = vmatpush1.msra.mxu0 0.0
  %3286 = vmatprep.subr.mxu0 0.0
  %3287 = vmatpush1.msra.mxu0 0.0
  %3288 = vmatprep.subr.mxu0 0.0
  %3289 = vmatpush1.msra.mxu0 0.0
  %3290 = vmatprep.subr.mxu0 0.0
  %3291 = vmatpush1.msra.mxu0 0.0
  %3292 = vmatprep.subr.mxu0 0.0
  %3293 = vmatpush1.msra.mxu0 0.0
  %3294 = vmatprep.subr.mxu0 0.0
  %3295 = vmatpush1.msra.mxu0 0.0
  %3296 = vmatprep.subr.mxu0 0.0
  %3297 = vmatpush1.msra.mxu0 0.0
  %3298 = vmatprep.subr.mxu0 0.0
  %3299 = vmatpush1.msra.mxu0 0.0
  %3300 = vmatprep.subr.mxu0 0.0
  %3301 = vmatpush1.msra.mxu0 0.0
  %3302 = vmatprep.subr.mxu0 0.0
  %3303 = vmatpush1.msra.mxu0 0.0
  %3304 = vmatprep.subr.mxu0 0.0
  %3305 = vmatpush1.msra.mxu0 0.0
  %3306 = vmatprep.subr.mxu0 0.0
  %3307 = vmatpush1.msra.mxu0 0.0
  %3308 = vmatprep.subr.mxu0 0.0
  %3309 = vmatpush1.msra.mxu0 0.0
  %3310 = vmatprep.subr.mxu0 0.0
  %3311 = vmatpush1.msra.mxu0 0.0
  %3312 = vmatprep.subr.mxu0 0.0
  %3313 = vmatpush1.msra.mxu0 0.0
  %3314 = vmatprep.subr.mxu0 0.0
  %3315 = vmatpush1.msra.mxu0 0.0
  %3316 = vmatprep.subr.mxu0 0.0
  %3317 = vmatpush1.msra.mxu0 0.0
  %3318 = vmatprep.subr.mxu0 0.0
  %3319 = vmatpush1.msra.mxu0 0.0
  %3320 = vmatprep.subr.mxu0 0.0
  %3321 = vmatpush1.msra.mxu0 0.0
  %3322 = vmatprep.subr.mxu0 0.0
  %3323 = vmatpush1.msra.mxu0 0.0
  %3324 = vmatprep.subr.mxu0 0.0
  %3325 = vmatpush1.msra.mxu0 0.0
  %3326 = vmatprep.subr.mxu0 0.0
  %3327 = vmatpush1.msra.mxu0 0.0
  %3328 = vmatprep.subr.mxu0 0.0
  %3329 = vmatpush1.msra.mxu0 0.0
  %3330 = vmatprep.subr.mxu0 0.0
  %3331 = vmatpush1.msra.mxu0 0.0
  %3332 = vmatprep.subr.mxu0 0.0
  %3333 = vmatpush1.msra.mxu0 0.0
  %3334 = vmatprep.subr.mxu0 0.0
  %3335 = vmatpush1.msra.mxu0 0.0
  %3336 = vmatprep.subr.mxu0 0.0
  %3337 = vmatpush1.msra.mxu0 0.0
  %3338 = vmatprep.mubr.f32.mxu0 0.0
  %3339 = vmatmul.mubr.f32.gmra.mrb[0].mxu0 %v3272
  %v3340 = vpop.f32.mrb[0].mxu0
  %v3341 = vadd.f32 0.0, %v3340
  %v3342 = vpop.f32.mrb[0].mxu0
  %v3343 = vadd.f32 0.0, %v3342
  %3344 = vdwg.mxu0
  %3345 = vmatprep.subr.mxu0 %v3264
  %3346 = vmatpush1.msra.mxu0 %v3263
  %3347 = vmatprep.subr.mxu0 0.0
  %3348 = vmatpush1.msra.mxu0 0.0
  %3349 = vmatprep.subr.mxu0 0.0
  %3350 = vmatpush1.msra.mxu0 0.0
  %3351 = vmatprep.subr.mxu0 0.0
  %3352 = vmatpush1.msra.mxu0 0.0
  %3353 = vmatprep.subr.mxu0 0.0
  %3354 = vmatpush1.msra.mxu0 0.0
  %3355 = vmatprep.subr.mxu0 0.0
  %3356 = vmatpush1.msra.mxu0 0.0
  %3357 = vmatprep.subr.mxu0 0.0
  %3358 = vmatpush1.msra.mxu0 0.0
  %3359 = vmatprep.subr.mxu0 0.0
  %3360 = vmatpush1.msra.mxu0 0.0
  %3361 = vmatprep.subr.mxu0 0.0
  %3362 = vmatpush1.msra.mxu0 0.0
  %3363 = vmatprep.subr.mxu0 0.0
  %3364 = vmatpush1.msra.mxu0 0.0
  %3365 = vmatprep.subr.mxu0 0.0
  %3366 = vmatpush1.msra.mxu0 0.0
  %3367 = vmatprep.subr.mxu0 0.0
  %3368 = vmatpush1.msra.mxu0 0.0
  %3369 = vmatprep.subr.mxu0 0.0
  %3370 = vmatpush1.msra.mxu0 0.0
  %3371 = vmatprep.subr.mxu0 0.0
  %3372 = vmatpush1.msra.mxu0 0.0
  %3373 = vmatprep.subr.mxu0 0.0
  %3374 = vmatpush1.msra.mxu0 0.0
  %3375 = vmatprep.subr.mxu0 0.0
  %3376 = vmatpush1.msra.mxu0 0.0
  %3377 = vmatprep.subr.mxu0 0.0
  %3378 = vmatpush1.msra.mxu0 0.0
  %3379 = vmatprep.subr.mxu0 0.0
  %3380 = vmatpush1.msra.mxu0 0.0
  %3381 = vmatprep.subr.mxu0 0.0
  %3382 = vmatpush1.msra.mxu0 0.0
  %3383 = vmatprep.subr.mxu0 0.0
  %3384 = vmatpush1.msra.mxu0 0.0
  %3385 = vmatprep.subr.mxu0 0.0
  %3386 = vmatpush1.msra.mxu0 0.0
  %3387 = vmatprep.subr.mxu0 0.0
  %3388 = vmatpush1.msra.mxu0 0.0
  %3389 = vmatprep.subr.mxu0 0.0
  %3390 = vmatpush1.msra.mxu0 0.0
  %3391 = vmatprep.subr.mxu0 0.0
  %3392 = vmatpush1.msra.mxu0 0.0
  %3393 = vmatprep.subr.mxu0 0.0
  %3394 = vmatpush1.msra.mxu0 0.0
  %3395 = vmatprep.subr.mxu0 0.0
  %3396 = vmatpush1.msra.mxu0 0.0
  %3397 = vmatprep.subr.mxu0 0.0
  %3398 = vmatpush1.msra.mxu0 0.0
  %3399 = vmatprep.subr.mxu0 0.0
  %3400 = vmatpush1.msra.mxu0 0.0
  %3401 = vmatprep.subr.mxu0 0.0
  %3402 = vmatpush1.msra.mxu0 0.0
  %3403 = vmatprep.subr.mxu0 0.0
  %3404 = vmatpush1.msra.mxu0 0.0
  %3405 = vmatprep.subr.mxu0 0.0
  %3406 = vmatpush1.msra.mxu0 0.0
  %3407 = vmatprep.subr.mxu0 0.0
  %3408 = vmatpush1.msra.mxu0 0.0
  %3409 = vmatprep.mubr.f32.mxu0 0.0
  %3410 = vmatmul.mubr.f32.gmra.mrb[0].mxu0 %v3272
  %v3411 = vpop.f32.mrb[0].mxu0
  %v3412 = vadd.f32 0.0, %v3411
  %v3413 = vpop.f32.mrb[0].mxu0
  %v3414 = vadd.f32 0.0, %v3413
  %3415 = vdwg.mxu0
  %3416 = vmatprep.subr.mxu0 %v3260
  %3417 = vmatpush1.msra.mxu0 %v3265
  %3418 = vmatprep.subr.mxu0 0.0
  %3419 = vmatpush1.msra.mxu0 0.0
  %3420 = vmatprep.subr.mxu0 0.0
  %3421 = vmatpush1.msra.mxu0 0.0
  %3422 = vmatprep.subr.mxu0 0.0
  %3423 = vmatpush1.msra.mxu0 0.0
  %3424 = vmatprep.subr.mxu0 0.0
  %3425 = vmatpush1.msra.mxu0 0.0
  %3426 = vmatprep.subr.mxu0 0.0
  %3427 = vmatpush1.msra.mxu0 0.0
  %3428 = vmatprep.subr.mxu0 0.0
  %3429 = vmatpush1.msra.mxu0 0.0
  %3430 = vmatprep.subr.mxu0 0.0
  %3431 = vmatpush1.msra.mxu0 0.0
  %3432 = vmatprep.subr.mxu0 0.0
  %3433 = vmatpush1.msra.mxu0 0.0
  %3434 = vmatprep.subr.mxu0 0.0
  %3435 = vmatpush1.msra.mxu0 0.0
  %3436 = vmatprep.subr.mxu0 0.0
  %3437 = vmatpush1.msra.mxu0 0.0
  %3438 = vmatprep.subr.mxu0 0.0
  %3439 = vmatpush1.msra.mxu0 0.0
  %3440 = vmatprep.subr.mxu0 0.0
  %3441 = vmatpush1.msra.mxu0 0.0
  %3442 = vmatprep.subr.mxu0 0.0
  %3443 = vmatpush1.msra.mxu0 0.0
  %3444 = vmatprep.subr.mxu0 0.0
  %3445 = vmatpush1.msra.mxu0 0.0
  %3446 = vmatprep.subr.mxu0 0.0
  %3447 = vmatpush1.msra.mxu0 0.0
  %3448 = vmatprep.subr.mxu0 0.0
  %3449 = vmatpush1.msra.mxu0 0.0
  %3450 = vmatprep.subr.mxu0 0.0
  %3451 = vmatpush1.msra.mxu0 0.0
  %3452 = vmatprep.subr.mxu0 0.0
  %3453 = vmatpush1.msra.mxu0 0.0
  %3454 = vmatprep.subr.mxu0 0.0
  %3455 = vmatpush1.msra.mxu0 0.0
  %3456 = vmatprep.subr.mxu0 0.0
  %3457 = vmatpush1.msra.mxu0 0.0
  %3458 = vmatprep.subr.mxu0 0.0
  %3459 = vmatpush1.msra.mxu0 0.0
  %3460 = vmatprep.subr.mxu0 0.0
  %3461 = vmatpush1.msra.mxu0 0.0
  %3462 = vmatprep.subr.mxu0 0.0
  %3463 = vmatpush1.msra.mxu0 0.0
  %3464 = vmatprep.subr.mxu0 0.0
  %3465 = vmatpush1.msra.mxu0 0.0
  %3466 = vmatprep.subr.mxu0 0.0
  %3467 = vmatpush1.msra.mxu0 0.0
  %3468 = vmatprep.subr.mxu0 0.0
  %3469 = vmatpush1.msra.mxu0 0.0
  %3470 = vmatprep.subr.mxu0 0.0
  %3471 = vmatpush1.msra.mxu0 0.0
  %3472 = vmatprep.subr.mxu0 0.0
  %3473 = vmatpush1.msra.mxu0 0.0
  %3474 = vmatprep.subr.mxu0 0.0
  %3475 = vmatpush1.msra.mxu0 0.0
  %3476 = vmatprep.subr.mxu0 0.0
  %3477 = vmatpush1.msra.mxu0 0.0
  %3478 = vmatprep.subr.mxu0 0.0
  %3479 = vmatpush1.msra.mxu0 0.0
  %3480 = vmatprep.mubr.f32.mxu0 0.0
  %3481 = vmatmul.mubr.f32.gmra.mrb[0].mxu0 %v3272
  %v3482 = vpop.f32.mrb[0].mxu0
  %v3483 = vadd.f32 0.0, %v3482
  %v3484 = vpop.f32.mrb[0].mxu0
  %v3485 = vadd.f32 0.0, %v3484
  %3486 = vdwg.mxu0
  %v3487 = vadd.f32 %v3241, %v3341
  %v3488 = vadd.f32 %v3242, %v3343
  %v3489 = vadd.f32 %v3243, %v3412
  %v3490 = vadd.f32 %v3244, %v3414
  %v3491 = vadd.f32 %v3245, %v3483
  %v3492 = vadd.f32 %v3246, %v3485
  %3493 = vrot.lane.b32.xlu0 %v2286, 88
  %v3494 = vpop.permute.xlu0 %3493
  %3495 = vrot.lane.b32.xlu0 %v2287, 108
  %v3496 = vpop.permute.xlu0 %3495
  %3497 = vrot.lane.b32.xlu0 %v2288, 108
  %v3498 = vpop.permute.xlu0 %3497
  %3499 = vrot.lane.b32.xlu0 %v2289, 108
  %v3500 = vpop.permute.xlu0 %3499
  %3501 = vrot.lane.b32.xlu0 %v2290, 108
  %v3502 = vpop.permute.xlu0 %3501
  %3503 = vrot.lane.b32.xlu0 %v2291, 108
  %v3504 = vpop.permute.xlu0 %3503
  %3505 = vrot.lane.b32.xlu0 %v2292, 108
  %v3506 = vpop.permute.xlu0 %3505
  %v3507 = vsel %vm1249, %v3496, %v3498
  %v3508 = vsel %vm1249, %v3498, %v3500
  %v3509 = vsel %vm1249, %v3500, %v3502
  %v3510 = vsel %vm1249, %v3502, %v3504
  %v3511 = vsel %vm1249, %v3504, %v3506
  %v3518 = vsel %vm63, %v3494, 0
  %3520 = vmatprep.subr.mxu0 %v3508
  %3521 = vmatpush1.msra.mxu0 %v3507
  %3522 = vmatprep.subr.mxu0 0.0
  %3523 = vmatpush1.msra.mxu0 0.0
  %3524 = vmatprep.subr.mxu0 0.0
  %3525 = vmatpush1.msra.mxu0 0.0
  %3526 = vmatprep.subr.mxu0 0.0
  %3527 = vmatpush1.msra.mxu0 0.0
  %3528 = vmatprep.subr.mxu0 0.0
  %3529 = vmatpush1.msra.mxu0 0.0
  %3530 = vmatprep.subr.mxu0 0.0
  %3531 = vmatpush1.msra.mxu0 0.0
  %3532 = vmatprep.subr.mxu0 0.0
  %3533 = vmatpush1.msra.mxu0 0.0
  %3534 = vmatprep.subr.mxu0 0.0
  %3535 = vmatpush1.msra.mxu0 0.0
  %3536 = vmatprep.subr.mxu0 0.0
  %3537 = vmatpush1.msra.mxu0 0.0
  %3538 = vmatprep.subr.mxu0 0.0
  %3539 = vmatpush1.msra.mxu0 0.0
  %3540 = vmatprep.subr.mxu0 0.0
  %3541 = vmatpush1.msra.mxu0 0.0
  %3542 = vmatprep.subr.mxu0 0.0
  %3543 = vmatpush1.msra.mxu0 0.0
  %3544 = vmatprep.subr.mxu0 0.0
  %3545 = vmatpush1.msra.mxu0 0.0
  %3546 = vmatprep.subr.mxu0 0.0
  %3547 = vmatpush1.msra.mxu0 0.0
  %3548 = vmatprep.subr.mxu0 0.0
  %3549 = vmatpush1.msra.mxu0 0.0
  %3550 = vmatprep.subr.mxu0 0.0
  %3551 = vmatpush1.msra.mxu0 0.0
  %3552 = vmatprep.subr.mxu0 0.0
  %3553 = vmatpush1.msra.mxu0 0.0
  %3554 = vmatprep.subr.mxu0 0.0
  %3555 = vmatpush1.msra.mxu0 0.0
  %3556 = vmatprep.subr.mxu0 0.0
  %3557 = vmatpush1.msra.mxu0 0.0
  %3558 = vmatprep.subr.mxu0 0.0
  %3559 = vmatpush1.msra.mxu0 0.0
  %3560 = vmatprep.subr.mxu0 0.0
  %3561 = vmatpush1.msra.mxu0 0.0
  %3562 = vmatprep.subr.mxu0 0.0
  %3563 = vmatpush1.msra.mxu0 0.0
  %3564 = vmatprep.subr.mxu0 0.0
  %3565 = vmatpush1.msra.mxu0 0.0
  %3566 = vmatprep.subr.mxu0 0.0
  %3567 = vmatpush1.msra.mxu0 0.0
  %3568 = vmatprep.subr.mxu0 0.0
  %3569 = vmatpush1.msra.mxu0 0.0
  %3570 = vmatprep.subr.mxu0 0.0
  %3571 = vmatpush1.msra.mxu0 0.0
  %3572 = vmatprep.subr.mxu0 0.0
  %3573 = vmatpush1.msra.mxu0 0.0
  %3574 = vmatprep.subr.mxu0 0.0
  %3575 = vmatpush1.msra.mxu0 0.0
  %3576 = vmatprep.subr.mxu0 0.0
  %3577 = vmatpush1.msra.mxu0 0.0
  %3578 = vmatprep.subr.mxu0 0.0
  %3579 = vmatpush1.msra.mxu0 0.0
  %3580 = vmatprep.subr.mxu0 0.0
  %3581 = vmatpush1.msra.mxu0 0.0
  %3582 = vmatprep.subr.mxu0 0.0
  %3583 = vmatpush1.msra.mxu0 0.0
  %3584 = vmatprep.mubr.f32.mxu0 0.0
  %3585 = vmatmul.mubr.f32.gmra.mrb[0].mxu0 %v3518
  %v3586 = vpop.f32.mrb[0].mxu0
  %v3587 = vadd.f32 0.0, %v3586
  %v3588 = vpop.f32.mrb[0].mxu0
  %v3589 = vadd.f32 0.0, %v3588
  %3590 = vdwg.mxu0
  %3591 = vmatprep.subr.mxu0 %v3510
  %3592 = vmatpush1.msra.mxu0 %v3509
  %3593 = vmatprep.subr.mxu0 0.0
  %3594 = vmatpush1.msra.mxu0 0.0
  %3595 = vmatprep.subr.mxu0 0.0
  %3596 = vmatpush1.msra.mxu0 0.0
  %3597 = vmatprep.subr.mxu0 0.0
  %3598 = vmatpush1.msra.mxu0 0.0
  %3599 = vmatprep.subr.mxu0 0.0
  %3600 = vmatpush1.msra.mxu0 0.0
  %3601 = vmatprep.subr.mxu0 0.0
  %3602 = vmatpush1.msra.mxu0 0.0
  %3603 = vmatprep.subr.mxu0 0.0
  %3604 = vmatpush1.msra.mxu0 0.0
  %3605 = vmatprep.subr.mxu0 0.0
  %3606 = vmatpush1.msra.mxu0 0.0
  %3607 = vmatprep.subr.mxu0 0.0
  %3608 = vmatpush1.msra.mxu0 0.0
  %3609 = vmatprep.subr.mxu0 0.0
  %3610 = vmatpush1.msra.mxu0 0.0
  %3611 = vmatprep.subr.mxu0 0.0
  %3612 = vmatpush1.msra.mxu0 0.0
  %3613 = vmatprep.subr.mxu0 0.0
  %3614 = vmatpush1.msra.mxu0 0.0
  %3615 = vmatprep.subr.mxu0 0.0
  %3616 = vmatpush1.msra.mxu0 0.0
  %3617 = vmatprep.subr.mxu0 0.0
  %3618 = vmatpush1.msra.mxu0 0.0
  %3619 = vmatprep.subr.mxu0 0.0
  %3620 = vmatpush1.msra.mxu0 0.0
  %3621 = vmatprep.subr.mxu0 0.0
  %3622 = vmatpush1.msra.mxu0 0.0
  %3623 = vmatprep.subr.mxu0 0.0
  %3624 = vmatpush1.msra.mxu0 0.0
  %3625 = vmatprep.subr.mxu0 0.0
  %3626 = vmatpush1.msra.mxu0 0.0
  %3627 = vmatprep.subr.mxu0 0.0
  %3628 = vmatpush1.msra.mxu0 0.0
  %3629 = vmatprep.subr.mxu0 0.0
  %3630 = vmatpush1.msra.mxu0 0.0
  %3631 = vmatprep.subr.mxu0 0.0
  %3632 = vmatpush1.msra.mxu0 0.0
  %3633 = vmatprep.subr.mxu0 0.0
  %3634 = vmatpush1.msra.mxu0 0.0
  %3635 = vmatprep.subr.mxu0 0.0
  %3636 = vmatpush1.msra.mxu0 0.0
  %3637 = vmatprep.subr.mxu0 0.0
  %3638 = vmatpush1.msra.mxu0 0.0
  %3639 = vmatprep.subr.mxu0 0.0
  %3640 = vmatpush1.msra.mxu0 0.0
  %3641 = vmatprep.subr.mxu0 0.0
  %3642 = vmatpush1.msra.mxu0 0.0
  %3643 = vmatprep.subr.mxu0 0.0
  %3644 = vmatpush1.msra.mxu0 0.0
  %3645 = vmatprep.subr.mxu0 0.0
  %3646 = vmatpush1.msra.mxu0 0.0
  %3647 = vmatprep.subr.mxu0 0.0
  %3648 = vmatpush1.msra.mxu0 0.0
  %3649 = vmatprep.subr.mxu0 0.0
  %3650 = vmatpush1.msra.mxu0 0.0
  %3651 = vmatprep.subr.mxu0 0.0
  %3652 = vmatpush1.msra.mxu0 0.0
  %3653 = vmatprep.subr.mxu0 0.0
  %3654 = vmatpush1.msra.mxu0 0.0
  %3655 = vmatprep.mubr.f32.mxu0 0.0
  %3656 = vmatmul.mubr.f32.gmra.mrb[0].mxu0 %v3518
  %v3657 = vpop.f32.mrb[0].mxu0
  %v3658 = vadd.f32 0.0, %v3657
  %v3659 = vpop.f32.mrb[0].mxu0
  %v3660 = vadd.f32 0.0, %v3659
  %3661 = vdwg.mxu0
  %3662 = vmatprep.subr.mxu0 %v3506
  %3663 = vmatpush1.msra.mxu0 %v3511
  %3664 = vmatprep.subr.mxu0 0.0
  %3665 = vmatpush1.msra.mxu0 0.0
  %3666 = vmatprep.subr.mxu0 0.0
  %3667 = vmatpush1.msra.mxu0 0.0
  %3668 = vmatprep.subr.mxu0 0.0
  %3669 = vmatpush1.msra.mxu0 0.0
  %3670 = vmatprep.subr.mxu0 0.0
  %3671 = vmatpush1.msra.mxu0 0.0
  %3672 = vmatprep.subr.mxu0 0.0
  %3673 = vmatpush1.msra.mxu0 0.0
  %3674 = vmatprep.subr.mxu0 0.0
  %3675 = vmatpush1.msra.mxu0 0.0
  %3676 = vmatprep.subr.mxu0 0.0
  %3677 = vmatpush1.msra.mxu0 0.0
  %3678 = vmatprep.subr.mxu0 0.0
  %3679 = vmatpush1.msra.mxu0 0.0
  %3680 = vmatprep.subr.mxu0 0.0
  %3681 = vmatpush1.msra.mxu0 0.0
  %3682 = vmatprep.subr.mxu0 0.0
  %3683 = vmatpush1.msra.mxu0 0.0
  %3684 = vmatprep.subr.mxu0 0.0
  %3685 = vmatpush1.msra.mxu0 0.0
  %3686 = vmatprep.subr.mxu0 0.0
  %3687 = vmatpush1.msra.mxu0 0.0
  %3688 = vmatprep.subr.mxu0 0.0
  %3689 = vmatpush1.msra.mxu0 0.0
  %3690 = vmatprep.subr.mxu0 0.0
  %3691 = vmatpush1.msra.mxu0 0.0
  %3692 = vmatprep.subr.mxu0 0.0
  %3693 = vmatpush1.msra.mxu0 0.0
  %3694 = vmatprep.subr.mxu0 0.0
  %3695 = vmatpush1.msra.mxu0 0.0
  %3696 = vmatprep.subr.mxu0 0.0
  %3697 = vmatpush1.msra.mxu0 0.0
  %3698 = vmatprep.subr.mxu0 0.0
  %3699 = vmatpush1.msra.mxu0 0.0
  %3700 = vmatprep.subr.mxu0 0.0
  %3701 = vmatpush1.msra.mxu0 0.0
  %3702 = vmatprep.subr.mxu0 0.0
  %3703 = vmatpush1.msra.mxu0 0.0
  %3704 = vmatprep.subr.mxu0 0.0
  %3705 = vmatpush1.msra.mxu0 0.0
  %3706 = vmatprep.subr.mxu0 0.0
  %3707 = vmatpush1.msra.mxu0 0.0
  %3708 = vmatprep.subr.mxu0 0.0
  %3709 = vmatpush1.msra.mxu0 0.0
  %3710 = vmatprep.subr.mxu0 0.0
  %3711 = vmatpush1.msra.mxu0 0.0
  %3712 = vmatprep.subr.mxu0 0.0
  %3713 = vmatpush1.msra.mxu0 0.0
  %3714 = vmatprep.subr.mxu0 0.0
  %3715 = vmatpush1.msra.mxu0 0.0
  %3716 = vmatprep.subr.mxu0 0.0
  %3717 = vmatpush1.msra.mxu0 0.0
  %3718 = vmatprep.subr.mxu0 0.0
  %3719 = vmatpush1.msra.mxu0 0.0
  %3720 = vmatprep.subr.mxu0 0.0
  %3721 = vmatpush1.msra.mxu0 0.0
  %3722 = vmatprep.subr.mxu0 0.0
  %3723 = vmatpush1.msra.mxu0 0.0
  %3724 = vmatprep.subr.mxu0 0.0
  %3725 = vmatpush1.msra.mxu0 0.0
  %3726 = vmatprep.mubr.f32.mxu0 0.0
  %3727 = vmatmul.mubr.f32.gmra.mrb[0].mxu0 %v3518
  %v3728 = vpop.f32.mrb[0].mxu0
  %v3729 = vadd.f32 0.0, %v3728
  %v3730 = vpop.f32.mrb[0].mxu0
  %v3731 = vadd.f32 0.0, %v3730
  %3732 = vdwg.mxu0
  %v3733 = vadd.f32 %v3487, %v3587
  %v3734 = vadd.f32 %v3488, %v3589
  %v3735 = vadd.f32 %v3489, %v3658
  %v3736 = vadd.f32 %v3490, %v3660
  %v3737 = vadd.f32 %v3491, %v3729
  %v3738 = vadd.f32 %v3492, %v3731
  %3739 = vrot.lane.b32.xlu0 %v2286, 80
  %v3740 = vpop.permute.xlu0 %3739
  %3741 = vrot.lane.b32.xlu0 %v2287, 92
  %v3742 = vpop.permute.xlu0 %3741
  %3743 = vrot.lane.b32.xlu0 %v2288, 92
  %v3744 = vpop.permute.xlu0 %3743
  %3745 = vrot.lane.b32.xlu0 %v2289, 92
  %v3746 = vpop.permute.xlu0 %3745
  %3747 = vrot.lane.b32.xlu0 %v2290, 92
  %v3748 = vpop.permute.xlu0 %3747
  %3749 = vrot.lane.b32.xlu0 %v2291, 92
  %v3750 = vpop.permute.xlu0 %3749
  %3751 = vrot.lane.b32.xlu0 %v2292, 92
  %v3752 = vpop.permute.xlu0 %3751
  %v3753 = vsel %vm1496, %v3742, %v3744
  %v3754 = vsel %vm1496, %v3744, %v3746
  %v3755 = vsel %vm1496, %v3746, %v3748
  %v3756 = vsel %vm1496, %v3748, %v3750
  %v3757 = vsel %vm1496, %v3750, %v3752
  %v3764 = vsel %vm63, %v3740, 0
  %3766 = vmatprep.subr.mxu0 %v3754
  %3767 = vmatpush1.msra.mxu0 %v3753
  %3768 = vmatprep.subr.mxu0 0.0
  %3769 = vmatpush1.msra.mxu0 0.0
  %3770 = vmatprep.subr.mxu0 0.0
  %3771 = vmatpush1.msra.mxu0 0.0
  %3772 = vmatprep.subr.mxu0 0.0
  %3773 = vmatpush1.msra.mxu0 0.0
  %3774 = vmatprep.subr.mxu0 0.0
  %3775 = vmatpush1.msra.mxu0 0.0
  %3776 = vmatprep.subr.mxu0 0.0
  %3777 = vmatpush1.msra.mxu0 0.0
  %3778 = vmatprep.subr.mxu0 0.0
  %3779 = vmatpush1.msra.mxu0 0.0
  %3780 = vmatprep.subr.mxu0 0.0
  %3781 = vmatpush1.msra.mxu0 0.0
  %3782 = vmatprep.subr.mxu0 0.0
  %3783 = vmatpush1.msra.mxu0 0.0
  %3784 = vmatprep.subr.mxu0 0.0
  %3785 = vmatpush1.msra.mxu0 0.0
  %3786 = vmatprep.subr.mxu0 0.0
  %3787 = vmatpush1.msra.mxu0 0.0
  %3788 = vmatprep.subr.mxu0 0.0
  %3789 = vmatpush1.msra.mxu0 0.0
  %3790 = vmatprep.subr.mxu0 0.0
  %3791 = vmatpush1.msra.mxu0 0.0
  %3792 = vmatprep.subr.mxu0 0.0
  %3793 = vmatpush1.msra.mxu0 0.0
  %3794 = vmatprep.subr.mxu0 0.0
  %3795 = vmatpush1.msra.mxu0 0.0
  %3796 = vmatprep.subr.mxu0 0.0
  %3797 = vmatpush1.msra.mxu0 0.0
  %3798 = vmatprep.subr.mxu0 0.0
  %3799 = vmatpush1.msra.mxu0 0.0
  %3800 = vmatprep.subr.mxu0 0.0
  %3801 = vmatpush1.msra.mxu0 0.0
  %3802 = vmatprep.subr.mxu0 0.0
  %3803 = vmatpush1.msra.mxu0 0.0
  %3804 = vmatprep.subr.mxu0 0.0
  %3805 = vmatpush1.msra.mxu0 0.0
  %3806 = vmatprep.subr.mxu0 0.0
  %3807 = vmatpush1.msra.mxu0 0.0
  %3808 = vmatprep.subr.mxu0 0.0
  %3809 = vmatpush1.msra.mxu0 0.0
  %3810 = vmatprep.subr.mxu0 0.0
  %3811 = vmatpush1.msra.mxu0 0.0
  %3812 = vmatprep.subr.mxu0 0.0
  %3813 = vmatpush1.msra.mxu0 0.0
  %3814 = vmatprep.subr.mxu0 0.0
  %3815 = vmatpush1.msra.mxu0 0.0
  %3816 = vmatprep.subr.mxu0 0.0
  %3817 = vmatpush1.msra.mxu0 0.0
  %3818 = vmatprep.subr.mxu0 0.0
  %3819 = vmatpush1.msra.mxu0 0.0
  %3820 = vmatprep.subr.mxu0 0.0
  %3821 = vmatpush1.msra.mxu0 0.0
  %3822 = vmatprep.subr.mxu0 0.0
  %3823 = vmatpush1.msra.mxu0 0.0
  %3824 = vmatprep.subr.mxu0 0.0
  %3825 = vmatpush1.msra.mxu0 0.0
  %3826 = vmatprep.subr.mxu0 0.0
  %3827 = vmatpush1.msra.mxu0 0.0
  %3828 = vmatprep.subr.mxu0 0.0
  %3829 = vmatpush1.msra.mxu0 0.0
  %3830 = vmatprep.mubr.f32.mxu0 0.0
  %3831 = vmatmul.mubr.f32.gmra.mrb[0].mxu0 %v3764
  %v3832 = vpop.f32.mrb[0].mxu0
  %v3833 = vadd.f32 0.0, %v3832
  %v3834 = vpop.f32.mrb[0].mxu0
  %v3835 = vadd.f32 0.0, %v3834
  %3836 = vdwg.mxu0
  %3837 = vmatprep.subr.mxu0 %v3756
  %3838 = vmatpush1.msra.mxu0 %v3755
  %3839 = vmatprep.subr.mxu0 0.0
  %3840 = vmatpush1.msra.mxu0 0.0
  %3841 = vmatprep.subr.mxu0 0.0
  %3842 = vmatpush1.msra.mxu0 0.0
  %3843 = vmatprep.subr.mxu0 0.0
  %3844 = vmatpush1.msra.mxu0 0.0
  %3845 = vmatprep.subr.mxu0 0.0
  %3846 = vmatpush1.msra.mxu0 0.0
  %3847 = vmatprep.subr.mxu0 0.0
  %3848 = vmatpush1.msra.mxu0 0.0
  %3849 = vmatprep.subr.mxu0 0.0
  %3850 = vmatpush1.msra.mxu0 0.0
  %3851 = vmatprep.subr.mxu0 0.0
  %3852 = vmatpush1.msra.mxu0 0.0
  %3853 = vmatprep.subr.mxu0 0.0
  %3854 = vmatpush1.msra.mxu0 0.0
  %3855 = vmatprep.subr.mxu0 0.0
  %3856 = vmatpush1.msra.mxu0 0.0
  %3857 = vmatprep.subr.mxu0 0.0
  %3858 = vmatpush1.msra.mxu0 0.0
  %3859 = vmatprep.subr.mxu0 0.0
  %3860 = vmatpush1.msra.mxu0 0.0
  %3861 = vmatprep.subr.mxu0 0.0
  %3862 = vmatpush1.msra.mxu0 0.0
  %3863 = vmatprep.subr.mxu0 0.0
  %3864 = vmatpush1.msra.mxu0 0.0
  %3865 = vmatprep.subr.mxu0 0.0
  %3866 = vmatpush1.msra.mxu0 0.0
  %3867 = vmatprep.subr.mxu0 0.0
  %3868 = vmatpush1.msra.mxu0 0.0
  %3869 = vmatprep.subr.mxu0 0.0
  %3870 = vmatpush1.msra.mxu0 0.0
  %3871 = vmatprep.subr.mxu0 0.0
  %3872 = vmatpush1.msra.mxu0 0.0
  %3873 = vmatprep.subr.mxu0 0.0
  %3874 = vmatpush1.msra.mxu0 0.0
  %3875 = vmatprep.subr.mxu0 0.0
  %3876 = vmatpush1.msra.mxu0 0.0
  %3877 = vmatprep.subr.mxu0 0.0
  %3878 = vmatpush1.msra.mxu0 0.0
  %3879 = vmatprep.subr.mxu0 0.0
  %3880 = vmatpush1.msra.mxu0 0.0
  %3881 = vmatprep.subr.mxu0 0.0
  %3882 = vmatpush1.msra.mxu0 0.0
  %3883 = vmatprep.subr.mxu0 0.0
  %3884 = vmatpush1.msra.mxu0 0.0
  %3885 = vmatprep.subr.mxu0 0.0
  %3886 = vmatpush1.msra.mxu0 0.0
  %3887 = vmatprep.subr.mxu0 0.0
  %3888 = vmatpush1.msra.mxu0 0.0
  %3889 = vmatprep.subr.mxu0 0.0
  %3890 = vmatpush1.msra.mxu0 0.0
  %3891 = vmatprep.subr.mxu0 0.0
  %3892 = vmatpush1.msra.mxu0 0.0
  %3893 = vmatprep.subr.mxu0 0.0
  %3894 = vmatpush1.msra.mxu0 0.0
  %3895 = vmatprep.subr.mxu0 0.0
  %3896 = vmatpush1.msra.mxu0 0.0
  %3897 = vmatprep.subr.mxu0 0.0
  %3898 = vmatpush1.msra.mxu0 0.0
  %3899 = vmatprep.subr.mxu0 0.0
  %3900 = vmatpush1.msra.mxu0 0.0
  %3901 = vmatprep.mubr.f32.mxu0 0.0
  %3902 = vmatmul.mubr.f32.gmra.mrb[0].mxu0 %v3764
  %v3903 = vpop.f32.mrb[0].mxu0
  %v3904 = vadd.f32 0.0, %v3903
  %v3905 = vpop.f32.mrb[0].mxu0
  %v3906 = vadd.f32 0.0, %v3905
  %3907 = vdwg.mxu0
  %3908 = vmatprep.subr.mxu0 %v3752
  %3909 = vmatpush1.msra.mxu0 %v3757
  %3910 = vmatprep.subr.mxu0 0.0
  %3911 = vmatpush1.msra.mxu0 0.0
  %3912 = vmatprep.subr.mxu0 0.0
  %3913 = vmatpush1.msra.mxu0 0.0
  %3914 = vmatprep.subr.mxu0 0.0
  %3915 = vmatpush1.msra.mxu0 0.0
  %3916 = vmatprep.subr.mxu0 0.0
  %3917 = vmatpush1.msra.mxu0 0.0
  %3918 = vmatprep.subr.mxu0 0.0
  %3919 = vmatpush1.msra.mxu0 0.0
  %3920 = vmatprep.subr.mxu0 0.0
  %3921 = vmatpush1.msra.mxu0 0.0
  %3922 = vmatprep.subr.mxu0 0.0
  %3923 = vmatpush1.msra.mxu0 0.0
  %3924 = vmatprep.subr.mxu0 0.0
  %3925 = vmatpush1.msra.mxu0 0.0
  %3926 = vmatprep.subr.mxu0 0.0
  %3927 = vmatpush1.msra.mxu0 0.0
  %3928 = vmatprep.subr.mxu0 0.0
  %3929 = vmatpush1.msra.mxu0 0.0
  %3930 = vmatprep.subr.mxu0 0.0
  %3931 = vmatpush1.msra.mxu0 0.0
  %3932 = vmatprep.subr.mxu0 0.0
  %3933 = vmatpush1.msra.mxu0 0.0
  %3934 = vmatprep.subr.mxu0 0.0
  %3935 = vmatpush1.msra.mxu0 0.0
  %3936 = vmatprep.subr.mxu0 0.0
  %3937 = vmatpush1.msra.mxu0 0.0
  %3938 = vmatprep.subr.mxu0 0.0
  %3939 = vmatpush1.msra.mxu0 0.0
  %3940 = vmatprep.subr.mxu0 0.0
  %3941 = vmatpush1.msra.mxu0 0.0
  %3942 = vmatprep.subr.mxu0 0.0
  %3943 = vmatpush1.msra.mxu0 0.0
  %3944 = vmatprep.subr.mxu0 0.0
  %3945 = vmatpush1.msra.mxu0 0.0
  %3946 = vmatprep.subr.mxu0 0.0
  %3947 = vmatpush1.msra.mxu0 0.0
  %3948 = vmatprep.subr.mxu0 0.0
  %3949 = vmatpush1.msra.mxu0 0.0
  %3950 = vmatprep.subr.mxu0 0.0
  %3951 = vmatpush1.msra.mxu0 0.0
  %3952 = vmatprep.subr.mxu0 0.0
  %3953 = vmatpush1.msra.mxu0 0.0
  %3954 = vmatprep.subr.mxu0 0.0
  %3955 = vmatpush1.msra.mxu0 0.0
  %3956 = vmatprep.subr.mxu0 0.0
  %3957 = vmatpush1.msra.mxu0 0.0
  %3958 = vmatprep.subr.mxu0 0.0
  %3959 = vmatpush1.msra.mxu0 0.0
  %3960 = vmatprep.subr.mxu0 0.0
  %3961 = vmatpush1.msra.mxu0 0.0
  %3962 = vmatprep.subr.mxu0 0.0
  %3963 = vmatpush1.msra.mxu0 0.0
  %3964 = vmatprep.subr.mxu0 0.0
  %3965 = vmatpush1.msra.mxu0 0.0
  %3966 = vmatprep.subr.mxu0 0.0
  %3967 = vmatpush1.msra.mxu0 0.0
  %3968 = vmatprep.subr.mxu0 0.0
  %3969 = vmatpush1.msra.mxu0 0.0
  %3970 = vmatprep.subr.mxu0 0.0
  %3971 = vmatpush1.msra.mxu0 0.0
  %3972 = vmatprep.mubr.f32.mxu0 0.0
  %3973 = vmatmul.mubr.f32.gmra.mrb[0].mxu0 %v3764
  %v3974 = vpop.f32.mrb[0].mxu0
  %v3975 = vadd.f32 0.0, %v3974
  %v3976 = vpop.f32.mrb[0].mxu0
  %v3977 = vadd.f32 0.0, %v3976
  %3978 = vdwg.mxu0
  %v3979 = vadd.f32 %v3733, %v3833
  %v3980 = vadd.f32 %v3734, %v3835
  %v3981 = vadd.f32 %v3735, %v3904
  %v3982 = vadd.f32 %v3736, %v3906
  %v3983 = vadd.f32 %v3737, %v3975
  %v3984 = vadd.f32 %v3738, %v3977
  %3985 = vrot.lane.b32.xlu0 %v2286, 72
  %v3986 = vpop.permute.xlu0 %3985
  %3987 = vrot.lane.b32.xlu0 %v2287, 91
  %v3988 = vpop.permute.xlu0 %3987
  %3989 = vrot.lane.b32.xlu0 %v2288, 91
  %v3990 = vpop.permute.xlu0 %3989
  %3991 = vrot.lane.b32.xlu0 %v2289, 91
  %v3992 = vpop.permute.xlu0 %3991
  %3993 = vrot.lane.b32.xlu0 %v2290, 91
  %v3994 = vpop.permute.xlu0 %3993
  %3995 = vrot.lane.b32.xlu0 %v2291, 91
  %v3996 = vpop.permute.xlu0 %3995
  %3997 = vrot.lane.b32.xlu0 %v2292, 91
  %v3998 = vpop.permute.xlu0 %3997
  %v3999 = vsel %vm1743, %v3988, %v3990
  %v4000 = vsel %vm1743, %v3990, %v3992
  %v4001 = vsel %vm1743, %v3992, %v3994
  %v4002 = vsel %vm1743, %v3994, %v3996
  %v4003 = vsel %vm1743, %v3996, %v3998
  %v4010 = vsel %vm63, %v3986, 0
  %4012 = vmatprep.subr.mxu0 %v4000
  %4013 = vmatpush1.msra.mxu0 %v3999
  %4014 = vmatprep.subr.mxu0 0.0
  %4015 = vmatpush1.msra.mxu0 0.0
  %4016 = vmatprep.subr.mxu0 0.0
  %4017 = vmatpush1.msra.mxu0 0.0
  %4018 = vmatprep.subr.mxu0 0.0
  %4019 = vmatpush1.msra.mxu0 0.0
  %4020 = vmatprep.subr.mxu0 0.0
  %4021 = vmatpush1.msra.mxu0 0.0
  %4022 = vmatprep.subr.mxu0 0.0
  %4023 = vmatpush1.msra.mxu0 0.0
  %4024 = vmatprep.subr.mxu0 0.0
  %4025 = vmatpush1.msra.mxu0 0.0
  %4026 = vmatprep.subr.mxu0 0.0
  %4027 = vmatpush1.msra.mxu0 0.0
  %4028 = vmatprep.subr.mxu0 0.0
  %4029 = vmatpush1.msra.mxu0 0.0
  %4030 = vmatprep.subr.mxu0 0.0
  %4031 = vmatpush1.msra.mxu0 0.0
  %4032 = vmatprep.subr.mxu0 0.0
  %4033 = vmatpush1.msra.mxu0 0.0
  %4034 = vmatprep.subr.mxu0 0.0
  %4035 = vmatpush1.msra.mxu0 0.0
  %4036 = vmatprep.subr.mxu0 0.0
  %4037 = vmatpush1.msra.mxu0 0.0
  %4038 = vmatprep.subr.mxu0 0.0
  %4039 = vmatpush1.msra.mxu0 0.0
  %4040 = vmatprep.subr.mxu0 0.0
  %4041 = vmatpush1.msra.mxu0 0.0
  %4042 = vmatprep.subr.mxu0 0.0
  %4043 = vmatpush1.msra.mxu0 0.0
  %4044 = vmatprep.subr.mxu0 0.0
  %4045 = vmatpush1.msra.mxu0 0.0
  %4046 = vmatprep.subr.mxu0 0.0
  %4047 = vmatpush1.msra.mxu0 0.0
  %4048 = vmatprep.subr.mxu0 0.0
  %4049 = vmatpush1.msra.mxu0 0.0
  %4050 = vmatprep.subr.mxu0 0.0
  %4051 = vmatpush1.msra.mxu0 0.0
  %4052 = vmatprep.subr.mxu0 0.0
  %4053 = vmatpush1.msra.mxu0 0.0
  %4054 = vmatprep.subr.mxu0 0.0
  %4055 = vmatpush1.msra.mxu0 0.0
  %4056 = vmatprep.subr.mxu0 0.0
  %4057 = vmatpush1.msra.mxu0 0.0
  %4058 = vmatprep.subr.mxu0 0.0
  %4059 = vmatpush1.msra.mxu0 0.0
  %4060 = vmatprep.subr.mxu0 0.0
  %4061 = vmatpush1.msra.mxu0 0.0
  %4062 = vmatprep.subr.mxu0 0.0
  %4063 = vmatpush1.msra.mxu0 0.0
  %4064 = vmatprep.subr.mxu0 0.0
  %4065 = vmatpush1.msra.mxu0 0.0
  %4066 = vmatprep.subr.mxu0 0.0
  %4067 = vmatpush1.msra.mxu0 0.0
  %4068 = vmatprep.subr.mxu0 0.0
  %4069 = vmatpush1.msra.mxu0 0.0
  %4070 = vmatprep.subr.mxu0 0.0
  %4071 = vmatpush1.msra.mxu0 0.0
  %4072 = vmatprep.subr.mxu0 0.0
  %4073 = vmatpush1.msra.mxu0 0.0
  %4074 = vmatprep.subr.mxu0 0.0
  %4075 = vmatpush1.msra.mxu0 0.0
  %4076 = vmatprep.mubr.f32.mxu0 0.0
  %4077 = vmatmul.mubr.f32.gmra.mrb[0].mxu0 %v4010
  %v4078 = vpop.f32.mrb[0].mxu0
  %v4079 = vadd.f32 0.0, %v4078
  %v4080 = vpop.f32.mrb[0].mxu0
  %v4081 = vadd.f32 0.0, %v4080
  %4082 = vdwg.mxu0
  %4083 = vmatprep.subr.mxu0 %v4002
  %4084 = vmatpush1.msra.mxu0 %v4001
  %4085 = vmatprep.subr.mxu0 0.0
  %4086 = vmatpush1.msra.mxu0 0.0
  %4087 = vmatprep.subr.mxu0 0.0
  %4088 = vmatpush1.msra.mxu0 0.0
  %4089 = vmatprep.subr.mxu0 0.0
  %4090 = vmatpush1.msra.mxu0 0.0
  %4091 = vmatprep.subr.mxu0 0.0
  %4092 = vmatpush1.msra.mxu0 0.0
  %4093 = vmatprep.subr.mxu0 0.0
  %4094 = vmatpush1.msra.mxu0 0.0
  %4095 = vmatprep.subr.mxu0 0.0
  %4096 = vmatpush1.msra.mxu0 0.0
  %4097 = vmatprep.subr.mxu0 0.0
  %4098 = vmatpush1.msra.mxu0 0.0
  %4099 = vmatprep.subr.mxu0 0.0
  %4100 = vmatpush1.msra.mxu0 0.0
  %4101 = vmatprep.subr.mxu0 0.0
  %4102 = vmatpush1.msra.mxu0 0.0
  %4103 = vmatprep.subr.mxu0 0.0
  %4104 = vmatpush1.msra.mxu0 0.0
  %4105 = vmatprep.subr.mxu0 0.0
  %4106 = vmatpush1.msra.mxu0 0.0
  %4107 = vmatprep.subr.mxu0 0.0
  %4108 = vmatpush1.msra.mxu0 0.0
  %4109 = vmatprep.subr.mxu0 0.0
  %4110 = vmatpush1.msra.mxu0 0.0
  %4111 = vmatprep.subr.mxu0 0.0
  %4112 = vmatpush1.msra.mxu0 0.0
  %4113 = vmatprep.subr.mxu0 0.0
  %4114 = vmatpush1.msra.mxu0 0.0
  %4115 = vmatprep.subr.mxu0 0.0
  %4116 = vmatpush1.msra.mxu0 0.0
  %4117 = vmatprep.subr.mxu0 0.0
  %4118 = vmatpush1.msra.mxu0 0.0
  %4119 = vmatprep.subr.mxu0 0.0
  %4120 = vmatpush1.msra.mxu0 0.0
  %4121 = vmatprep.subr.mxu0 0.0
  %4122 = vmatpush1.msra.mxu0 0.0
  %4123 = vmatprep.subr.mxu0 0.0
  %4124 = vmatpush1.msra.mxu0 0.0
  %4125 = vmatprep.subr.mxu0 0.0
  %4126 = vmatpush1.msra.mxu0 0.0
  %4127 = vmatprep.subr.mxu0 0.0
  %4128 = vmatpush1.msra.mxu0 0.0
  %4129 = vmatprep.subr.mxu0 0.0
  %4130 = vmatpush1.msra.mxu0 0.0
  %4131 = vmatprep.subr.mxu0 0.0
  %4132 = vmatpush1.msra.mxu0 0.0
  %4133 = vmatprep.subr.mxu0 0.0
  %4134 = vmatpush1.msra.mxu0 0.0
  %4135 = vmatprep.subr.mxu0 0.0
  %4136 = vmatpush1.msra.mxu0 0.0
  %4137 = vmatprep.subr.mxu0 0.0
  %4138 = vmatpush1.msra.mxu0 0.0
  %4139 = vmatprep.subr.mxu0 0.0
  %4140 = vmatpush1.msra.mxu0 0.0
  %4141 = vmatprep.subr.mxu0 0.0
  %4142 = vmatpush1.msra.mxu0 0.0
  %4143 = vmatprep.subr.mxu0 0.0
  %4144 = vmatpush1.msra.mxu0 0.0
  %4145 = vmatprep.subr.mxu0 0.0
  %4146 = vmatpush1.msra.mxu0 0.0
  %4147 = vmatprep.mubr.f32.mxu0 0.0
  %4148 = vmatmul.mubr.f32.gmra.mrb[0].mxu0 %v4010
  %v4149 = vpop.f32.mrb[0].mxu0
  %v4150 = vadd.f32 0.0, %v4149
  %v4151 = vpop.f32.mrb[0].mxu0
  %v4152 = vadd.f32 0.0, %v4151
  %4153 = vdwg.mxu0
  %4154 = vmatprep.subr.mxu0 %v3998
  %4155 = vmatpush1.msra.mxu0 %v4003
  %4156 = vmatprep.subr.mxu0 0.0
  %4157 = vmatpush1.msra.mxu0 0.0
  %4158 = vmatprep.subr.mxu0 0.0
  %4159 = vmatpush1.msra.mxu0 0.0
  %4160 = vmatprep.subr.mxu0 0.0
  %4161 = vmatpush1.msra.mxu0 0.0
  %4162 = vmatprep.subr.mxu0 0.0
  %4163 = vmatpush1.msra.mxu0 0.0
  %4164 = vmatprep.subr.mxu0 0.0
  %4165 = vmatpush1.msra.mxu0 0.0
  %4166 = vmatprep.subr.mxu0 0.0
  %4167 = vmatpush1.msra.mxu0 0.0
  %4168 = vmatprep.subr.mxu0 0.0
  %4169 = vmatpush1.msra.mxu0 0.0
  %4170 = vmatprep.subr.mxu0 0.0
  %4171 = vmatpush1.msra.mxu0 0.0
  %4172 = vmatprep.subr.mxu0 0.0
  %4173 = vmatpush1.msra.mxu0 0.0
  %4174 = vmatprep.subr.mxu0 0.0
  %4175 = vmatpush1.msra.mxu0 0.0
  %4176 = vmatprep.subr.mxu0 0.0
  %4177 = vmatpush1.msra.mxu0 0.0
  %4178 = vmatprep.subr.mxu0 0.0
  %4179 = vmatpush1.msra.mxu0 0.0
  %4180 = vmatprep.subr.mxu0 0.0
  %4181 = vmatpush1.msra.mxu0 0.0
  %4182 = vmatprep.subr.mxu0 0.0
  %4183 = vmatpush1.msra.mxu0 0.0
  %4184 = vmatprep.subr.mxu0 0.0
  %4185 = vmatpush1.msra.mxu0 0.0
  %4186 = vmatprep.subr.mxu0 0.0
  %4187 = vmatpush1.msra.mxu0 0.0
  %4188 = vmatprep.subr.mxu0 0.0
  %4189 = vmatpush1.msra.mxu0 0.0
  %4190 = vmatprep.subr.mxu0 0.0
  %4191 = vmatpush1.msra.mxu0 0.0
  %4192 = vmatprep.subr.mxu0 0.0
  %4193 = vmatpush1.msra.mxu0 0.0
  %4194 = vmatprep.subr.mxu0 0.0
  %4195 = vmatpush1.msra.mxu0 0.0
  %4196 = vmatprep.subr.mxu0 0.0
  %4197 = vmatpush1.msra.mxu0 0.0
  %4198 = vmatprep.subr.mxu0 0.0
  %4199 = vmatpush1.msra.mxu0 0.0
  %4200 = vmatprep.subr.mxu0 0.0
  %4201 = vmatpush1.msra.mxu0 0.0
  %4202 = vmatprep.subr.mxu0 0.0
  %4203 = vmatpush1.msra.mxu0 0.0
  %4204 = vmatprep.subr.mxu0 0.0
  %4205 = vmatpush1.msra.mxu0 0.0
  %4206 = vmatprep.subr.mxu0 0.0
  %4207 = vmatpush1.msra.mxu0 0.0
  %4208 = vmatprep.subr.mxu0 0.0
  %4209 = vmatpush1.msra.mxu0 0.0
  %4210 = vmatprep.subr.mxu0 0.0
  %4211 = vmatpush1.msra.mxu0 0.0
  %4212 = vmatprep.subr.mxu0 0.0
  %4213 = vmatpush1.msra.mxu0 0.0
  %4214 = vmatprep.subr.mxu0 0.0
  %4215 = vmatpush1.msra.mxu0 0.0
  %4216 = vmatprep.subr.mxu0 0.0
  %4217 = vmatpush1.msra.mxu0 0.0
  %4218 = vmatprep.mubr.f32.mxu0 0.0
  %4219 = vmatmul.mubr.f32.gmra.mrb[0].mxu0 %v4010
  %v4220 = vpop.f32.mrb[0].mxu0
  %v4221 = vadd.f32 0.0, %v4220
  %v4222 = vpop.f32.mrb[0].mxu0
  %v4223 = vadd.f32 0.0, %v4222
  %4224 = vdwg.mxu0
  %v4225 = vadd.f32 %v3979, %v4079
  %v4226 = vadd.f32 %v3980, %v4081
  %v4227 = vadd.f32 %v3981, %v4150
  %v4228 = vadd.f32 %v3982, %v4152
  %v4229 = vadd.f32 %v3983, %v4221
  %v4230 = vadd.f32 %v3984, %v4223
  %4231 = vrot.lane.b32.xlu0 %v2286, 64
  %v4232 = vpop.permute.xlu0 %4231
  %4233 = vrot.lane.b32.xlu0 %v2287, 90
  %v4234 = vpop.permute.xlu0 %4233
  %4235 = vrot.lane.b32.xlu0 %v2288, 90
  %v4236 = vpop.permute.xlu0 %4235
  %4237 = vrot.lane.b32.xlu0 %v2289, 90
  %v4238 = vpop.permute.xlu0 %4237
  %4239 = vrot.lane.b32.xlu0 %v2290, 90
  %v4240 = vpop.permute.xlu0 %4239
  %4241 = vrot.lane.b32.xlu0 %v2291, 90
  %v4242 = vpop.permute.xlu0 %4241
  %4243 = vrot.lane.b32.xlu0 %v2292, 90
  %v4244 = vpop.permute.xlu0 %4243
  %v4245 = vsel %vm1990, %v4234, %v4236
  %v4246 = vsel %vm1990, %v4236, %v4238
  %v4247 = vsel %vm1990, %v4238, %v4240
  %v4248 = vsel %vm1990, %v4240, %v4242
  %v4249 = vsel %vm1990, %v4242, %v4244
  %v4256 = vsel %vm63, %v4232, 0
  %4258 = vmatprep.subr.mxu0 %v4246
  %4259 = vmatpush1.msra.mxu0 %v4245
  %4260 = vmatprep.subr.mxu0 0.0
  %4261 = vmatpush1.msra.mxu0 0.0
  %4262 = vmatprep.subr.mxu0 0.0
  %4263 = vmatpush1.msra.mxu0 0.0
  %4264 = vmatprep.subr.mxu0 0.0
  %4265 = vmatpush1.msra.mxu0 0.0
  %4266 = vmatprep.subr.mxu0 0.0
  %4267 = vmatpush1.msra.mxu0 0.0
  %4268 = vmatprep.subr.mxu0 0.0
  %4269 = vmatpush1.msra.mxu0 0.0
  %4270 = vmatprep.subr.mxu0 0.0
  %4271 = vmatpush1.msra.mxu0 0.0
  %4272 = vmatprep.subr.mxu0 0.0
  %4273 = vmatpush1.msra.mxu0 0.0
  %4274 = vmatprep.subr.mxu0 0.0
  %4275 = vmatpush1.msra.mxu0 0.0
  %4276 = vmatprep.subr.mxu0 0.0
  %4277 = vmatpush1.msra.mxu0 0.0
  %4278 = vmatprep.subr.mxu0 0.0
  %4279 = vmatpush1.msra.mxu0 0.0
  %4280 = vmatprep.subr.mxu0 0.0
  %4281 = vmatpush1.msra.mxu0 0.0
  %4282 = vmatprep.subr.mxu0 0.0
  %4283 = vmatpush1.msra.mxu0 0.0
  %4284 = vmatprep.subr.mxu0 0.0
  %4285 = vmatpush1.msra.mxu0 0.0
  %4286 = vmatprep.subr.mxu0 0.0
  %4287 = vmatpush1.msra.mxu0 0.0
  %4288 = vmatprep.subr.mxu0 0.0
  %4289 = vmatpush1.msra.mxu0 0.0
  %4290 = vmatprep.subr.mxu0 0.0
  %4291 = vmatpush1.msra.mxu0 0.0
  %4292 = vmatprep.subr.mxu0 0.0
  %4293 = vmatpush1.msra.mxu0 0.0
  %4294 = vmatprep.subr.mxu0 0.0
  %4295 = vmatpush1.msra.mxu0 0.0
  %4296 = vmatprep.subr.mxu0 0.0
  %4297 = vmatpush1.msra.mxu0 0.0
  %4298 = vmatprep.subr.mxu0 0.0
  %4299 = vmatpush1.msra.mxu0 0.0
  %4300 = vmatprep.subr.mxu0 0.0
  %4301 = vmatpush1.msra.mxu0 0.0
  %4302 = vmatprep.subr.mxu0 0.0
  %4303 = vmatpush1.msra.mxu0 0.0
  %4304 = vmatprep.subr.mxu0 0.0
  %4305 = vmatpush1.msra.mxu0 0.0
  %4306 = vmatprep.subr.mxu0 0.0
  %4307 = vmatpush1.msra.mxu0 0.0
  %4308 = vmatprep.subr.mxu0 0.0
  %4309 = vmatpush1.msra.mxu0 0.0
  %4310 = vmatprep.subr.mxu0 0.0
  %4311 = vmatpush1.msra.mxu0 0.0
  %4312 = vmatprep.subr.mxu0 0.0
  %4313 = vmatpush1.msra.mxu0 0.0
  %4314 = vmatprep.subr.mxu0 0.0
  %4315 = vmatpush1.msra.mxu0 0.0
  %4316 = vmatprep.subr.mxu0 0.0
  %4317 = vmatpush1.msra.mxu0 0.0
  %4318 = vmatprep.subr.mxu0 0.0
  %4319 = vmatpush1.msra.mxu0 0.0
  %4320 = vmatprep.subr.mxu0 0.0
  %4321 = vmatpush1.msra.mxu0 0.0
  %4322 = vmatprep.mubr.f32.mxu0 0.0
  %4323 = vmatmul.mubr.f32.gmra.mrb[0].mxu0 %v4256
  %v4324 = vpop.f32.mrb[0].mxu0
  %v4325 = vadd.f32 0.0, %v4324
  %v4326 = vpop.f32.mrb[0].mxu0
  %v4327 = vadd.f32 0.0, %v4326
  %4328 = vdwg.mxu0
  %4329 = vmatprep.subr.mxu0 %v4248
  %4330 = vmatpush1.msra.mxu0 %v4247
  %4331 = vmatprep.subr.mxu0 0.0
  %4332 = vmatpush1.msra.mxu0 0.0
  %4333 = vmatprep.subr.mxu0 0.0
  %4334 = vmatpush1.msra.mxu0 0.0
  %4335 = vmatprep.subr.mxu0 0.0
  %4336 = vmatpush1.msra.mxu0 0.0
  %4337 = vmatprep.subr.mxu0 0.0
  %4338 = vmatpush1.msra.mxu0 0.0
  %4339 = vmatprep.subr.mxu0 0.0
  %4340 = vmatpush1.msra.mxu0 0.0
  %4341 = vmatprep.subr.mxu0 0.0
  %4342 = vmatpush1.msra.mxu0 0.0
  %4343 = vmatprep.subr.mxu0 0.0
  %4344 = vmatpush1.msra.mxu0 0.0
  %4345 = vmatprep.subr.mxu0 0.0
  %4346 = vmatpush1.msra.mxu0 0.0
  %4347 = vmatprep.subr.mxu0 0.0
  %4348 = vmatpush1.msra.mxu0 0.0
  %4349 = vmatprep.subr.mxu0 0.0
  %4350 = vmatpush1.msra.mxu0 0.0
  %4351 = vmatprep.subr.mxu0 0.0
  %4352 = vmatpush1.msra.mxu0 0.0
  %4353 = vmatprep.subr.mxu0 0.0
  %4354 = vmatpush1.msra.mxu0 0.0
  %4355 = vmatprep.subr.mxu0 0.0
  %4356 = vmatpush1.msra.mxu0 0.0
  %4357 = vmatprep.subr.mxu0 0.0
  %4358 = vmatpush1.msra.mxu0 0.0
  %4359 = vmatprep.subr.mxu0 0.0
  %4360 = vmatpush1.msra.mxu0 0.0
  %4361 = vmatprep.subr.mxu0 0.0
  %4362 = vmatpush1.msra.mxu0 0.0
  %4363 = vmatprep.subr.mxu0 0.0
  %4364 = vmatpush1.msra.mxu0 0.0
  %4365 = vmatprep.subr.mxu0 0.0
  %4366 = vmatpush1.msra.mxu0 0.0
  %4367 = vmatprep.subr.mxu0 0.0
  %4368 = vmatpush1.msra.mxu0 0.0
  %4369 = vmatprep.subr.mxu0 0.0
  %4370 = vmatpush1.msra.mxu0 0.0
  %4371 = vmatprep.subr.mxu0 0.0
  %4372 = vmatpush1.msra.mxu0 0.0
  %4373 = vmatprep.subr.mxu0 0.0
  %4374 = vmatpush1.msra.mxu0 0.0
  %4375 = vmatprep.subr.mxu0 0.0
  %4376 = vmatpush1.msra.mxu0 0.0
  %4377 = vmatprep.subr.mxu0 0.0
  %4378 = vmatpush1.msra.mxu0 0.0
  %4379 = vmatprep.subr.mxu0 0.0
  %4380 = vmatpush1.msra.mxu0 0.0
  %4381 = vmatprep.subr.mxu0 0.0
  %4382 = vmatpush1.msra.mxu0 0.0
  %4383 = vmatprep.subr.mxu0 0.0
  %4384 = vmatpush1.msra.mxu0 0.0
  %4385 = vmatprep.subr.mxu0 0.0
  %4386 = vmatpush1.msra.mxu0 0.0
  %4387 = vmatprep.subr.mxu0 0.0
  %4388 = vmatpush1.msra.mxu0 0.0
  %4389 = vmatprep.subr.mxu0 0.0
  %4390 = vmatpush1.msra.mxu0 0.0
  %4391 = vmatprep.subr.mxu0 0.0
  %4392 = vmatpush1.msra.mxu0 0.0
  %4393 = vmatprep.mubr.f32.mxu0 0.0
  %4394 = vmatmul.mubr.f32.gmra.mrb[0].mxu0 %v4256
  %v4395 = vpop.f32.mrb[0].mxu0
  %v4396 = vadd.f32 0.0, %v4395
  %v4397 = vpop.f32.mrb[0].mxu0
  %v4398 = vadd.f32 0.0, %v4397
  %4399 = vdwg.mxu0
  %4400 = vmatprep.subr.mxu0 %v4244
  %4401 = vmatpush1.msra.mxu0 %v4249
  %4402 = vmatprep.subr.mxu0 0.0
  %4403 = vmatpush1.msra.mxu0 0.0
  %4404 = vmatprep.subr.mxu0 0.0
  %4405 = vmatpush1.msra.mxu0 0.0
  %4406 = vmatprep.subr.mxu0 0.0
  %4407 = vmatpush1.msra.mxu0 0.0
  %4408 = vmatprep.subr.mxu0 0.0
  %4409 = vmatpush1.msra.mxu0 0.0
  %4410 = vmatprep.subr.mxu0 0.0
  %4411 = vmatpush1.msra.mxu0 0.0
  %4412 = vmatprep.subr.mxu0 0.0
  %4413 = vmatpush1.msra.mxu0 0.0
  %4414 = vmatprep.subr.mxu0 0.0
  %4415 = vmatpush1.msra.mxu0 0.0
  %4416 = vmatprep.subr.mxu0 0.0
  %4417 = vmatpush1.msra.mxu0 0.0
  %4418 = vmatprep.subr.mxu0 0.0
  %4419 = vmatpush1.msra.mxu0 0.0
  %4420 = vmatprep.subr.mxu0 0.0
  %4421 = vmatpush1.msra.mxu0 0.0
  %4422 = vmatprep.subr.mxu0 0.0
  %4423 = vmatpush1.msra.mxu0 0.0
  %4424 = vmatprep.subr.mxu0 0.0
  %4425 = vmatpush1.msra.mxu0 0.0
  %4426 = vmatprep.subr.mxu0 0.0
  %4427 = vmatpush1.msra.mxu0 0.0
  %4428 = vmatprep.subr.mxu0 0.0
  %4429 = vmatpush1.msra.mxu0 0.0
  %4430 = vmatprep.subr.mxu0 0.0
  %4431 = vmatpush1.msra.mxu0 0.0
  %4432 = vmatprep.subr.mxu0 0.0
  %4433 = vmatpush1.msra.mxu0 0.0
  %4434 = vmatprep.subr.mxu0 0.0
  %4435 = vmatpush1.msra.mxu0 0.0
  %4436 = vmatprep.subr.mxu0 0.0
  %4437 = vmatpush1.msra.mxu0 0.0
  %4438 = vmatprep.subr.mxu0 0.0
  %4439 = vmatpush1.msra.mxu0 0.0
  %4440 = vmatprep.subr.mxu0 0.0
  %4441 = vmatpush1.msra.mxu0 0.0
  %4442 = vmatprep.subr.mxu0 0.0
  %4443 = vmatpush1.msra.mxu0 0.0
  %4444 = vmatprep.subr.mxu0 0.0
  %4445 = vmatpush1.msra.mxu0 0.0
  %4446 = vmatprep.subr.mxu0 0.0
  %4447 = vmatpush1.msra.mxu0 0.0
  %4448 = vmatprep.subr.mxu0 0.0
  %4449 = vmatpush1.msra.mxu0 0.0
  %4450 = vmatprep.subr.mxu0 0.0
  %4451 = vmatpush1.msra.mxu0 0.0
  %4452 = vmatprep.subr.mxu0 0.0
  %4453 = vmatpush1.msra.mxu0 0.0
  %4454 = vmatprep.subr.mxu0 0.0
  %4455 = vmatpush1.msra.mxu0 0.0
  %4456 = vmatprep.subr.mxu0 0.0
  %4457 = vmatpush1.msra.mxu0 0.0
  %4458 = vmatprep.subr.mxu0 0.0
  %4459 = vmatpush1.msra.mxu0 0.0
  %4460 = vmatprep.subr.mxu0 0.0
  %4461 = vmatpush1.msra.mxu0 0.0
  %4462 = vmatprep.subr.mxu0 0.0
  %4463 = vmatpush1.msra.mxu0 0.0
  %4464 = vmatprep.mubr.f32.mxu0 0.0
  %4465 = vmatmul.mubr.f32.gmra.mrb[0].mxu0 %v4256
  %v4466 = vpop.f32.mrb[0].mxu0
  %v4467 = vadd.f32 0.0, %v4466
  %v4468 = vpop.f32.mrb[0].mxu0
  %v4469 = vadd.f32 0.0, %v4468
  %4470 = vdwg.mxu0
  %v4471 = vadd.f32 %v4225, %v4325
  %v4472 = vadd.f32 %v4226, %v4327
  %v4473 = vadd.f32 %v4227, %v4396
  %v4474 = vadd.f32 %v4228, %v4398
  %v4475 = vadd.f32 %v4229, %v4467
  %v4476 = vadd.f32 %v4230, %v4469
  %v4477 = vld [vmem:[%s0] sm:$0xff]
  %v4478 = vld [vmem:[%s0 + $0x8] sm:$0xff]
  %v4479 = vld [vmem:[%s0 + $0x10] sm:$0xff]
  %v4480 = vld [vmem:[%s0 + $0x18] sm:$0xff]
  %v4481 = vld [vmem:[%s0 + $0x20] sm:$0xff]
  %v4482 = vld [vmem:[%s0 + $0x28] sm:$0xff]
  %v4483 = vld [vmem:[%s4] sm:$0xff]
  %4485 = vset.pattern.permute.xlu0 0
  %4486 = vperm.xlu0 %4485, %v4483
  %v4487 = vpop.permute.xlu0 %4486
  %v4489 = vadd.f32 %v4471, %v4487
  %v4490 = vadd.f32 %v4472, %v4487
  %v4491 = vadd.f32 %v4473, %v4487
  %v4492 = vadd.f32 %v4474, %v4487
  %v4493 = vadd.f32 %v4475, %v4487
  %v4494 = vadd.f32 %v4476, %v4487
  %4501 = vrot.lane.b32.xlu0 %v4477, 90
  %v4502 = vpop.permute.xlu0 %4501
  %4503 = vrot.lane.b32.xlu0 %v4478, 90
  %v4504 = vpop.permute.xlu0 %4503
  %4505 = vrot.lane.b32.xlu0 %v4479, 90
  %v4506 = vpop.permute.xlu0 %4505
  %4507 = vrot.lane.b32.xlu0 %v4480, 90
  %v4508 = vpop.permute.xlu0 %4507
  %4509 = vrot.lane.b32.xlu0 %v4481, 90
  %v4510 = vpop.permute.xlu0 %4509
  %4511 = vrot.lane.b32.xlu0 %v4482, 90
  %v4512 = vpop.permute.xlu0 %4511
  %v4513 = vsel %vm1990, %v4502, %v4504
  %v4514 = vsel %vm1990, %v4504, %v4506
  %v4515 = vsel %vm1990, %v4506, %v4508
  %v4516 = vsel %vm1990, %v4508, %v4510
  %v4517 = vsel %vm1990, %v4510, %v4512
  %v4524 = vadd.f32 %v4489, %v4513
  %v4525 = vadd.f32 %v4490, %v4514
  %v4526 = vadd.f32 %v4491, %v4515
  %v4527 = vadd.f32 %v4492, %v4516
  %v4528 = vadd.f32 %v4493, %v4517
  %v4529 = vadd.f32 %v4494, %v4512
  %v4530 = vmax.f32 %v4524, 0.0
  %v4531 = vmax.f32 %v4525, 0.0
  %v4532 = vmax.f32 %v4526, 0.0
  %v4533 = vmax.f32 %v4527, 0.0
  %v4534 = vmax.f32 %v4528, 0.0
  %v4535 = vmax.f32 %v4529, 0.0
  %4536 = vst [vmem:[%s6] sm:$0xff] %v4530
  %4537 = vst [vmem:[%s6 + $0x8] sm:$0xff] %v4531
  %4538 = vst [vmem:[%s6 + $0x10] sm:$0xff] %v4532
  %4539 = vst [vmem:[%s6 + $0x18] sm:$0xff] %v4533
  %4540 = vst [vmem:[%s6 + $0x20] sm:$0xff] %v4534
  %4541 = vst.msk [vmem:[%s6 + $0x28] sm:$0xff] %vm63, %v4535
  // Predicated region
  $region26: #{residual_block_forward.1} parent=0 // pred_check
    _
  $region27: #{residual_block_forward.1} parent=0 // pred_check_branch
    %4543 = sbr.rel (0) target = $region29
  $region28: #{residual_block_forward.1} parent=0 // pred_region
    _
  $region29: #{residual_block_forward.1} parent=0 // pred_fallthru
    _
  // Predicated region
  $region30: #{residual_block_forward.1} parent=0 // pred_check
    _
  $region31: #{residual_block_forward.1} parent=0 // pred_check_branch
    %4545 = sbr.rel (0) target = $region33
  $region32: #{residual_block_forward.1} parent=0 // pred_region
    _
  $region33: #{residual_block_forward.1} parent=0 // pred_fallthru
    _

</llo_original>
